<compile_context>
chip_gen: v7x
topology: tpu7x:2x2x1
jax: 0.10.0
libtpu: 0.0.40
codegen_flags: <defaults>
</compile_context>

<pallas_src>
import functools

import jax
import jax.numpy as jnp
from jax.experimental import pallas as pl
from jax.experimental.pallas import tpu as pltpu

LANE = 128
SUB = 8


def _round_up(x, m):
    return (x + m - 1) // m * m


def _cdiv(a, b):
    return -(-a // b)


def _mlp_kernel(x_ref,
                w1_ref, b1_ref, w2_ref, b2_ref, w3_ref, b3_ref,
                w4_ref, b4_ref, w5_ref, b5_ref, w6_ref, b6_ref,
                w7_ref, b7_ref,
                out_ref, *, y_col):
    """One batch tile of the full MyNet forward. Weights are resident in VMEM."""
    tb, f_pad = out_ref.shape
    cdt = w1_ref.dtype                  # MXU-input / activation-carry dtype

    def layer(h, w_ref, b_ref):
        # weights pre-transposed to (in, out); accumulate in f32, bias stays f32.
        return (jnp.dot(h, w_ref[...], preferred_element_type=jnp.float32)
                + b_ref[...].astype(jnp.float32))

    h = x_ref[...].astype(cdt)
    h = jnp.maximum(layer(h, w1_ref, b1_ref), 0.0).astype(cdt)
    h = jnp.maximum(layer(h, w2_ref, b2_ref), 0.0).astype(cdt)
    h = jnp.maximum(layer(h, w3_ref, b3_ref), 0.0).astype(cdt)
    h = jnp.maximum(layer(h, w4_ref, b4_ref), 0.0).astype(cdt)
    h = jnp.maximum(layer(h, w5_ref, b5_ref), 0.0).astype(cdt)

    feats = layer(h, w6_ref, b6_ref)                        # (tb, f_pad) f32

    # fc7 (K=f_pad, N=1): VPU multiply + lane reduction, no MXU pass.
    # Padded feats lanes are exactly 0 under ReLU and w7 padded lanes are 0,
    # so they contribute nothing.
    hr = jnp.maximum(feats, 0.0)
    y = jnp.sum(hr * w7_ref[...].astype(jnp.float32), axis=-1, keepdims=True)
    y = y + b7_ref[...].astype(jnp.float32)                 # (tb, 1)

    # Fold the fc7 scalar into spare padded lane `y_col` -> one unmasked
    # lane-dense (tb, f_pad) store (half the writeback of a separate block).
    col = jax.lax.broadcasted_iota(jnp.int32, (tb, f_pad), 1)
    out_ref[...] = jnp.where(col == y_col, y, feats).astype(out_ref.dtype)


def prepare_params(params, d_in, weight_dtype=jnp.bfloat16):
    """One-time parameter glue (hoisted out of the per-forward path).

    params: list of (W, b) in PyTorch Linear convention W:(out,in), b:(out,).
    Weights are transposed to (in,out) and zero-padded so every dim is a
    multiple of 128; fc6's out dim is padded to round_up(n_features+1, 128) so
    a spare lane exists for the fc7 scalar. Zero padding is exact under ReLU.
    Biases are kept f32; fc7 is a padded (1, f_pad) row + (1,1) bias for the VPU.
    """
    prepped = []
    in_dim = _round_up(d_in, LANE)
    n_layers = len(params)
    for li, (W, b) in enumerate(params[:-1]):               # fc1..fc6 (MXU layers)
        out_raw = W.shape[0]
        if li == n_layers - 2:                              # fc6: reserve a spare lane
            out_dim = _round_up(out_raw + 1, LANE)
        else:
            out_dim = _round_up(out_raw, LANE)
        Wt = jnp.zeros((in_dim, out_dim), jnp.float32)
        Wt = Wt.at[:W.shape[1], :out_raw].set(jnp.asarray(W, jnp.float32).T)
        bp = jnp.zeros((1, out_dim), jnp.float32).at[0, :out_raw].set(
            jnp.asarray(b, jnp.float32))
        prepped += [Wt.astype(weight_dtype), bp]
        in_dim = out_dim
    W7, b7 = params[-1]                                     # fc7 (in=n_features, out=1)
    w7_row = jnp.zeros((1, in_dim), jnp.float32).at[0, :W7.shape[1]].set(
        jnp.asarray(W7, jnp.float32)[0])
    b7_row = jnp.full((1, 1), jnp.asarray(b7, jnp.float32)[0], jnp.float32)
    prepped += [w7_row.astype(weight_dtype), b7_row]
    return tuple(prepped)


def mynet_forward(x_nchw, prepped, n_features, *, tile_b=1024):
    """x_nchw: (B, 3, H, W). Returns (out (B,1), x_features (B,n_features))."""
    B = x_nchw.shape[0]
    x = x_nchw.reshape(B, -1)                               # nn.Flatten semantics
    d_in = x.shape[1]
    d_in_pad = prepped[0].shape[0]
    f_pad = prepped[-2].shape[1]
    y_col = n_features                                      # spare padded lane for fc7
    assert n_features < f_pad

    # Balanced batch tiles (multiple of 8 rows) with >= 2 grid steps so both
    # v7x TensorCores get work on the "parallel" grid axis.
    n_tiles = max(2, _cdiv(B, tile_b))
    tb = _round_up(_cdiv(B, n_tiles), SUB)
    b_pad = tb * n_tiles
    grid = (n_tiles,)

    cdt = prepped[0].dtype
    if d_in == d_in_pad and b_pad == B:
        x_p = x                                             # no pad copy; kernel casts
    else:
        # one fused pad in the (narrow) compute dtype; padded rows are zero and
        # the wrapper slices [:B] below.
        x_p = jnp.pad(x.astype(cdt), ((0, b_pad - B), (0, d_in_pad - d_in)))

    x_spec = pl.BlockSpec((tb, d_in_pad), lambda i: (i, 0))
    out_spec = pl.BlockSpec((tb, f_pad), lambda i: (i, 0))

    # VMEM budget: single-buffered resident weights + double-buffered x/out
    # tiles + headroom.
    # TODO(synk): stream per-layer weights (second grid axis / emit_pipeline)
    # when resident weights exceed ~48 MiB on v7x's 64 MiB VMEM.
    w_bytes = sum(int(p.size) * p.dtype.itemsize for p in prepped)
    x_tile_bytes = tb * d_in_pad * x_p.dtype.itemsize
    out_tile_bytes = tb * f_pad * 4
    needed = w_bytes + 2 * (x_tile_bytes + out_tile_bytes) + (4 << 20)
    vmem_limit = int(min(max(needed, 32 << 20), 110 << 20))

    hid = prepped[2].shape[0]                               # padded hidden width
    flops = 2 * b_pad * (d_in_pad * hid + 4 * hid * hid + hid * f_pad + f_pad)
    bytes_acc = int(x_p.size) * x_p.dtype.itemsize + w_bytes + b_pad * f_pad * 4

    kernel = functools.partial(_mlp_kernel, y_col=y_col)

    def call(single_buffer_weights):
        if single_buffer_weights:
            # Constant index_map -> weights fetched once; single buffer halves
            # their resident VMEM footprint.
            w_specs = [pl.BlockSpec(p.shape, lambda i: (0, 0),
                                    pipeline_mode=pl.Buffered(1))
                       for p in prepped]
        else:
            w_specs = [pl.BlockSpec(p.shape, lambda i: (0, 0)) for p in prepped]
        return pl.pallas_call(
            kernel,
            out_shape=jax.ShapeDtypeStruct((b_pad, f_pad), jnp.float32),
            grid=grid,
            in_specs=[x_spec] + w_specs,
            out_specs=out_spec,
            compiler_params=pltpu.CompilerParams(
                dimension_semantics=("parallel",),
                vmem_limit_bytes=vmem_limit),
            cost_estimate=pl.CostEstimate(flops=int(flops), transcendentals=0,
                                          bytes_accessed=int(bytes_acc)),
        )(x_p, *prepped)

    try:
        slab = call(True)            # single-buffered resident weights
    except Exception:
        slab = call(False)           # fallback: default double buffering

    out = slab[:B, y_col:y_col + 1]                         # fc7 output (B, 1)
    feats = slab[:B, :n_features]                           # x_features (B, n_features)
    return out, feats


def init_params(key, n_neurons, h, w, n_features=50):
    """Deterministic init mimicking PyTorch nn.Linear default (uniform +-1/sqrt(fan_in))."""
    dims = [(3 * h * w, n_neurons),
            (n_neurons, n_neurons),
            (n_neurons, n_neurons),
            (n_neurons, n_neurons),
            (n_neurons, n_neurons),
            (n_neurons, n_features),
            (n_features, 1)]
    params = []
    for (fan_in, fan_out) in dims:
        key, kw, kb = jax.random.split(key, 3)
        bound = 1.0 / jnp.sqrt(float(fan_in))
        W = jax.random.uniform(kw, (fan_out, fan_in), jnp.float32, -bound, bound)
        b = jax.random.uniform(kb, (fan_out,), jnp.float32, -bound, bound)
        params.append((W, b))
    return params


def _reference(x, params):
    h = x.reshape(x.shape[0], -1)
    for i in range(5):
        Wp, bp = params[i]
        h = jnp.maximum(h @ Wp.T + bp, 0.0)
    W6, b6 = params[5]
    feats = h @ W6.T + b6
    W7, b7 = params[6]
    y = jnp.maximum(feats, 0.0) @ W7.T + b7
    return y, feats


if __name__ == "__main__":
    key = jax.random.PRNGKey(0)
    B, C, H, W = 2, 3, 16, 16
    n_neurons, n_features = 32, 50

    kx, kp = jax.random.split(key)
    x = jax.random.normal(kx, (B, C, H, W), jnp.float32)
    params = init_params(kp, n_neurons, H, W, n_features)
    ref_out, ref_feats = _reference(x, params)

    # f32 weights: exact-tolerance check vs the pure-JAX reference.
    prepped_f32 = prepare_params(params, 3 * H * W, weight_dtype=jnp.float32)
    out, feats = mynet_forward(x, prepped_f32, n_features)
    jax.block_until_ready((out, feats))
    assert out.shape == (B, 1) and feats.shape == (B, n_features)
    assert jnp.allclose(out, ref_out, atol=1e-4, rtol=1e-4)
    assert jnp.allclose(feats, ref_feats, atol=1e-4, rtol=1e-4)

    # bf16 weights + bf16-carried activations (default for perf on all gens);
    # accumulation, bias add and ReLU stay f32, so only quantization error remains.
    prepped_bf16 = prepare_params(params, 3 * H * W, weight_dtype=jnp.bfloat16)
    out_bf, feats_bf = mynet_forward(x, prepped_bf16, n_features)
    jax.block_until_ready((out_bf, feats_bf))
    assert jnp.allclose(out_bf, ref_out, atol=1e-1, rtol=1e-1)
    assert jnp.allclose(feats_bf, ref_feats, atol=1e-1, rtol=1e-1)

    print("KERNEL_OK")
</pallas_src>

<mosaic_0001>
module attributes {stable_mosaic.version = 11 : i64} {
  func.func @_mlp_kernel(%arg0: i32, %arg1: memref<8x768xf32, #tpu.memory_space<vmem>>, %arg2: memref<768x128xf32, #tpu.memory_space<vmem>>, %arg3: memref<1x128xf32, #tpu.memory_space<vmem>>, %arg4: memref<128x128xf32, #tpu.memory_space<vmem>>, %arg5: memref<1x128xf32, #tpu.memory_space<vmem>>, %arg6: memref<128x128xf32, #tpu.memory_space<vmem>>, %arg7: memref<1x128xf32, #tpu.memory_space<vmem>>, %arg8: memref<128x128xf32, #tpu.memory_space<vmem>>, %arg9: memref<1x128xf32, #tpu.memory_space<vmem>>, %arg10: memref<128x128xf32, #tpu.memory_space<vmem>>, %arg11: memref<1x128xf32, #tpu.memory_space<vmem>>, %arg12: memref<128x128xf32, #tpu.memory_space<vmem>>, %arg13: memref<1x128xf32, #tpu.memory_space<vmem>>, %arg14: memref<1x128xf32, #tpu.memory_space<vmem>>, %arg15: memref<1x1xf32, #tpu.memory_space<vmem>>, %arg16: memref<8x128xf32, #tpu.memory_space<vmem>>) attributes {dimension_semantics = [#tpu.dimension_semantics<parallel>], iteration_bounds = array<i64: 2>, scalar_prefetch = 0 : i64, scratch_operands = 0 : i64, tpu.core_type = #tpu.core_type<tc>, window_params = [{transform_indices = @transform_0, window_bounds = array<i64: 8, 768>}, {pipeline_mode = #tpu.pipeline_mode<synchronous>, transform_indices = @transform_1, window_bounds = array<i64: 768, 128>}, {pipeline_mode = #tpu.pipeline_mode<synchronous>, transform_indices = @transform_2, window_bounds = array<i64: 1, 128>}, {pipeline_mode = #tpu.pipeline_mode<synchronous>, transform_indices = @transform_3, window_bounds = array<i64: 128, 128>}, {pipeline_mode = #tpu.pipeline_mode<synchronous>, transform_indices = @transform_4, window_bounds = array<i64: 1, 128>}, {pipeline_mode = #tpu.pipeline_mode<synchronous>, transform_indices = @transform_5, window_bounds = array<i64: 128, 128>}, {pipeline_mode = #tpu.pipeline_mode<synchronous>, transform_indices = @transform_6, window_bounds = array<i64: 1, 128>}, {pipeline_mode = #tpu.pipeline_mode<synchronous>, transform_indices = @transform_7, window_bounds = array<i64: 128, 128>}, {pipeline_mode = #tpu.pipeline_mode<synchronous>, transform_indices = @transform_8, window_bounds = array<i64: 1, 128>}, {pipeline_mode = #tpu.pipeline_mode<synchronous>, transform_indices = @transform_9, window_bounds = array<i64: 128, 128>}, {pipeline_mode = #tpu.pipeline_mode<synchronous>, transform_indices = @transform_10, window_bounds = array<i64: 1, 128>}, {pipeline_mode = #tpu.pipeline_mode<synchronous>, transform_indices = @transform_11, window_bounds = array<i64: 128, 128>}, {pipeline_mode = #tpu.pipeline_mode<synchronous>, transform_indices = @transform_12, window_bounds = array<i64: 1, 128>}, {pipeline_mode = #tpu.pipeline_mode<synchronous>, transform_indices = @transform_13, window_bounds = array<i64: 1, 128>}, {pipeline_mode = #tpu.pipeline_mode<synchronous>, transform_indices = @transform_14, window_bounds = array<i64: 1, 1>}, {transform_indices = @transform_15, window_bounds = array<i64: 8, 128>}]} {
    %c0 = arith.constant 0 : index
    %c0_0 = arith.constant 0 : index
    %0 = vector.load %arg1[%c0, %c0_0] : memref<8x768xf32, #tpu.memory_space<vmem>>, vector<8x768xf32>
    %c0_1 = arith.constant 0 : index
    %c0_2 = arith.constant 0 : index
    %1 = vector.load %arg2[%c0_1, %c0_2] : memref<768x128xf32, #tpu.memory_space<vmem>>, vector<768x128xf32>
    %cst = arith.constant dense<0.000000e+00> : vector<8x128xf32>
    %2 = tpu.matmul %0, %1, %cst {dimension_numbers = #tpu.dot_dimension_numbers<[1], [0], [0], [1], [0, 0, 1, 1], [], []>} : vector<8x768xf32>, vector<768x128xf32>, vector<8x128xf32> -> vector<8x128xf32>
    %c0_3 = arith.constant 0 : index
    %c0_4 = arith.constant 0 : index
    %3 = vector.load %arg3[%c0_3, %c0_4] : memref<1x128xf32, #tpu.memory_space<vmem>>, vector<1x128xf32>
    %4 = vector.broadcast %3 : vector<1x128xf32> to vector<8x128xf32>
    %5 = arith.addf %2, %4 : vector<8x128xf32>
    %cst_5 = arith.constant 0.000000e+00 : f32
    %6 = vector.broadcast %cst_5 : f32 to vector<8x128xf32>
    %7 = arith.maximumf %5, %6 : vector<8x128xf32>
    %c0_6 = arith.constant 0 : index
    %c0_7 = arith.constant 0 : index
    %8 = vector.load %arg4[%c0_6, %c0_7] : memref<128x128xf32, #tpu.memory_space<vmem>>, vector<128x128xf32>
    %cst_8 = arith.constant dense<0.000000e+00> : vector<8x128xf32>
    %9 = tpu.matmul %7, %8, %cst_8 {dimension_numbers = #tpu.dot_dimension_numbers<[1], [0], [0], [1], [0, 0, 1, 1], [], []>} : vector<8x128xf32>, vector<128x128xf32>, vector<8x128xf32> -> vector<8x128xf32>
    %c0_9 = arith.constant 0 : index
    %c0_10 = arith.constant 0 : index
    %10 = vector.load %arg5[%c0_9, %c0_10] : memref<1x128xf32, #tpu.memory_space<vmem>>, vector<1x128xf32>
    %11 = vector.broadcast %10 : vector<1x128xf32> to vector<8x128xf32>
    %12 = arith.addf %9, %11 : vector<8x128xf32>
    %cst_11 = arith.constant 0.000000e+00 : f32
    %13 = vector.broadcast %cst_11 : f32 to vector<8x128xf32>
    %14 = arith.maximumf %12, %13 : vector<8x128xf32>
    %c0_12 = arith.constant 0 : index
    %c0_13 = arith.constant 0 : index
    %15 = vector.load %arg6[%c0_12, %c0_13] : memref<128x128xf32, #tpu.memory_space<vmem>>, vector<128x128xf32>
    %cst_14 = arith.constant dense<0.000000e+00> : vector<8x128xf32>
    %16 = tpu.matmul %14, %15, %cst_14 {dimension_numbers = #tpu.dot_dimension_numbers<[1], [0], [0], [1], [0, 0, 1, 1], [], []>} : vector<8x128xf32>, vector<128x128xf32>, vector<8x128xf32> -> vector<8x128xf32>
    %c0_15 = arith.constant 0 : index
    %c0_16 = arith.constant 0 : index
    %17 = vector.load %arg7[%c0_15, %c0_16] : memref<1x128xf32, #tpu.memory_space<vmem>>, vector<1x128xf32>
    %18 = vector.broadcast %17 : vector<1x128xf32> to vector<8x128xf32>
    %19 = arith.addf %16, %18 : vector<8x128xf32>
    %cst_17 = arith.constant 0.000000e+00 : f32
    %20 = vector.broadcast %cst_17 : f32 to vector<8x128xf32>
    %21 = arith.maximumf %19, %20 : vector<8x128xf32>
    %c0_18 = arith.constant 0 : index
    %c0_19 = arith.constant 0 : index
    %22 = vector.load %arg8[%c0_18, %c0_19] : memref<128x128xf32, #tpu.memory_space<vmem>>, vector<128x128xf32>
    %cst_20 = arith.constant dense<0.000000e+00> : vector<8x128xf32>
    %23 = tpu.matmul %21, %22, %cst_20 {dimension_numbers = #tpu.dot_dimension_numbers<[1], [0], [0], [1], [0, 0, 1, 1], [], []>} : vector<8x128xf32>, vector<128x128xf32>, vector<8x128xf32> -> vector<8x128xf32>
    %c0_21 = arith.constant 0 : index
    %c0_22 = arith.constant 0 : index
    %24 = vector.load %arg9[%c0_21, %c0_22] : memref<1x128xf32, #tpu.memory_space<vmem>>, vector<1x128xf32>
    %25 = vector.broadcast %24 : vector<1x128xf32> to vector<8x128xf32>
    %26 = arith.addf %23, %25 : vector<8x128xf32>
    %cst_23 = arith.constant 0.000000e+00 : f32
    %27 = vector.broadcast %cst_23 : f32 to vector<8x128xf32>
    %28 = arith.maximumf %26, %27 : vector<8x128xf32>
    %c0_24 = arith.constant 0 : index
    %c0_25 = arith.constant 0 : index
    %29 = vector.load %arg10[%c0_24, %c0_25] : memref<128x128xf32, #tpu.memory_space<vmem>>, vector<128x128xf32>
    %cst_26 = arith.constant dense<0.000000e+00> : vector<8x128xf32>
    %30 = tpu.matmul %28, %29, %cst_26 {dimension_numbers = #tpu.dot_dimension_numbers<[1], [0], [0], [1], [0, 0, 1, 1], [], []>} : vector<8x128xf32>, vector<128x128xf32>, vector<8x128xf32> -> vector<8x128xf32>
    %c0_27 = arith.constant 0 : index
    %c0_28 = arith.constant 0 : index
    %31 = vector.load %arg11[%c0_27, %c0_28] : memref<1x128xf32, #tpu.memory_space<vmem>>, vector<1x128xf32>
    %32 = vector.broadcast %31 : vector<1x128xf32> to vector<8x128xf32>
    %33 = arith.addf %30, %32 : vector<8x128xf32>
    %cst_29 = arith.constant 0.000000e+00 : f32
    %34 = vector.broadcast %cst_29 : f32 to vector<8x128xf32>
    %35 = arith.maximumf %33, %34 : vector<8x128xf32>
    %c0_30 = arith.constant 0 : index
    %c0_31 = arith.constant 0 : index
    %36 = vector.load %arg12[%c0_30, %c0_31] : memref<128x128xf32, #tpu.memory_space<vmem>>, vector<128x128xf32>
    %cst_32 = arith.constant dense<0.000000e+00> : vector<8x128xf32>
    %37 = tpu.matmul %35, %36, %cst_32 {dimension_numbers = #tpu.dot_dimension_numbers<[1], [0], [0], [1], [0, 0, 1, 1], [], []>} : vector<8x128xf32>, vector<128x128xf32>, vector<8x128xf32> -> vector<8x128xf32>
    %c0_33 = arith.constant 0 : index
    %c0_34 = arith.constant 0 : index
    %38 = vector.load %arg13[%c0_33, %c0_34] : memref<1x128xf32, #tpu.memory_space<vmem>>, vector<1x128xf32>
    %39 = vector.broadcast %38 : vector<1x128xf32> to vector<8x128xf32>
    %40 = arith.addf %37, %39 : vector<8x128xf32>
    %cst_35 = arith.constant 0.000000e+00 : f32
    %41 = vector.broadcast %cst_35 : f32 to vector<8x128xf32>
    %42 = arith.maximumf %40, %41 : vector<8x128xf32>
    %c0_36 = arith.constant 0 : index
    %c0_37 = arith.constant 0 : index
    %43 = vector.load %arg14[%c0_36, %c0_37] : memref<1x128xf32, #tpu.memory_space<vmem>>, vector<1x128xf32>
    %44 = vector.broadcast %43 : vector<1x128xf32> to vector<8x128xf32>
    %45 = arith.mulf %42, %44 : vector<8x128xf32>
    %cst_38 = arith.constant dense<0.000000e+00> : vector<8xf32>
    %46 = vector.multi_reduction <add>, %45, %cst_38 [1] : vector<8x128xf32> to vector<8xf32>
    %47 = vector.shape_cast %46 : vector<8xf32> to vector<8x1xf32>
    %c0_39 = arith.constant 0 : index
    %c0_40 = arith.constant 0 : index
    %48 = vector.load %arg15[%c0_39, %c0_40] : memref<1x1xf32, #tpu.memory_space<vmem>>, vector<1x1xf32>
    %49 = vector.broadcast %48 : vector<1x1xf32> to vector<8x1xf32>
    %50 = arith.addf %47, %49 : vector<8x1xf32>
    %51 = tpu.iota {dimensions = array<i32: 1>} : vector<8x128xi32>
    %c50_i32 = arith.constant 50 : i32
    %52 = vector.broadcast %c50_i32 : i32 to vector<8x128xi32>
    %53 = arith.cmpi eq, %51, %52 : vector<8x128xi32>
    %54 = vector.shape_cast %50 : vector<8x1xf32> to vector<8x1xf32>
    %55 = vector.broadcast %54 : vector<8x1xf32> to vector<8x128xf32>
    %56 = arith.select %53, %55, %40 : vector<8x128xi1>, vector<8x128xf32>
    %c0_41 = arith.constant 0 : index
    %c0_42 = arith.constant 0 : index
    %57 = vector.load %arg16[%c0_41, %c0_42] : memref<8x128xf32, #tpu.memory_space<vmem>>, vector<8x128xf32>
    tpu.vector_store %arg16[%c0_41, %c0_42], %56 {strides = array<i32>} : memref<8x128xf32, #tpu.memory_space<vmem>>, vector<8x128xf32>,
    return
  }
  func.func @transform_0(%arg0: i32) -> (i32, i32) {
    %c0_i32 = arith.constant 0 : i32
    %c0_i32_0 = arith.constant 0 : i32
    return %arg0, %c0_i32 : i32, i32
  }
  func.func @transform_1(%arg0: i32) -> (i32, i32) {
    %c0_i32 = arith.constant 0 : i32
    %c0_i32_0 = arith.constant 0 : i32
    %c0_i32_1 = arith.constant 0 : i32
    return %c0_i32, %c0_i32_0 : i32, i32
  }
  func.func @transform_2(%arg0: i32) -> (i32, i32) {
    %c0_i32 = arith.constant 0 : i32
    %c0_i32_0 = arith.constant 0 : i32
    %c0_i32_1 = arith.constant 0 : i32
    return %c0_i32, %c0_i32_0 : i32, i32
  }
  func.func @transform_3(%arg0: i32) -> (i32, i32) {
    %c0_i32 = arith.constant 0 : i32
    %c0_i32_0 = arith.constant 0 : i32
    %c0_i32_1 = arith.constant 0 : i32
    return %c0_i32, %c0_i32_0 : i32, i32
  }
  func.func @transform_4(%arg0: i32) -> (i32, i32) {
    %c0_i32 = arith.constant 0 : i32
    %c0_i32_0 = arith.constant 0 : i32
    %c0_i32_1 = arith.constant 0 : i32
    return %c0_i32, %c0_i32_0 : i32, i32
  }
  func.func @transform_5(%arg0: i32) -> (i32, i32) {
    %c0_i32 = arith.constant 0 : i32
    %c0_i32_0 = arith.constant 0 : i32
    %c0_i32_1 = arith.constant 0 : i32
    return %c0_i32, %c0_i32_0 : i32, i32
  }
  func.func @transform_6(%arg0: i32) -> (i32, i32) {
    %c0_i32 = arith.constant 0 : i32
    %c0_i32_0 = arith.constant 0 : i32
    %c0_i32_1 = arith.constant 0 : i32
    return %c0_i32, %c0_i32_0 : i32, i32
  }
  func.func @transform_7(%arg0: i32) -> (i32, i32) {
    %c0_i32 = arith.constant 0 : i32
    %c0_i32_0 = arith.constant 0 : i32
    %c0_i32_1 = arith.constant 0 : i32
    return %c0_i32, %c0_i32_0 : i32, i32
  }
  func.func @transform_8(%arg0: i32) -> (i32, i32) {
    %c0_i32 = arith.constant 0 : i32
    %c0_i32_0 = arith.constant 0 : i32
    %c0_i32_1 = arith.constant 0 : i32
    return %c0_i32, %c0_i32_0 : i32, i32
  }
  func.func @transform_9(%arg0: i32) -> (i32, i32) {
    %c0_i32 = arith.constant 0 : i32
    %c0_i32_0 = arith.constant 0 : i32
    %c0_i32_1 = arith.constant 0 : i32
    return %c0_i32, %c0_i32_0 : i32, i32
  }
  func.func @transform_10(%arg0: i32) -> (i32, i32) {
    %c0_i32 = arith.constant 0 : i32
    %c0_i32_0 = arith.constant 0 : i32
    %c0_i32_1 = arith.constant 0 : i32
    return %c0_i32, %c0_i32_0 : i32, i32
  }
  func.func @transform_11(%arg0: i32) -> (i32, i32) {
    %c0_i32 = arith.constant 0 : i32
    %c0_i32_0 = arith.constant 0 : i32
    %c0_i32_1 = arith.constant 0 : i32
    return %c0_i32, %c0_i32_0 : i32, i32
  }
  func.func @transform_12(%arg0: i32) -> (i32, i32) {
    %c0_i32 = arith.constant 0 : i32
    %c0_i32_0 = arith.constant 0 : i32
    %c0_i32_1 = arith.constant 0 : i32
    return %c0_i32, %c0_i32_0 : i32, i32
  }
  func.func @transform_13(%arg0: i32) -> (i32, i32) {
    %c0_i32 = arith.constant 0 : i32
    %c0_i32_0 = arith.constant 0 : i32
    %c0_i32_1 = arith.constant 0 : i32
    return %c0_i32, %c0_i32_0 : i32, i32
  }
  func.func @transform_14(%arg0: i32) -> (i32, i32) {
    %c0_i32 = arith.constant 0 : i32
    %c0_i32_0 = arith.constant 0 : i32
    %c0_i32_1 = arith.constant 0 : i32
    return %c0_i32, %c0_i32_0 : i32, i32
  }
  func.func @transform_15(%arg0: i32) -> (i32, i32) {
    %c0_i32 = arith.constant 0 : i32
    %c0_i32_0 = arith.constant 0 : i32
    return %arg0, %c0_i32 : i32, i32
  }
}

module attributes {stable_mosaic.version = 11 : i64} {
  func.func @_mlp_kernel(%arg0: i32, %arg1: memref<8x768xf32, #tpu.memory_space<vmem>>, %arg2: memref<768x128xf32, #tpu.memory_space<vmem>>, %arg3: memref<1x128xf32, #tpu.memory_space<vmem>>, %arg4: memref<128x128xf32, #tpu.memory_space<vmem>>, %arg5: memref<1x128xf32, #tpu.memory_space<vmem>>, %arg6: memref<128x128xf32, #tpu.memory_space<vmem>>, %arg7: memref<1x128xf32, #tpu.memory_space<vmem>>, %arg8: memref<128x128xf32, #tpu.memory_space<vmem>>, %arg9: memref<1x128xf32, #tpu.memory_space<vmem>>, %arg10: memref<128x128xf32, #tpu.memory_space<vmem>>, %arg11: memref<1x128xf32, #tpu.memory_space<vmem>>, %arg12: memref<128x128xf32, #tpu.memory_space<vmem>>, %arg13: memref<1x128xf32, #tpu.memory_space<vmem>>, %arg14: memref<1x128xf32, #tpu.memory_space<vmem>>, %arg15: memref<1x1xf32, #tpu.memory_space<vmem>>, %arg16: memref<8x128xf32, #tpu.memory_space<vmem>>) attributes {dimension_semantics = [#tpu.dimension_semantics<parallel>], iteration_bounds = array<i64: 2>, scalar_prefetch = 0 : i64, scratch_operands = 0 : i64, tpu.core_type = #tpu.core_type<tc>, window_params = [{transform_indices = @transform_0, window_bounds = array<i64: 8, 768>}, {pipeline_mode = #tpu.pipeline_mode<synchronous>, transform_indices = @transform_1, window_bounds = array<i64: 768, 128>}, {pipeline_mode = #tpu.pipeline_mode<synchronous>, transform_indices = @transform_2, window_bounds = array<i64: 1, 128>}, {pipeline_mode = #tpu.pipeline_mode<synchronous>, transform_indices = @transform_3, window_bounds = array<i64: 128, 128>}, {pipeline_mode = #tpu.pipeline_mode<synchronous>, transform_indices = @transform_4, window_bounds = array<i64: 1, 128>}, {pipeline_mode = #tpu.pipeline_mode<synchronous>, transform_indices = @transform_5, window_bounds = array<i64: 128, 128>}, {pipeline_mode = #tpu.pipeline_mode<synchronous>, transform_indices = @transform_6, window_bounds = array<i64: 1, 128>}, {pipeline_mode = #tpu.pipeline_mode<synchronous>, transform_indices = @transform_7, window_bounds = array<i64: 128, 128>}, {pipeline_mode = #tpu.pipeline_mode<synchronous>, transform_indices = @transform_8, window_bounds = array<i64: 1, 128>}, {pipeline_mode = #tpu.pipeline_mode<synchronous>, transform_indices = @transform_9, window_bounds = array<i64: 128, 128>}, {pipeline_mode = #tpu.pipeline_mode<synchronous>, transform_indices = @transform_10, window_bounds = array<i64: 1, 128>}, {pipeline_mode = #tpu.pipeline_mode<synchronous>, transform_indices = @transform_11, window_bounds = array<i64: 128, 128>}, {pipeline_mode = #tpu.pipeline_mode<synchronous>, transform_indices = @transform_12, window_bounds = array<i64: 1, 128>}, {pipeline_mode = #tpu.pipeline_mode<synchronous>, transform_indices = @transform_13, window_bounds = array<i64: 1, 128>}, {pipeline_mode = #tpu.pipeline_mode<synchronous>, transform_indices = @transform_14, window_bounds = array<i64: 1, 1>}, {transform_indices = @transform_15, window_bounds = array<i64: 8, 128>}]} {
    %c0 = arith.constant 0 : index
    %c0_0 = arith.constant 0 : index
    %0 = vector.load %arg1[%c0, %c0_0] : memref<8x768xf32, #tpu.memory_space<vmem>>, vector<8x768xf32>
    %c0_1 = arith.constant 0 : index
    %c0_2 = arith.constant 0 : index
    %1 = vector.load %arg2[%c0_1, %c0_2] : memref<768x128xf32, #tpu.memory_space<vmem>>, vector<768x128xf32>
    %cst = arith.constant dense<0.000000e+00> : vector<8x128xf32>
    %2 = tpu.matmul %0, %1, %cst {dimension_numbers = #tpu.dot_dimension_numbers<[1], [0], [0], [1], [0, 0, 1, 1], [], []>} : vector<8x768xf32>, vector<768x128xf32>, vector<8x128xf32> -> vector<8x128xf32>
    %c0_3 = arith.constant 0 : index
    %c0_4 = arith.constant 0 : index
    %3 = vector.load %arg3[%c0_3, %c0_4] : memref<1x128xf32, #tpu.memory_space<vmem>>, vector<1x128xf32>
    %4 = vector.broadcast %3 : vector<1x128xf32> to vector<8x128xf32>
    %5 = arith.addf %2, %4 : vector<8x128xf32>
    %cst_5 = arith.constant 0.000000e+00 : f32
    %6 = vector.broadcast %cst_5 : f32 to vector<8x128xf32>
    %7 = arith.maximumf %5, %6 : vector<8x128xf32>
    %c0_6 = arith.constant 0 : index
    %c0_7 = arith.constant 0 : index
    %8 = vector.load %arg4[%c0_6, %c0_7] : memref<128x128xf32, #tpu.memory_space<vmem>>, vector<128x128xf32>
    %cst_8 = arith.constant dense<0.000000e+00> : vector<8x128xf32>
    %9 = tpu.matmul %7, %8, %cst_8 {dimension_numbers = #tpu.dot_dimension_numbers<[1], [0], [0], [1], [0, 0, 1, 1], [], []>} : vector<8x128xf32>, vector<128x128xf32>, vector<8x128xf32> -> vector<8x128xf32>
    %c0_9 = arith.constant 0 : index
    %c0_10 = arith.constant 0 : index
    %10 = vector.load %arg5[%c0_9, %c0_10] : memref<1x128xf32, #tpu.memory_space<vmem>>, vector<1x128xf32>
    %11 = vector.broadcast %10 : vector<1x128xf32> to vector<8x128xf32>
    %12 = arith.addf %9, %11 : vector<8x128xf32>
    %cst_11 = arith.constant 0.000000e+00 : f32
    %13 = vector.broadcast %cst_11 : f32 to vector<8x128xf32>
    %14 = arith.maximumf %12, %13 : vector<8x128xf32>
    %c0_12 = arith.constant 0 : index
    %c0_13 = arith.constant 0 : index
    %15 = vector.load %arg6[%c0_12, %c0_13] : memref<128x128xf32, #tpu.memory_space<vmem>>, vector<128x128xf32>
    %cst_14 = arith.constant dense<0.000000e+00> : vector<8x128xf32>
    %16 = tpu.matmul %14, %15, %cst_14 {dimension_numbers = #tpu.dot_dimension_numbers<[1], [0], [0], [1], [0, 0, 1, 1], [], []>} : vector<8x128xf32>, vector<128x128xf32>, vector<8x128xf32> -> vector<8x128xf32>
    %c0_15 = arith.constant 0 : index
    %c0_16 = arith.constant 0 : index
    %17 = vector.load %arg7[%c0_15, %c0_16] : memref<1x128xf32, #tpu.memory_space<vmem>>, vector<1x128xf32>
    %18 = vector.broadcast %17 : vector<1x128xf32> to vector<8x128xf32>
    %19 = arith.addf %16, %18 : vector<8x128xf32>
    %cst_17 = arith.constant 0.000000e+00 : f32
    %20 = vector.broadcast %cst_17 : f32 to vector<8x128xf32>
    %21 = arith.maximumf %19, %20 : vector<8x128xf32>
    %c0_18 = arith.constant 0 : index
    %c0_19 = arith.constant 0 : index
    %22 = vector.load %arg8[%c0_18, %c0_19] : memref<128x128xf32, #tpu.memory_space<vmem>>, vector<128x128xf32>
    %cst_20 = arith.constant dense<0.000000e+00> : vector<8x128xf32>
    %23 = tpu.matmul %21, %22, %cst_20 {dimension_numbers = #tpu.dot_dimension_numbers<[1], [0], [0], [1], [0, 0, 1, 1], [], []>} : vector<8x128xf32>, vector<128x128xf32>, vector<8x128xf32> -> vector<8x128xf32>
    %c0_21 = arith.constant 0 : index
    %c0_22 = arith.constant 0 : index
    %24 = vector.load %arg9[%c0_21, %c0_22] : memref<1x128xf32, #tpu.memory_space<vmem>>, vector<1x128xf32>
    %25 = vector.broadcast %24 : vector<1x128xf32> to vector<8x128xf32>
    %26 = arith.addf %23, %25 : vector<8x128xf32>
    %cst_23 = arith.constant 0.000000e+00 : f32
    %27 = vector.broadcast %cst_23 : f32 to vector<8x128xf32>
    %28 = arith.maximumf %26, %27 : vector<8x128xf32>
    %c0_24 = arith.constant 0 : index
    %c0_25 = arith.constant 0 : index
    %29 = vector.load %arg10[%c0_24, %c0_25] : memref<128x128xf32, #tpu.memory_space<vmem>>, vector<128x128xf32>
    %cst_26 = arith.constant dense<0.000000e+00> : vector<8x128xf32>
    %30 = tpu.matmul %28, %29, %cst_26 {dimension_numbers = #tpu.dot_dimension_numbers<[1], [0], [0], [1], [0, 0, 1, 1], [], []>} : vector<8x128xf32>, vector<128x128xf32>, vector<8x128xf32> -> vector<8x128xf32>
    %c0_27 = arith.constant 0 : index
    %c0_28 = arith.constant 0 : index
    %31 = vector.load %arg11[%c0_27, %c0_28] : memref<1x128xf32, #tpu.memory_space<vmem>>, vector<1x128xf32>
    %32 = vector.broadcast %31 : vector<1x128xf32> to vector<8x128xf32>
    %33 = arith.addf %30, %32 : vector<8x128xf32>
    %cst_29 = arith.constant 0.000000e+00 : f32
    %34 = vector.broadcast %cst_29 : f32 to vector<8x128xf32>
    %35 = arith.maximumf %33, %34 : vector<8x128xf32>
    %c0_30 = arith.constant 0 : index
    %c0_31 = arith.constant 0 : index
    %36 = vector.load %arg12[%c0_30, %c0_31] : memref<128x128xf32, #tpu.memory_space<vmem>>, vector<128x128xf32>
    %cst_32 = arith.constant dense<0.000000e+00> : vector<8x128xf32>
    %37 = tpu.matmul %35, %36, %cst_32 {dimension_numbers = #tpu.dot_dimension_numbers<[1], [0], [0], [1], [0, 0, 1, 1], [], []>} : vector<8x128xf32>, vector<128x128xf32>, vector<8x128xf32> -> vector<8x128xf32>
    %c0_33 = arith.constant 0 : index
    %c0_34 = arith.constant 0 : index
    %38 = vector.load %arg13[%c0_33, %c0_34] : memref<1x128xf32, #tpu.memory_space<vmem>>, vector<1x128xf32>
    %39 = vector.broadcast %38 : vector<1x128xf32> to vector<8x128xf32>
    %40 = arith.addf %37, %39 : vector<8x128xf32>
    %cst_35 = arith.constant 0.000000e+00 : f32
    %41 = vector.broadcast %cst_35 : f32 to vector<8x128xf32>
    %42 = arith.maximumf %40, %41 : vector<8x128xf32>
    %c0_36 = arith.constant 0 : index
    %c0_37 = arith.constant 0 : index
    %43 = vector.load %arg14[%c0_36, %c0_37] : memref<1x128xf32, #tpu.memory_space<vmem>>, vector<1x128xf32>
    %44 = vector.broadcast %43 : vector<1x128xf32> to vector<8x128xf32>
    %45 = arith.mulf %42, %44 : vector<8x128xf32>
    %cst_38 = arith.constant dense<0.000000e+00> : vector<8xf32>
    %46 = vector.multi_reduction <add>, %45, %cst_38 [1] : vector<8x128xf32> to vector<8xf32>
    %47 = vector.shape_cast %46 : vector<8xf32> to vector<8x1xf32>
    %c0_39 = arith.constant 0 : index
    %c0_40 = arith.constant 0 : index
    %48 = vector.load %arg15[%c0_39, %c0_40] : memref<1x1xf32, #tpu.memory_space<vmem>>, vector<1x1xf32>
    %49 = vector.broadcast %48 : vector<1x1xf32> to vector<8x1xf32>
    %50 = arith.addf %47, %49 : vector<8x1xf32>
    %51 = tpu.iota {dimensions = array<i32: 1>} : vector<8x128xi32>
    %c50_i32 = arith.constant 50 : i32
    %52 = vector.broadcast %c50_i32 : i32 to vector<8x128xi32>
    %53 = arith.cmpi eq, %51, %52 : vector<8x128xi32>
    %54 = vector.shape_cast %50 : vector<8x1xf32> to vector<8x1xf32>
    %55 = vector.broadcast %54 : vector<8x1xf32> to vector<8x128xf32>
    %56 = arith.select %53, %55, %40 : vector<8x128xi1>, vector<8x128xf32>
    %c0_41 = arith.constant 0 : index
    %c0_42 = arith.constant 0 : index
    %57 = vector.load %arg16[%c0_41, %c0_42] : memref<8x128xf32, #tpu.memory_space<vmem>>, vector<8x128xf32>
    tpu.vector_store %arg16[%c0_41, %c0_42], %56 {strides = array<i32>} : memref<8x128xf32, #tpu.memory_space<vmem>>, vector<8x128xf32>,
    return
  }
  func.func @transform_0(%arg0: i32) -> (i32, i32) {
    %c0_i32 = arith.constant 0 : i32
    %c0_i32_0 = arith.constant 0 : i32
    return %arg0, %c0_i32 : i32, i32
  }
  func.func @transform_1(%arg0: i32) -> (i32, i32) {
    %c0_i32 = arith.constant 0 : i32
    %c0_i32_0 = arith.constant 0 : i32
    %c0_i32_1 = arith.constant 0 : i32
    return %c0_i32, %c0_i32_0 : i32, i32
  }
  func.func @transform_2(%arg0: i32) -> (i32, i32) {
    %c0_i32 = arith.constant 0 : i32
    %c0_i32_0 = arith.constant 0 : i32
    %c0_i32_1 = arith.constant 0 : i32
    return %c0_i32, %c0_i32_0 : i32, i32
  }
  func.func @transform_3(%arg0: i32) -> (i32, i32) {
    %c0_i32 = arith.constant 0 : i32
    %c0_i32_0 = arith.constant 0 : i32
    %c0_i32_1 = arith.constant 0 : i32
    return %c0_i32, %c0_i32_0 : i32, i32
  }
  func.func @transform_4(%arg0: i32) -> (i32, i32) {
    %c0_i32 = arith.constant 0 : i32
    %c0_i32_0 = arith.constant 0 : i32
    %c0_i32_1 = arith.constant 0 : i32
    return %c0_i32, %c0_i32_0 : i32, i32
  }
  func.func @transform_5(%arg0: i32) -> (i32, i32) {
    %c0_i32 = arith.constant 0 : i32
    %c0_i32_0 = arith.constant 0 : i32
    %c0_i32_1 = arith.constant 0 : i32
    return %c0_i32, %c0_i32_0 : i32, i32
  }
  func.func @transform_6(%arg0: i32) -> (i32, i32) {
    %c0_i32 = arith.constant 0 : i32
    %c0_i32_0 = arith.constant 0 : i32
    %c0_i32_1 = arith.constant 0 : i32
    return %c0_i32, %c0_i32_0 : i32, i32
  }
  func.func @transform_7(%arg0: i32) -> (i32, i32) {
    %c0_i32 = arith.constant 0 : i32
    %c0_i32_0 = arith.constant 0 : i32
    %c0_i32_1 = arith.constant 0 : i32
    return %c0_i32, %c0_i32_0 : i32, i32
  }
  func.func @transform_8(%arg0: i32) -> (i32, i32) {
    %c0_i32 = arith.constant 0 : i32
    %c0_i32_0 = arith.constant 0 : i32
    %c0_i32_1 = arith.constant 0 : i32
    return %c0_i32, %c0_i32_0 : i32, i32
  }
  func.func @transform_9(%arg0: i32) -> (i32, i32) {
    %c0_i32 = arith.constant 0 : i32
    %c0_i32_0 = arith.constant 0 : i32
    %c0_i32_1 = arith.constant 0 : i32
    return %c0_i32, %c0_i32_0 : i32, i32
  }
  func.func @transform_10(%arg0: i32) -> (i32, i32) {
    %c0_i32 = arith.constant 0 : i32
    %c0_i32_0 = arith.constant 0 : i32
    %c0_i32_1 = arith.constant 0 : i32
    return %c0_i32, %c0_i32_0 : i32, i32
  }
  func.func @transform_11(%arg0: i32) -> (i32, i32) {
    %c0_i32 = arith.constant 0 : i32
    %c0_i32_0 = arith.constant 0 : i32
    %c0_i32_1 = arith.constant 0 : i32
    return %c0_i32, %c0_i32_0 : i32, i32
  }
  func.func @transform_12(%arg0: i32) -> (i32, i32) {
    %c0_i32 = arith.constant 0 : i32
    %c0_i32_0 = arith.constant 0 : i32
    %c0_i32_1 = arith.constant 0 : i32
    return %c0_i32, %c0_i32_0 : i32, i32
  }
  func.func @transform_13(%arg0: i32) -> (i32, i32) {
    %c0_i32 = arith.constant 0 : i32
    %c0_i32_0 = arith.constant 0 : i32
    %c0_i32_1 = arith.constant 0 : i32
    return %c0_i32, %c0_i32_0 : i32, i32
  }
  func.func @transform_14(%arg0: i32) -> (i32, i32) {
    %c0_i32 = arith.constant 0 : i32
    %c0_i32_0 = arith.constant 0 : i32
    %c0_i32_1 = arith.constant 0 : i32
    return %c0_i32, %c0_i32_0 : i32, i32
  }
  func.func @transform_15(%arg0: i32) -> (i32, i32) {
    %c0_i32 = arith.constant 0 : i32
    %c0_i32_0 = arith.constant 0 : i32
    return %arg0, %c0_i32 : i32, i32
  }
}

</mosaic_0001>

<llo_original>
// kernel: tpu_custom_call.1
$region0: #{tpu_custom_call.1}
  #allocation0 [shape = 'u32[]', space=smem, size = 0x4, offset = 0x4, fixed_abs, tag = 'smem constant byte address 0x4 - core index']
  #allocation1 [shape = 'u32[144,128]{1,0:T(1,128)}', space=vmem, size = 0x12000, scoped, tag = 'internal scratch']
  #allocation2 [shape = 'f32[1,1]{1,0:T(1,128)S(1)}', space=vmem, size = 0x200, scoped, tag = 'scoped memory for tpu_custom_call.1']
  %s0 = inlined_call_operand.hbm [shape: f32[16,768], index: 0, kind: input, shape index: {}]
  %s1 = inlined_call_operand.hbm [shape: f32[768,128], index: 1, kind: input, shape index: {}]
  %s2 = inlined_call_operand.vmem [shape: f32[1,128], index: 2, kind: input, shape index: {}]
  %s3 = inlined_call_operand.hbm [shape: f32[128,128], index: 3, kind: input, shape index: {}]
  %s4 = inlined_call_operand.vmem [shape: f32[1,128], index: 4, kind: input, shape index: {}]
  %s5 = inlined_call_operand.hbm [shape: f32[128,128], index: 5, kind: input, shape index: {}]
  %s6 = inlined_call_operand.vmem [shape: f32[1,128], index: 6, kind: input, shape index: {}]
  %s7 = inlined_call_operand.hbm [shape: f32[128,128], index: 7, kind: input, shape index: {}]
  %s8 = inlined_call_operand.vmem [shape: f32[1,128], index: 8, kind: input, shape index: {}]
  %s9 = inlined_call_operand.hbm [shape: f32[128,128], index: 9, kind: input, shape index: {}]
  %s10 = inlined_call_operand.vmem [shape: f32[1,128], index: 10, kind: input, shape index: {}]
  %s11 = inlined_call_operand.hbm [shape: f32[128,128], index: 11, kind: input, shape index: {}]
  %s12 = inlined_call_operand.vmem [shape: f32[1,128], index: 12, kind: input, shape index: {}]
  %s13 = inlined_call_operand.vmem [shape: f32[1,128], index: 13, kind: input, shape index: {}]
  %s14 = inlined_call_operand.<no memory space> [shape: f32[1,1], index: 14, kind: input, shape index: {}]
  %s15 = inlined_call_operand.hbm [shape: f32[16,128], index: 15, kind: output, shape index: {}]
  %s16 = sld [smem:[#allocation0]]
  $region121: #{tpu_custom_call.1} parent=0
    _
  %s18 = ssub.s32 1, %s16
  %s19 = scalar_select 0, %s18, %s16
  %v20 = vstv %s14
  %21 = vst [vmem:[#allocation2] sm:$0x1] %v20
  $region1: #{tpu_custom_call.1} parent=0
    #allocation3 [shape = 'u8[49152]{0}', space=vmem, size = 0xc000, scoped, tag = 'input window, operand 0']
    #allocation4 [shape = 's32[2]{0}', space=sflag, size = 0x8, scoped, tag = 'scoped memory for tpu_custom_call.1']
    #allocation5 [shape = 's32[2]{0}', space=sflag, size = 0x8, scoped, tag = 'scoped memory for tpu_custom_call.1']
    #allocation6 [shape = 'u8[393216]{0}', space=vmem, size = 0x60000, scoped, tag = 'input window, operand 1, single buffered']
    #allocation7 [shape = 's32[1]{0}', space=sflag, size = 0x4, scoped, tag = 'scoped memory for tpu_custom_call.1']
    #allocation8 [shape = 'u8[65536]{0}', space=vmem, size = 0x10000, scoped, tag = 'input window, operand 3, single buffered']
    #allocation9 [shape = 'u8[65536]{0}', space=vmem, size = 0x10000, scoped, tag = 'input window, operand 5, single buffered']
    #allocation10 [shape = 's32[1]{0}', space=sflag, size = 0x4, scoped, tag = 'scoped memory for tpu_custom_call.1']
    #allocation11 [shape = 'u8[65536]{0}', space=vmem, size = 0x10000, scoped, tag = 'input window, operand 7, single buffered']
    #allocation12 [shape = 'u8[65536]{0}', space=vmem, size = 0x10000, scoped, tag = 'input window, operand 9, single buffered']
    #allocation13 [shape = 's32[1]{0}', space=sflag, size = 0x4, scoped, tag = 'scoped memory for tpu_custom_call.1']
    #allocation14 [shape = 'u8[65536]{0}', space=vmem, size = 0x10000, scoped, tag = 'input window, operand 11, single buffered']
    #allocation15 [shape = 'u8[8192]{0}', space=vmem, size = 0x2000, scoped, tag = 'output window, operand 0']
    %22 = vsyncpa [#allocation4], 0
    %s23 = scalar_lea.sflag [#allocation4], 1
    %24 = vsyncpa %s23, 0
    %25 = vsyncpa [#allocation7], 0
    %26 = vsyncpa [#allocation10], 0
    %27 = vsyncpa [#allocation13], 0
    %28 = vsyncpa [#allocation5], 0
    %s29 = scalar_lea.sflag [#allocation5], 1
    %30 = vsyncpa %s29, 0
    loop: start=0, step=1, limit=4
    $region2: #{tpu_custom_call.1} parent=1 // loop_pre_header
      _
    $region3: #{tpu_custom_call.1} parent=1 // loop_header
      %s32 = sphi 0, %s36
      %p33 = scmp.ge.s32.totalorder %s32, 4
      %s42 = sphi 0, %s44
      %s45 = sphi 0, %s42
      %s46 = sphi 0, %s45
      %s62 = sphi 0, %s46
      %s66 = sphi 0, %s66
      %s68 = sphi 0, %s66
      %s69 = sphi 0, %s68
      %s83 = sphi 0, %s69
      %s87 = sphi 0, %s87
      %s89 = sphi 0, %s87
      %s90 = sphi 0, %s89
      %s104 = sphi 0, %s90
      %s108 = sphi 0, %s108
      %s110 = sphi 0, %s108
      %s111 = sphi 0, %s110
      %s125 = sphi 0, %s111
      %s129 = sphi 0, %s129
      %s131 = sphi 0, %s129
      %s132 = sphi 0, %s131
      %s146 = sphi 0, %s132
      %s150 = sphi 0, %s150
      %s152 = sphi 0, %s150
      %s153 = sphi 0, %s152
      %s167 = sphi 0, %s153
      %s171 = sphi 0, %s171
      %s173 = sphi 0, %s171
      %s174 = sphi 0, %s173
      %s188 = sphi 0, %s174
      %s192 = sphi 0, %s192
      %s194 = sphi 0, %s192
      %s195 = sphi 0, %s194
      %s209 = sphi 0, %s195
      %s213 = sphi 0, %s213
      %s215 = sphi 0, %s213
      %s216 = sphi 0, %s215
      %s230 = sphi 0, %s216
      %s234 = sphi 0, %s234
      %s236 = sphi 0, %s234
      %s237 = sphi 0, %s236
      %s251 = sphi 0, %s237
      %s255 = sphi 0, %s255
      %s257 = sphi 0, %s255
      %s258 = sphi 0, %s257
      %s272 = sphi 0, %s258
      %s276 = sphi 0, %s276
      %s278 = sphi 0, %s276
      %s279 = sphi 0, %s278
      %s293 = sphi 0, %s279
      %s297 = sphi 0, %s297
      %s299 = sphi 0, %s297
      %s300 = sphi 0, %s299
      %s314 = sphi 0, %s300
      %s318 = sphi 0, %s318
      %s320 = sphi 0, %s318
      %s321 = sphi 0, %s320
      %s335 = sphi 0, %s321
      %s339 = sphi 0, %s339
      %s341 = sphi 0, %s339
      %s342 = sphi 0, %s341
      %s356 = sphi 0, %s342
      %s362 = sphi 0, %s364
      %s365 = sphi 0, %s362
      %s366 = sphi 0, %s365
      %s382 = sphi 0, %s366
    $region4: #{tpu_custom_call.1} parent=1 // loop_header_branch
      %35 = sbr.rel (%p33) target = $region8
    $region5: #{tpu_custom_call.1} parent=1 // loop_body
      %s37 = ssub.s32 %s32, 1
      %s38 = ssub.s32 %s32, 2
      %s39 = sadd.s32 %s32, 1
      %s40 = ssub.s32 %s32, %s39
      %p41 = scmp.eq.s32.totalorder %s40, 0
      %s43 = sadd.s32 %s42, 1
      %s44 = scalar_select %p41, %s42, %s43
      %p47 = pneg %p41
      %p48 = scmp.eq.s32.totalorder %s32, 1
      %p49 = por %p47, %p48
      %p50 = scmp.ne.s32.totalorder %s42, %s45
      %p51 = scmp.eq.s32.totalorder %s32, 0
      %p52 = por %p50, %p51
      %p53 = scmp.ne.s32.totalorder %s42, %s45
      %p54 = scmp.eq.s32.totalorder %s37, 1
      %p55 = por %p53, %p54
      %p56 = scmp.ne.s32.totalorder %s45, %s46
      %p57 = scmp.eq.s32.totalorder %s37, 0
      %p58 = por %p56, %p57
      %p59 = scmp.ne.s32.totalorder %s45, %s46
      %p60 = scmp.eq.s32.totalorder %s38, 1
      %p61 = por %p59, %p60
      %p63 = scmp.ne.s32.totalorder %s46, %s62
      %p64 = scmp.eq.s32.totalorder %s38, 0
      %p65 = por %p63, %p64
      %s67 = sadd.s32 %s66, 1
      %p70 = scmp.eq.s32.totalorder %s32, 1
      %p71 = scmp.ne.s32.totalorder %s66, %s68
      %p72 = scmp.eq.s32.totalorder %s32, 0
      %p73 = por %p71, %p72
      %p74 = scmp.ne.s32.totalorder %s66, %s68
      %p75 = scmp.eq.s32.totalorder %s37, 1
      %p76 = por %p74, %p75
      %p77 = scmp.ne.s32.totalorder %s68, %s69
      %p78 = scmp.eq.s32.totalorder %s37, 0
      %p79 = por %p77, %p78
      %p80 = scmp.ne.s32.totalorder %s68, %s69
      %p81 = scmp.eq.s32.totalorder %s38, 1
      %p82 = por %p80, %p81
      %p84 = scmp.ne.s32.totalorder %s69, %s83
      %p85 = scmp.eq.s32.totalorder %s38, 0
      %p86 = por %p84, %p85
      %s88 = sadd.s32 %s87, 1
      %p91 = scmp.eq.s32.totalorder %s32, 1
      %p92 = scmp.ne.s32.totalorder %s87, %s89
      %p93 = scmp.eq.s32.totalorder %s32, 0
      %p94 = por %p92, %p93
      %p95 = scmp.ne.s32.totalorder %s87, %s89
      %p96 = scmp.eq.s32.totalorder %s37, 1
      %p97 = por %p95, %p96
      %p98 = scmp.ne.s32.totalorder %s89, %s90
      %p99 = scmp.eq.s32.totalorder %s37, 0
      %p100 = por %p98, %p99
      %p101 = scmp.ne.s32.totalorder %s89, %s90
      %p102 = scmp.eq.s32.totalorder %s38, 1
      %p103 = por %p101, %p102
      %p105 = scmp.ne.s32.totalorder %s90, %s104
      %p106 = scmp.eq.s32.totalorder %s38, 0
      %p107 = por %p105, %p106
      %s109 = sadd.s32 %s108, 1
      %p112 = scmp.eq.s32.totalorder %s32, 1
      %p113 = scmp.ne.s32.totalorder %s108, %s110
      %p114 = scmp.eq.s32.totalorder %s32, 0
      %p115 = por %p113, %p114
      %p116 = scmp.ne.s32.totalorder %s108, %s110
      %p117 = scmp.eq.s32.totalorder %s37, 1
      %p118 = por %p116, %p117
      %p119 = scmp.ne.s32.totalorder %s110, %s111
      %p120 = scmp.eq.s32.totalorder %s37, 0
      %p121 = por %p119, %p120
      %p122 = scmp.ne.s32.totalorder %s110, %s111
      %p123 = scmp.eq.s32.totalorder %s38, 1
      %p124 = por %p122, %p123
      %p126 = scmp.ne.s32.totalorder %s111, %s125
      %p127 = scmp.eq.s32.totalorder %s38, 0
      %p128 = por %p126, %p127
      %s130 = sadd.s32 %s129, 1
      %p133 = scmp.eq.s32.totalorder %s32, 1
      %p134 = scmp.ne.s32.totalorder %s129, %s131
      %p135 = scmp.eq.s32.totalorder %s32, 0
      %p136 = por %p134, %p135
      %p137 = scmp.ne.s32.totalorder %s129, %s131
      %p138 = scmp.eq.s32.totalorder %s37, 1
      %p139 = por %p137, %p138
      %p140 = scmp.ne.s32.totalorder %s131, %s132
      %p141 = scmp.eq.s32.totalorder %s37, 0
      %p142 = por %p140, %p141
      %p143 = scmp.ne.s32.totalorder %s131, %s132
      %p144 = scmp.eq.s32.totalorder %s38, 1
      %p145 = por %p143, %p144
      %p147 = scmp.ne.s32.totalorder %s132, %s146
      %p148 = scmp.eq.s32.totalorder %s38, 0
      %p149 = por %p147, %p148
      %s151 = sadd.s32 %s150, 1
      %p154 = scmp.eq.s32.totalorder %s32, 1
      %p155 = scmp.ne.s32.totalorder %s150, %s152
      %p156 = scmp.eq.s32.totalorder %s32, 0
      %p157 = por %p155, %p156
      %p158 = scmp.ne.s32.totalorder %s150, %s152
      %p159 = scmp.eq.s32.totalorder %s37, 1
      %p160 = por %p158, %p159
      %p161 = scmp.ne.s32.totalorder %s152, %s153
      %p162 = scmp.eq.s32.totalorder %s37, 0
      %p163 = por %p161, %p162
      %p164 = scmp.ne.s32.totalorder %s152, %s153
      %p165 = scmp.eq.s32.totalorder %s38, 1
      %p166 = por %p164, %p165
      %p168 = scmp.ne.s32.totalorder %s153, %s167
      %p169 = scmp.eq.s32.totalorder %s38, 0
      %p170 = por %p168, %p169
      %s172 = sadd.s32 %s171, 1
      %p175 = scmp.eq.s32.totalorder %s32, 1
      %p176 = scmp.ne.s32.totalorder %s171, %s173
      %p177 = scmp.eq.s32.totalorder %s32, 0
      %p178 = por %p176, %p177
      %p179 = scmp.ne.s32.totalorder %s171, %s173
      %p180 = scmp.eq.s32.totalorder %s37, 1
      %p181 = por %p179, %p180
      %p182 = scmp.ne.s32.totalorder %s173, %s174
      %p183 = scmp.eq.s32.totalorder %s37, 0
      %p184 = por %p182, %p183
      %p185 = scmp.ne.s32.totalorder %s173, %s174
      %p186 = scmp.eq.s32.totalorder %s38, 1
      %p187 = por %p185, %p186
      %p189 = scmp.ne.s32.totalorder %s174, %s188
      %p190 = scmp.eq.s32.totalorder %s38, 0
      %p191 = por %p189, %p190
      %s193 = sadd.s32 %s192, 1
      %p196 = scmp.eq.s32.totalorder %s32, 1
      %p197 = scmp.ne.s32.totalorder %s192, %s194
      %p198 = scmp.eq.s32.totalorder %s32, 0
      %p199 = por %p197, %p198
      %p200 = scmp.ne.s32.totalorder %s192, %s194
      %p201 = scmp.eq.s32.totalorder %s37, 1
      %p202 = por %p200, %p201
      %p203 = scmp.ne.s32.totalorder %s194, %s195
      %p204 = scmp.eq.s32.totalorder %s37, 0
      %p205 = por %p203, %p204
      %p206 = scmp.ne.s32.totalorder %s194, %s195
      %p207 = scmp.eq.s32.totalorder %s38, 1
      %p208 = por %p206, %p207
      %p210 = scmp.ne.s32.totalorder %s195, %s209
      %p211 = scmp.eq.s32.totalorder %s38, 0
      %p212 = por %p210, %p211
      %s214 = sadd.s32 %s213, 1
      %p217 = scmp.eq.s32.totalorder %s32, 1
      %p218 = scmp.ne.s32.totalorder %s213, %s215
      %p219 = scmp.eq.s32.totalorder %s32, 0
      %p220 = por %p218, %p219
      %p221 = scmp.ne.s32.totalorder %s213, %s215
      %p222 = scmp.eq.s32.totalorder %s37, 1
      %p223 = por %p221, %p222
      %p224 = scmp.ne.s32.totalorder %s215, %s216
      %p225 = scmp.eq.s32.totalorder %s37, 0
      %p226 = por %p224, %p225
      %p227 = scmp.ne.s32.totalorder %s215, %s216
      %p228 = scmp.eq.s32.totalorder %s38, 1
      %p229 = por %p227, %p228
      %p231 = scmp.ne.s32.totalorder %s216, %s230
      %p232 = scmp.eq.s32.totalorder %s38, 0
      %p233 = por %p231, %p232
      %s235 = sadd.s32 %s234, 1
      %p238 = scmp.eq.s32.totalorder %s32, 1
      %p239 = scmp.ne.s32.totalorder %s234, %s236
      %p240 = scmp.eq.s32.totalorder %s32, 0
      %p241 = por %p239, %p240
      %p242 = scmp.ne.s32.totalorder %s234, %s236
      %p243 = scmp.eq.s32.totalorder %s37, 1
      %p244 = por %p242, %p243
      %p245 = scmp.ne.s32.totalorder %s236, %s237
      %p246 = scmp.eq.s32.totalorder %s37, 0
      %p247 = por %p245, %p246
      %p248 = scmp.ne.s32.totalorder %s236, %s237
      %p249 = scmp.eq.s32.totalorder %s38, 1
      %p250 = por %p248, %p249
      %p252 = scmp.ne.s32.totalorder %s237, %s251
      %p253 = scmp.eq.s32.totalorder %s38, 0
      %p254 = por %p252, %p253
      %s256 = sadd.s32 %s255, 1
      %p259 = scmp.eq.s32.totalorder %s32, 1
      %p260 = scmp.ne.s32.totalorder %s255, %s257
      %p261 = scmp.eq.s32.totalorder %s32, 0
      %p262 = por %p260, %p261
      %p263 = scmp.ne.s32.totalorder %s255, %s257
      %p264 = scmp.eq.s32.totalorder %s37, 1
      %p265 = por %p263, %p264
      %p266 = scmp.ne.s32.totalorder %s257, %s258
      %p267 = scmp.eq.s32.totalorder %s37, 0
      %p268 = por %p266, %p267
      %p269 = scmp.ne.s32.totalorder %s257, %s258
      %p270 = scmp.eq.s32.totalorder %s38, 1
      %p271 = por %p269, %p270
      %p273 = scmp.ne.s32.totalorder %s258, %s272
      %p274 = scmp.eq.s32.totalorder %s38, 0
      %p275 = por %p273, %p274
      %s277 = sadd.s32 %s276, 1
      %p280 = scmp.eq.s32.totalorder %s32, 1
      %p281 = scmp.ne.s32.totalorder %s276, %s278
      %p282 = scmp.eq.s32.totalorder %s32, 0
      %p283 = por %p281, %p282
      %p284 = scmp.ne.s32.totalorder %s276, %s278
      %p285 = scmp.eq.s32.totalorder %s37, 1
      %p286 = por %p284, %p285
      %p287 = scmp.ne.s32.totalorder %s278, %s279
      %p288 = scmp.eq.s32.totalorder %s37, 0
      %p289 = por %p287, %p288
      %p290 = scmp.ne.s32.totalorder %s278, %s279
      %p291 = scmp.eq.s32.totalorder %s38, 1
      %p292 = por %p290, %p291
      %p294 = scmp.ne.s32.totalorder %s279, %s293
      %p295 = scmp.eq.s32.totalorder %s38, 0
      %p296 = por %p294, %p295
      %s298 = sadd.s32 %s297, 1
      %p301 = scmp.eq.s32.totalorder %s32, 1
      %p302 = scmp.ne.s32.totalorder %s297, %s299
      %p303 = scmp.eq.s32.totalorder %s32, 0
      %p304 = por %p302, %p303
      %p305 = scmp.ne.s32.totalorder %s297, %s299
      %p306 = scmp.eq.s32.totalorder %s37, 1
      %p307 = por %p305, %p306
      %p308 = scmp.ne.s32.totalorder %s299, %s300
      %p309 = scmp.eq.s32.totalorder %s37, 0
      %p310 = por %p308, %p309
      %p311 = scmp.ne.s32.totalorder %s299, %s300
      %p312 = scmp.eq.s32.totalorder %s38, 1
      %p313 = por %p311, %p312
      %p315 = scmp.ne.s32.totalorder %s300, %s314
      %p316 = scmp.eq.s32.totalorder %s38, 0
      %p317 = por %p315, %p316
      %s319 = sadd.s32 %s318, 1
      %p322 = scmp.eq.s32.totalorder %s32, 1
      %p323 = scmp.ne.s32.totalorder %s318, %s320
      %p324 = scmp.eq.s32.totalorder %s32, 0
      %p325 = por %p323, %p324
      %p326 = scmp.ne.s32.totalorder %s318, %s320
      %p327 = scmp.eq.s32.totalorder %s37, 1
      %p328 = por %p326, %p327
      %p329 = scmp.ne.s32.totalorder %s320, %s321
      %p330 = scmp.eq.s32.totalorder %s37, 0
      %p331 = por %p329, %p330
      %p332 = scmp.ne.s32.totalorder %s320, %s321
      %p333 = scmp.eq.s32.totalorder %s38, 1
      %p334 = por %p332, %p333
      %p336 = scmp.ne.s32.totalorder %s321, %s335
      %p337 = scmp.eq.s32.totalorder %s38, 0
      %p338 = por %p336, %p337
      %s340 = sadd.s32 %s339, 1
      %p343 = scmp.eq.s32.totalorder %s32, 1
      %p344 = scmp.ne.s32.totalorder %s339, %s341
      %p345 = scmp.eq.s32.totalorder %s32, 0
      %p346 = por %p344, %p345
      %p347 = scmp.ne.s32.totalorder %s339, %s341
      %p348 = scmp.eq.s32.totalorder %s37, 1
      %p349 = por %p347, %p348
      %p350 = scmp.ne.s32.totalorder %s341, %s342
      %p351 = scmp.eq.s32.totalorder %s37, 0
      %p352 = por %p350, %p351
      %p353 = scmp.ne.s32.totalorder %s341, %s342
      %p354 = scmp.eq.s32.totalorder %s38, 1
      %p355 = por %p353, %p354
      %p357 = scmp.ne.s32.totalorder %s342, %s356
      %p358 = scmp.eq.s32.totalorder %s38, 0
      %p359 = por %p357, %p358
      %s360 = ssub.s32 %s32, %s39
      %p361 = scmp.eq.s32.totalorder %s360, 0
      %s363 = sadd.s32 %s362, 1
      %s364 = scalar_select %p361, %s362, %s363
      %p367 = pneg %p361
      %p368 = scmp.eq.s32.totalorder %s32, 1
      %p369 = por %p367, %p368
      %p370 = scmp.ne.s32.totalorder %s362, %s365
      %p371 = scmp.eq.s32.totalorder %s32, 0
      %p372 = por %p370, %p371
      %p373 = scmp.ne.s32.totalorder %s362, %s365
      %p374 = scmp.eq.s32.totalorder %s37, 1
      %p375 = por %p373, %p374
      %p376 = scmp.ne.s32.totalorder %s365, %s366
      %p377 = scmp.eq.s32.totalorder %s37, 0
      %p378 = por %p376, %p377
      %p379 = scmp.ne.s32.totalorder %s365, %s366
      %p380 = scmp.eq.s32.totalorder %s38, 1
      %p381 = por %p379, %p380
      %p383 = scmp.ne.s32.totalorder %s366, %s382
      %p384 = scmp.eq.s32.totalorder %s38, 0
      %p385 = por %p383, %p384
      %p386 = scmp.le.s32.totalorder 1, %s32
      %p387 = scmp.lt.s32.totalorder %s32, 3
      %p388 = pnand %p386, %p387
      %p389 = pneg %p388
      // Predicated region
      $region9: #{tpu_custom_call.1} parent=5 // pred_check
        _
      $region10: #{tpu_custom_call.1} parent=5 // pred_check_branch
        %391 = sbr.rel (%p388) target = $region12
      $region11: #{tpu_custom_call.1} parent=5 // pred_region
        %s392 = ssub.s32 %s32, 1
        // Predicated region
        $region13: #{tpu_custom_call.1} parent=11 // pred_check
          %p393 = pneg %p79
        $region14: #{tpu_custom_call.1} parent=11 // pred_check_branch
          %395 = sbr.rel (%p393) target = $region16
        $region15: #{tpu_custom_call.1} parent=11 // pred_region
          %s397 = ssub.s32 12288, 12288
          %398 = vsyncadd [#allocation7], %s397
          %s399 = sshll.u32 [#allocation6], 4
          %s400 = int_to_ptr.vmem [resolvable:$true] %s399
          %405 = dma.hbm_to_vmem [thread:$0]  %s1, 12288, %s400, [#allocation7], 128, 128, 8
        $region16: #{tpu_custom_call.1} parent=11 // pred_fallthru
          _
        // Predicated region
        $region17: #{tpu_custom_call.1} parent=11 // pred_check
          %p406 = pneg %p100
        $region18: #{tpu_custom_call.1} parent=11 // pred_check_branch
          %408 = sbr.rel (%p406) target = $region20
        $region19: #{tpu_custom_call.1} parent=11 // pred_region
          _
        $region20: #{tpu_custom_call.1} parent=11 // pred_fallthru
          _
        // Predicated region
        $region21: #{tpu_custom_call.1} parent=11 // pred_check
          %p409 = pneg %p121
        $region22: #{tpu_custom_call.1} parent=11 // pred_check_branch
          %411 = sbr.rel (%p409) target = $region24
        $region23: #{tpu_custom_call.1} parent=11 // pred_region
          %s413 = ssub.s32 2048, 2048
          %414 = vsyncadd [#allocation7], %s413
          %s415 = sshll.u32 [#allocation8], 4
          %s416 = int_to_ptr.vmem [resolvable:$true] %s415
          %421 = dma.hbm_to_vmem [thread:$0]  %s3, 2048, %s416, [#allocation7], 128, 128, 8
        $region24: #{tpu_custom_call.1} parent=11 // pred_fallthru
          _
        // Predicated region
        $region25: #{tpu_custom_call.1} parent=11 // pred_check
          %p422 = pneg %p142
        $region26: #{tpu_custom_call.1} parent=11 // pred_check_branch
          %424 = sbr.rel (%p422) target = $region28
        $region27: #{tpu_custom_call.1} parent=11 // pred_region
          _
        $region28: #{tpu_custom_call.1} parent=11 // pred_fallthru
          _
        // Predicated region
        $region29: #{tpu_custom_call.1} parent=11 // pred_check
          %p425 = pneg %p163
        $region30: #{tpu_custom_call.1} parent=11 // pred_check_branch
          %427 = sbr.rel (%p425) target = $region32
        $region31: #{tpu_custom_call.1} parent=11 // pred_region
          %s429 = ssub.s32 2048, 2048
          %430 = vsyncadd [#allocation10], %s429
          %s431 = sshll.u32 [#allocation9], 4
          %s432 = int_to_ptr.vmem [resolvable:$true] %s431
          %437 = dma.hbm_to_vmem [thread:$0]  %s5, 2048, %s432, [#allocation10], 128, 128, 8
        $region32: #{tpu_custom_call.1} parent=11 // pred_fallthru
          _
        // Predicated region
        $region33: #{tpu_custom_call.1} parent=11 // pred_check
          %p438 = pneg %p184
        $region34: #{tpu_custom_call.1} parent=11 // pred_check_branch
          %440 = sbr.rel (%p438) target = $region36
        $region35: #{tpu_custom_call.1} parent=11 // pred_region
          _
        $region36: #{tpu_custom_call.1} parent=11 // pred_fallthru
          _
        // Predicated region
        $region37: #{tpu_custom_call.1} parent=11 // pred_check
          %p441 = pneg %p205
        $region38: #{tpu_custom_call.1} parent=11 // pred_check_branch
          %443 = sbr.rel (%p441) target = $region40
        $region39: #{tpu_custom_call.1} parent=11 // pred_region
          %s445 = ssub.s32 2048, 2048
          %446 = vsyncadd [#allocation10], %s445
          %s447 = sshll.u32 [#allocation11], 4
          %s448 = int_to_ptr.vmem [resolvable:$true] %s447
          %453 = dma.hbm_to_vmem [thread:$0]  %s7, 2048, %s448, [#allocation10], 128, 128, 8
        $region40: #{tpu_custom_call.1} parent=11 // pred_fallthru
          _
        // Predicated region
        $region41: #{tpu_custom_call.1} parent=11 // pred_check
          %p454 = pneg %p226
        $region42: #{tpu_custom_call.1} parent=11 // pred_check_branch
          %456 = sbr.rel (%p454) target = $region44
        $region43: #{tpu_custom_call.1} parent=11 // pred_region
          _
        $region44: #{tpu_custom_call.1} parent=11 // pred_fallthru
          _
        // Predicated region
        $region45: #{tpu_custom_call.1} parent=11 // pred_check
          %p457 = pneg %p247
        $region46: #{tpu_custom_call.1} parent=11 // pred_check_branch
          %459 = sbr.rel (%p457) target = $region48
        $region47: #{tpu_custom_call.1} parent=11 // pred_region
          %s461 = ssub.s32 2048, 2048
          %462 = vsyncadd [#allocation13], %s461
          %s463 = sshll.u32 [#allocation12], 4
          %s464 = int_to_ptr.vmem [resolvable:$true] %s463
          %469 = dma.hbm_to_vmem [thread:$0]  %s9, 2048, %s464, [#allocation13], 128, 128, 8
        $region48: #{tpu_custom_call.1} parent=11 // pred_fallthru
          _
        // Predicated region
        $region49: #{tpu_custom_call.1} parent=11 // pred_check
          %p470 = pneg %p268
        $region50: #{tpu_custom_call.1} parent=11 // pred_check_branch
          %472 = sbr.rel (%p470) target = $region52
        $region51: #{tpu_custom_call.1} parent=11 // pred_region
          _
        $region52: #{tpu_custom_call.1} parent=11 // pred_fallthru
          _
        // Predicated region
        $region53: #{tpu_custom_call.1} parent=11 // pred_check
          %p473 = pneg %p289
        $region54: #{tpu_custom_call.1} parent=11 // pred_check_branch
          %475 = sbr.rel (%p473) target = $region56
        $region55: #{tpu_custom_call.1} parent=11 // pred_region
          %s477 = ssub.s32 2048, 2048
          %478 = vsyncadd [#allocation13], %s477
          %s479 = sshll.u32 [#allocation14], 4
          %s480 = int_to_ptr.vmem [resolvable:$true] %s479
          %485 = dma.hbm_to_vmem [thread:$0]  %s11, 2048, %s480, [#allocation13], 128, 128, 8
        $region56: #{tpu_custom_call.1} parent=11 // pred_fallthru
          _
        // Predicated region
        $region57: #{tpu_custom_call.1} parent=11 // pred_check
          %p486 = pneg %p310
        $region58: #{tpu_custom_call.1} parent=11 // pred_check_branch
          %488 = sbr.rel (%p486) target = $region60
        $region59: #{tpu_custom_call.1} parent=11 // pred_region
          _
        $region60: #{tpu_custom_call.1} parent=11 // pred_fallthru
          _
        // Predicated region
        $region61: #{tpu_custom_call.1} parent=11 // pred_check
          %p489 = pneg %p331
        $region62: #{tpu_custom_call.1} parent=11 // pred_check_branch
          %491 = sbr.rel (%p489) target = $region64
        $region63: #{tpu_custom_call.1} parent=11 // pred_region
          _
        $region64: #{tpu_custom_call.1} parent=11 // pred_fallthru
          _
        // Predicated region
        $region65: #{tpu_custom_call.1} parent=11 // pred_check
          %p492 = pneg %p352
        $region66: #{tpu_custom_call.1} parent=11 // pred_check_branch
          %494 = sbr.rel (%p492) target = $region68
        $region67: #{tpu_custom_call.1} parent=11 // pred_region
          _
        $region68: #{tpu_custom_call.1} parent=11 // pred_fallthru
          _
      $region12: #{tpu_custom_call.1} parent=5 // pred_fallthru
        _
      %p495 = scmp.lt.s32.totalorder %s32, 2
      // Predicated region
      $region69: #{tpu_custom_call.1} parent=5 // pred_check
        %p496 = pneg %p495
      $region70: #{tpu_custom_call.1} parent=5 // pred_check_branch
        %498 = sbr.rel (%p496) target = $region72
      $region71: #{tpu_custom_call.1} parent=5 // pred_region
        // Predicated region
        $region73: #{tpu_custom_call.1} parent=71 // pred_check
          %p499 = pneg %p52
        $region74: #{tpu_custom_call.1} parent=71 // pred_check_branch
          %501 = sbr.rel (%p499) target = $region76
        $region75: #{tpu_custom_call.1} parent=71 // pred_region
          %s502 = sand.u32 %s42, 1
          %s503 = scalar_lea.sflag [#allocation4], %s502
          %s504 = sand.u32 %s42, 1
          %s505 = smul.addr %s504, 48
          %s506 = scalar_lea.vmem [#allocation3], %s505
          %s508 = ssub.s32 768, 768
          %509 = vsyncadd %s503, %s508
          %s510 = smul.addr %s32, 6
          %s511 = smul.addr %s510, 128
          %s512 = scalar_lea.hbm %s0, %s511
          %s514 = sshll.u32 %s506, 4
          %s515 = int_to_ptr.vmem [resolvable:$true] %s514
          %517 = dma.hbm_to_vmem [thread:$0]  %s512, 768, %s515, %s503
        $region76: #{tpu_custom_call.1} parent=71 // pred_fallthru
          _
      $region72: #{tpu_custom_call.1} parent=5 // pred_fallthru
        _
      %p518 = scmp.le.s32.totalorder 1, %s32
      %p519 = scmp.lt.s32.totalorder %s32, 3
      %p520 = pnand %p518, %p519
      %p521 = pneg %p520
      // Predicated region
      $region77: #{tpu_custom_call.1} parent=5 // pred_check
        _
      $region78: #{tpu_custom_call.1} parent=5 // pred_check_branch
        %523 = sbr.rel (%p520) target = $region80
      $region79: #{tpu_custom_call.1} parent=5 // pred_region
        %s524 = ssub.s32 %s32, 1
        %s525 = sand.u32 %s45, 1
        %s526 = scalar_lea.sflag [#allocation4], %s525
        %s527 = sand.u32 %s45, 1
        %s528 = smul.addr %s527, 48
        %s529 = scalar_lea.vmem [#allocation3], %s528
        // Predicated region
        $region81: #{tpu_custom_call.1} parent=79 // pred_check
          %p530 = pneg %p58
        $region82: #{tpu_custom_call.1} parent=79 // pred_check_branch
          %532 = sbr.rel (%p530) target = $region84
        $region83: #{tpu_custom_call.1} parent=79 // pred_region
          %533 = dma.done %s526, 768
        $region84: #{tpu_custom_call.1} parent=79 // pred_fallthru
          _
        // Predicated region
        $region85: #{tpu_custom_call.1} parent=79 // pred_check
          %p534 = pneg %p79
        $region86: #{tpu_custom_call.1} parent=79 // pred_check_branch
          %536 = sbr.rel (%p534) target = $region88
        $region87: #{tpu_custom_call.1} parent=79 // pred_region
          %537 = dma.done [#allocation7], 12288
        $region88: #{tpu_custom_call.1} parent=79 // pred_fallthru
          _
        // Predicated region
        $region89: #{tpu_custom_call.1} parent=79 // pred_check
          %p538 = pneg %p121
        $region90: #{tpu_custom_call.1} parent=79 // pred_check_branch
          %540 = sbr.rel (%p538) target = $region92
        $region91: #{tpu_custom_call.1} parent=79 // pred_region
          %541 = dma.done [#allocation7], 2048
        $region92: #{tpu_custom_call.1} parent=79 // pred_fallthru
          _
        // Predicated region
        $region93: #{tpu_custom_call.1} parent=79 // pred_check
          %p542 = pneg %p163
        $region94: #{tpu_custom_call.1} parent=79 // pred_check_branch
          %544 = sbr.rel (%p542) target = $region96
        $region95: #{tpu_custom_call.1} parent=79 // pred_region
          %545 = dma.done [#allocation10], 2048
        $region96: #{tpu_custom_call.1} parent=79 // pred_fallthru
          _
        // Predicated region
        $region97: #{tpu_custom_call.1} parent=79 // pred_check
          %p546 = pneg %p205
        $region98: #{tpu_custom_call.1} parent=79 // pred_check_branch
          %548 = sbr.rel (%p546) target = $region100
        $region99: #{tpu_custom_call.1} parent=79 // pred_region
          %549 = dma.done [#allocation10], 2048
        $region100: #{tpu_custom_call.1} parent=79 // pred_fallthru
          _
        // Predicated region
        $region101: #{tpu_custom_call.1} parent=79 // pred_check
          %p550 = pneg %p247
        $region102: #{tpu_custom_call.1} parent=79 // pred_check_branch
          %552 = sbr.rel (%p550) target = $region104
        $region103: #{tpu_custom_call.1} parent=79 // pred_region
          %553 = dma.done [#allocation13], 2048
        $region104: #{tpu_custom_call.1} parent=79 // pred_fallthru
          _
        // Predicated region
        $region105: #{tpu_custom_call.1} parent=79 // pred_check
          %p554 = pneg %p289
        $region106: #{tpu_custom_call.1} parent=79 // pred_check_branch
          %556 = sbr.rel (%p554) target = $region108
        $region107: #{tpu_custom_call.1} parent=79 // pred_region
          %557 = dma.done [#allocation13], 2048
        $region108: #{tpu_custom_call.1} parent=79 // pred_fallthru
          _
        %s558 = sand.u32 %s45, 1
        %s559 = scalar_lea.sflag [#allocation4], %s558
        %s560 = sand.u32 %s45, 1
        %s561 = smul.addr %s560, 48
        %s562 = scalar_lea.vmem [#allocation3], %s561
        %p563 = pneg %p58
        %p564 = pneg %p55
        %p565 = pneg %p79
        %p566 = pneg %p76
        %p567 = pneg %p100
        %p568 = pneg %p97
        %p569 = pneg %p121
        %p570 = pneg %p118
        %p571 = pneg %p142
        %p572 = pneg %p139
        %p573 = pneg %p163
        %p574 = pneg %p160
        %p575 = pneg %p184
        %p576 = pneg %p181
        %p577 = pneg %p205
        %p578 = pneg %p202
        %p579 = pneg %p226
        %p580 = pneg %p223
        %p581 = pneg %p247
        %p582 = pneg %p244
        %p583 = pneg %p268
        %p584 = pneg %p265
        %p585 = pneg %p289
        %p586 = pneg %p286
        %p587 = pneg %p310
        %p588 = pneg %p307
        %p589 = pneg %p331
        %p590 = pneg %p328
        %p591 = pneg %p352
        %p592 = pneg %p349
        %p593 = pneg %p378
        %p594 = pneg %p375
        %s595 = sand.u32 %s365, 1
        %s596 = scalar_lea.sflag [#allocation5], %s595
        %s597 = sand.u32 %s365, 1
        %s598 = smul.addr %s597, 8
        %s599 = scalar_lea.vmem [#allocation15], %s598
        %v600 = vld [vmem:[%s529] sm:$0xff]
        %v601 = vld [vmem:[%s529 + $0x8] sm:$0xff]
        %v602 = vld [vmem:[%s529 + $0x10] sm:$0xff]
        %v603 = vld [vmem:[%s529 + $0x18] sm:$0xff]
        %v604 = vld [vmem:[%s529 + $0x20] sm:$0xff]
        %v605 = vld [vmem:[%s529 + $0x28] sm:$0xff]
        %v606 = vld [vmem:[#allocation6] sm:$0xff]
        %v607 = vld [vmem:[#allocation6 + $0x8] sm:$0xff]
        %v608 = vld [vmem:[#allocation6 + $0x10] sm:$0xff]
        %v609 = vld [vmem:[#allocation6 + $0x18] sm:$0xff]
        %v610 = vld [vmem:[#allocation6 + $0x20] sm:$0xff]
        %v611 = vld [vmem:[#allocation6 + $0x28] sm:$0xff]
        %v612 = vld [vmem:[#allocation6 + $0x30] sm:$0xff]
        %v613 = vld [vmem:[#allocation6 + $0x38] sm:$0xff]
        %v614 = vld [vmem:[#allocation6 + $0x40] sm:$0xff]
        %v615 = vld [vmem:[#allocation6 + $0x48] sm:$0xff]
        %v616 = vld [vmem:[#allocation6 + $0x50] sm:$0xff]
        %v617 = vld [vmem:[#allocation6 + $0x58] sm:$0xff]
        %v618 = vld [vmem:[#allocation6 + $0x60] sm:$0xff]
        %v619 = vld [vmem:[#allocation6 + $0x68] sm:$0xff]
        %v620 = vld [vmem:[#allocation6 + $0x70] sm:$0xff]
        %v621 = vld [vmem:[#allocation6 + $0x78] sm:$0xff]
        %v622 = vld [vmem:[#allocation6 + $0x80] sm:$0xff]
        %v623 = vld [vmem:[#allocation6 + $0x88] sm:$0xff]
        %v624 = vld [vmem:[#allocation6 + $0x90] sm:$0xff]
        %v625 = vld [vmem:[#allocation6 + $0x98] sm:$0xff]
        %v626 = vld [vmem:[#allocation6 + $0xa0] sm:$0xff]
        %v627 = vld [vmem:[#allocation6 + $0xa8] sm:$0xff]
        %v628 = vld [vmem:[#allocation6 + $0xb0] sm:$0xff]
        %v629 = vld [vmem:[#allocation6 + $0xb8] sm:$0xff]
        %v630 = vld [vmem:[#allocation6 + $0xc0] sm:$0xff]
        %v631 = vld [vmem:[#allocation6 + $0xc8] sm:$0xff]
        %v632 = vld [vmem:[#allocation6 + $0xd0] sm:$0xff]
        %v633 = vld [vmem:[#allocation6 + $0xd8] sm:$0xff]
        %v634 = vld [vmem:[#allocation6 + $0xe0] sm:$0xff]
        %v635 = vld [vmem:[#allocation6 + $0xe8] sm:$0xff]
        %v636 = vld [vmem:[#allocation6 + $0xf0] sm:$0xff]
        %v637 = vld [vmem:[#allocation6 + $0xf8] sm:$0xff]
        %v638 = vld [vmem:[#allocation6 + $0x100] sm:$0xff]
        %v639 = vld [vmem:[#allocation6 + $0x108] sm:$0xff]
        %v640 = vld [vmem:[#allocation6 + $0x110] sm:$0xff]
        %v641 = vld [vmem:[#allocation6 + $0x118] sm:$0xff]
        %v642 = vld [vmem:[#allocation6 + $0x120] sm:$0xff]
        %v643 = vld [vmem:[#allocation6 + $0x128] sm:$0xff]
        %v644 = vld [vmem:[#allocation6 + $0x130] sm:$0xff]
        %v645 = vld [vmem:[#allocation6 + $0x138] sm:$0xff]
        %v646 = vld [vmem:[#allocation6 + $0x140] sm:$0xff]
        %v647 = vld [vmem:[#allocation6 + $0x148] sm:$0xff]
        %v648 = vld [vmem:[#allocation6 + $0x150] sm:$0xff]
        %v649 = vld [vmem:[#allocation6 + $0x158] sm:$0xff]
        %v650 = vld [vmem:[#allocation6 + $0x160] sm:$0xff]
        %v651 = vld [vmem:[#allocation6 + $0x168] sm:$0xff]
        %v652 = vld [vmem:[#allocation6 + $0x170] sm:$0xff]
        %v653 = vld [vmem:[#allocation6 + $0x178] sm:$0xff]
        %v654 = vld [vmem:[#allocation6 + $0x180] sm:$0xff]
        %v655 = vld [vmem:[#allocation6 + $0x188] sm:$0xff]
        %v656 = vld [vmem:[#allocation6 + $0x190] sm:$0xff]
        %v657 = vld [vmem:[#allocation6 + $0x198] sm:$0xff]
        %v658 = vld [vmem:[#allocation6 + $0x1a0] sm:$0xff]
        %v659 = vld [vmem:[#allocation6 + $0x1a8] sm:$0xff]
        %v660 = vld [vmem:[#allocation6 + $0x1b0] sm:$0xff]
        %v661 = vld [vmem:[#allocation6 + $0x1b8] sm:$0xff]
        %v662 = vld [vmem:[#allocation6 + $0x1c0] sm:$0xff]
        %v663 = vld [vmem:[#allocation6 + $0x1c8] sm:$0xff]
        %v664 = vld [vmem:[#allocation6 + $0x1d0] sm:$0xff]
        %v665 = vld [vmem:[#allocation6 + $0x1d8] sm:$0xff]
        %v666 = vld [vmem:[#allocation6 + $0x1e0] sm:$0xff]
        %v667 = vld [vmem:[#allocation6 + $0x1e8] sm:$0xff]
        %v668 = vld [vmem:[#allocation6 + $0x1f0] sm:$0xff]
        %v669 = vld [vmem:[#allocation6 + $0x1f8] sm:$0xff]
        %v670 = vld [vmem:[#allocation6 + $0x200] sm:$0xff]
        %v671 = vld [vmem:[#allocation6 + $0x208] sm:$0xff]
        %v672 = vld [vmem:[#allocation6 + $0x210] sm:$0xff]
        %v673 = vld [vmem:[#allocation6 + $0x218] sm:$0xff]
        %v674 = vld [vmem:[#allocation6 + $0x220] sm:$0xff]
        %v675 = vld [vmem:[#allocation6 + $0x228] sm:$0xff]
        %v676 = vld [vmem:[#allocation6 + $0x230] sm:$0xff]
        %v677 = vld [vmem:[#allocation6 + $0x238] sm:$0xff]
        %v678 = vld [vmem:[#allocation6 + $0x240] sm:$0xff]
        %v679 = vld [vmem:[#allocation6 + $0x248] sm:$0xff]
        %v680 = vld [vmem:[#allocation6 + $0x250] sm:$0xff]
        %v681 = vld [vmem:[#allocation6 + $0x258] sm:$0xff]
        %v682 = vld [vmem:[#allocation6 + $0x260] sm:$0xff]
        %v683 = vld [vmem:[#allocation6 + $0x268] sm:$0xff]
        %v684 = vld [vmem:[#allocation6 + $0x270] sm:$0xff]
        %v685 = vld [vmem:[#allocation6 + $0x278] sm:$0xff]
        %v686 = vld [vmem:[#allocation6 + $0x280] sm:$0xff]
        %v687 = vld [vmem:[#allocation6 + $0x288] sm:$0xff]
        %v688 = vld [vmem:[#allocation6 + $0x290] sm:$0xff]
        %v689 = vld [vmem:[#allocation6 + $0x298] sm:$0xff]
        %v690 = vld [vmem:[#allocation6 + $0x2a0] sm:$0xff]
        %v691 = vld [vmem:[#allocation6 + $0x2a8] sm:$0xff]
        %v692 = vld [vmem:[#allocation6 + $0x2b0] sm:$0xff]
        %v693 = vld [vmem:[#allocation6 + $0x2b8] sm:$0xff]
        %v694 = vld [vmem:[#allocation6 + $0x2c0] sm:$0xff]
        %v695 = vld [vmem:[#allocation6 + $0x2c8] sm:$0xff]
        %v696 = vld [vmem:[#allocation6 + $0x2d0] sm:$0xff]
        %v697 = vld [vmem:[#allocation6 + $0x2d8] sm:$0xff]
        %v698 = vld [vmem:[#allocation6 + $0x2e0] sm:$0xff]
        %v699 = vld [vmem:[#allocation6 + $0x2e8] sm:$0xff]
        %v700 = vld [vmem:[#allocation6 + $0x2f0] sm:$0xff]
        %v701 = vld [vmem:[#allocation6 + $0x2f8] sm:$0xff]
        %v702 = vld [vmem:[%s2] sm:$0x1]
        %v704 = vlaneseq
        %v705 = vshrl.u32 %v704, 7
        %v706 = vsub.s32 0, %v705
        %v707 = vrot.slane %v702, %v706
        %709 = vmatprep.subr.mxu0 0.0
        %710 = vmatpush1.msra.mxu0 %v606
        %711 = vmatprep.subr.mxu0 0.0
        %712 = vmatpush1.msra.mxu0 %v607
        %713 = vmatprep.subr.mxu0 0.0
        %714 = vmatpush1.msra.mxu0 %v608
        %715 = vmatprep.subr.mxu0 0.0
        %716 = vmatpush1.msra.mxu0 %v609
        %717 = vmatprep.subr.mxu0 0.0
        %718 = vmatpush1.msra.mxu0 %v610
        %719 = vmatprep.subr.mxu0 0.0
        %720 = vmatpush1.msra.mxu0 %v611
        %721 = vmatprep.subr.mxu0 0.0
        %722 = vmatpush1.msra.mxu0 %v612
        %723 = vmatprep.subr.mxu0 0.0
        %724 = vmatpush1.msra.mxu0 %v613
        %725 = vmatprep.subr.mxu0 0.0
        %726 = vmatpush1.msra.mxu0 %v614
        %727 = vmatprep.subr.mxu0 0.0
        %728 = vmatpush1.msra.mxu0 %v615
        %729 = vmatprep.subr.mxu0 0.0
        %730 = vmatpush1.msra.mxu0 %v616
        %731 = vmatprep.subr.mxu0 0.0
        %732 = vmatpush1.msra.mxu0 %v617
        %733 = vmatprep.subr.mxu0 0.0
        %734 = vmatpush1.msra.mxu0 %v618
        %735 = vmatprep.subr.mxu0 0.0
        %736 = vmatpush1.msra.mxu0 %v619
        %737 = vmatprep.subr.mxu0 0.0
        %738 = vmatpush1.msra.mxu0 %v620
        %739 = vmatprep.subr.mxu0 0.0
        %740 = vmatpush1.msra.mxu0 %v621
        %741 = vmatprep.subr.mxu0 0.0
        %742 = vmatpush1.msra.mxu0 %v622
        %743 = vmatprep.subr.mxu0 0.0
        %744 = vmatpush1.msra.mxu0 %v623
        %745 = vmatprep.subr.mxu0 0.0
        %746 = vmatpush1.msra.mxu0 %v624
        %747 = vmatprep.subr.mxu0 0.0
        %748 = vmatpush1.msra.mxu0 %v625
        %749 = vmatprep.subr.mxu0 0.0
        %750 = vmatpush1.msra.mxu0 %v626
        %751 = vmatprep.subr.mxu0 0.0
        %752 = vmatpush1.msra.mxu0 %v627
        %753 = vmatprep.subr.mxu0 0.0
        %754 = vmatpush1.msra.mxu0 %v628
        %755 = vmatprep.subr.mxu0 0.0
        %756 = vmatpush1.msra.mxu0 %v629
        %757 = vmatprep.subr.mxu0 0.0
        %758 = vmatpush1.msra.mxu0 %v630
        %759 = vmatprep.subr.mxu0 0.0
        %760 = vmatpush1.msra.mxu0 %v631
        %761 = vmatprep.subr.mxu0 0.0
        %762 = vmatpush1.msra.mxu0 %v632
        %763 = vmatprep.subr.mxu0 0.0
        %764 = vmatpush1.msra.mxu0 %v633
        %765 = vmatprep.subr.mxu0 0.0
        %766 = vmatpush1.msra.mxu0 %v634
        %767 = vmatprep.subr.mxu0 0.0
        %768 = vmatpush1.msra.mxu0 %v635
        %769 = vmatprep.subr.mxu0 0.0
        %770 = vmatpush1.msra.mxu0 %v636
        %771 = vmatprep.subr.mxu0 0.0
        %772 = vmatpush1.msra.mxu0 %v637
        %773 = vmatprep.mubr.f32.mxu0 %v601
        %774 = vmatmul.mubr.f32.gmra.mrb[0].mxu0 %v600
        %v775 = vpop.f32.mrb[0].mxu0
        %v776 = vadd.f32 %v707, %v775
        %v777 = vpop.f32.mrb[0].mxu0
        %778 = vdwg.mxu0
        %779 = vmatprep.subr.mxu0 0.0
        %780 = vmatpush1.msra.mxu0 %v638
        %781 = vmatprep.subr.mxu0 0.0
        %782 = vmatpush1.msra.mxu0 %v639
        %783 = vmatprep.subr.mxu0 0.0
        %784 = vmatpush1.msra.mxu0 %v640
        %785 = vmatprep.subr.mxu0 0.0
        %786 = vmatpush1.msra.mxu0 %v641
        %787 = vmatprep.subr.mxu0 0.0
        %788 = vmatpush1.msra.mxu0 %v642
        %789 = vmatprep.subr.mxu0 0.0
        %790 = vmatpush1.msra.mxu0 %v643
        %791 = vmatprep.subr.mxu0 0.0
        %792 = vmatpush1.msra.mxu0 %v644
        %793 = vmatprep.subr.mxu0 0.0
        %794 = vmatpush1.msra.mxu0 %v645
        %795 = vmatprep.subr.mxu0 0.0
        %796 = vmatpush1.msra.mxu0 %v646
        %797 = vmatprep.subr.mxu0 0.0
        %798 = vmatpush1.msra.mxu0 %v647
        %799 = vmatprep.subr.mxu0 0.0
        %800 = vmatpush1.msra.mxu0 %v648
        %801 = vmatprep.subr.mxu0 0.0
        %802 = vmatpush1.msra.mxu0 %v649
        %803 = vmatprep.subr.mxu0 0.0
        %804 = vmatpush1.msra.mxu0 %v650
        %805 = vmatprep.subr.mxu0 0.0
        %806 = vmatpush1.msra.mxu0 %v651
        %807 = vmatprep.subr.mxu0 0.0
        %808 = vmatpush1.msra.mxu0 %v652
        %809 = vmatprep.subr.mxu0 0.0
        %810 = vmatpush1.msra.mxu0 %v653
        %811 = vmatprep.subr.mxu0 0.0
        %812 = vmatpush1.msra.mxu0 %v654
        %813 = vmatprep.subr.mxu0 0.0
        %814 = vmatpush1.msra.mxu0 %v655
        %815 = vmatprep.subr.mxu0 0.0
        %816 = vmatpush1.msra.mxu0 %v656
        %817 = vmatprep.subr.mxu0 0.0
        %818 = vmatpush1.msra.mxu0 %v657
        %819 = vmatprep.subr.mxu0 0.0
        %820 = vmatpush1.msra.mxu0 %v658
        %821 = vmatprep.subr.mxu0 0.0
        %822 = vmatpush1.msra.mxu0 %v659
        %823 = vmatprep.subr.mxu0 0.0
        %824 = vmatpush1.msra.mxu0 %v660
        %825 = vmatprep.subr.mxu0 0.0
        %826 = vmatpush1.msra.mxu0 %v661
        %827 = vmatprep.subr.mxu0 0.0
        %828 = vmatpush1.msra.mxu0 %v662
        %829 = vmatprep.subr.mxu0 0.0
        %830 = vmatpush1.msra.mxu0 %v663
        %831 = vmatprep.subr.mxu0 0.0
        %832 = vmatpush1.msra.mxu0 %v664
        %833 = vmatprep.subr.mxu0 0.0
        %834 = vmatpush1.msra.mxu0 %v665
        %835 = vmatprep.subr.mxu0 0.0
        %836 = vmatpush1.msra.mxu0 %v666
        %837 = vmatprep.subr.mxu0 0.0
        %838 = vmatpush1.msra.mxu0 %v667
        %839 = vmatprep.subr.mxu0 0.0
        %840 = vmatpush1.msra.mxu0 %v668
        %841 = vmatprep.subr.mxu0 0.0
        %842 = vmatpush1.msra.mxu0 %v669
        %843 = vmatprep.mubr.f32.mxu0 %v603
        %844 = vmatmul.mubr.f32.gmra.mrb[0].mxu0 %v602
        %v845 = vpop.f32.mrb[0].mxu0
        %v846 = vadd.f32 %v776, %v845
        %v847 = vpop.f32.mrb[0].mxu0
        %848 = vdwg.mxu0
        %849 = vmatprep.subr.mxu0 0.0
        %850 = vmatpush1.msra.mxu0 %v670
        %851 = vmatprep.subr.mxu0 0.0
        %852 = vmatpush1.msra.mxu0 %v671
        %853 = vmatprep.subr.mxu0 0.0
        %854 = vmatpush1.msra.mxu0 %v672
        %855 = vmatprep.subr.mxu0 0.0
        %856 = vmatpush1.msra.mxu0 %v673
        %857 = vmatprep.subr.mxu0 0.0
        %858 = vmatpush1.msra.mxu0 %v674
        %859 = vmatprep.subr.mxu0 0.0
        %860 = vmatpush1.msra.mxu0 %v675
        %861 = vmatprep.subr.mxu0 0.0
        %862 = vmatpush1.msra.mxu0 %v676
        %863 = vmatprep.subr.mxu0 0.0
        %864 = vmatpush1.msra.mxu0 %v677
        %865 = vmatprep.subr.mxu0 0.0
        %866 = vmatpush1.msra.mxu0 %v678
        %867 = vmatprep.subr.mxu0 0.0
        %868 = vmatpush1.msra.mxu0 %v679
        %869 = vmatprep.subr.mxu0 0.0
        %870 = vmatpush1.msra.mxu0 %v680
        %871 = vmatprep.subr.mxu0 0.0
        %872 = vmatpush1.msra.mxu0 %v681
        %873 = vmatprep.subr.mxu0 0.0
        %874 = vmatpush1.msra.mxu0 %v682
        %875 = vmatprep.subr.mxu0 0.0
        %876 = vmatpush1.msra.mxu0 %v683
        %877 = vmatprep.subr.mxu0 0.0
        %878 = vmatpush1.msra.mxu0 %v684
        %879 = vmatprep.subr.mxu0 0.0
        %880 = vmatpush1.msra.mxu0 %v685
        %881 = vmatprep.subr.mxu0 0.0
        %882 = vmatpush1.msra.mxu0 %v686
        %883 = vmatprep.subr.mxu0 0.0
        %884 = vmatpush1.msra.mxu0 %v687
        %885 = vmatprep.subr.mxu0 0.0
        %886 = vmatpush1.msra.mxu0 %v688
        %887 = vmatprep.subr.mxu0 0.0
        %888 = vmatpush1.msra.mxu0 %v689
        %889 = vmatprep.subr.mxu0 0.0
        %890 = vmatpush1.msra.mxu0 %v690
        %891 = vmatprep.subr.mxu0 0.0
        %892 = vmatpush1.msra.mxu0 %v691
        %893 = vmatprep.subr.mxu0 0.0
        %894 = vmatpush1.msra.mxu0 %v692
        %895 = vmatprep.subr.mxu0 0.0
        %896 = vmatpush1.msra.mxu0 %v693
        %897 = vmatprep.subr.mxu0 0.0
        %898 = vmatpush1.msra.mxu0 %v694
        %899 = vmatprep.subr.mxu0 0.0
        %900 = vmatpush1.msra.mxu0 %v695
        %901 = vmatprep.subr.mxu0 0.0
        %902 = vmatpush1.msra.mxu0 %v696
        %903 = vmatprep.subr.mxu0 0.0
        %904 = vmatpush1.msra.mxu0 %v697
        %905 = vmatprep.subr.mxu0 0.0
        %906 = vmatpush1.msra.mxu0 %v698
        %907 = vmatprep.subr.mxu0 0.0
        %908 = vmatpush1.msra.mxu0 %v699
        %909 = vmatprep.subr.mxu0 0.0
        %910 = vmatpush1.msra.mxu0 %v700
        %911 = vmatprep.subr.mxu0 0.0
        %912 = vmatpush1.msra.mxu0 %v701
        %913 = vmatprep.mubr.f32.mxu0 %v605
        %914 = vmatmul.mubr.f32.gmra.mrb[0].mxu0 %v604
        %v915 = vpop.f32.mrb[0].mxu0
        %v916 = vadd.f32 %v846, %v915
        %v917 = vpop.f32.mrb[0].mxu0
        %918 = vdwg.mxu0
        %v919 = vmax.f32 %v916, 0.0
        %v920 = vld [vmem:[#allocation8] sm:$0xff]
        %v921 = vld [vmem:[#allocation8 + $0x8] sm:$0xff]
        %v922 = vld [vmem:[#allocation8 + $0x10] sm:$0xff]
        %v923 = vld [vmem:[#allocation8 + $0x18] sm:$0xff]
        %v924 = vld [vmem:[#allocation8 + $0x20] sm:$0xff]
        %v925 = vld [vmem:[#allocation8 + $0x28] sm:$0xff]
        %v926 = vld [vmem:[#allocation8 + $0x30] sm:$0xff]
        %v927 = vld [vmem:[#allocation8 + $0x38] sm:$0xff]
        %v928 = vld [vmem:[#allocation8 + $0x40] sm:$0xff]
        %v929 = vld [vmem:[#allocation8 + $0x48] sm:$0xff]
        %v930 = vld [vmem:[#allocation8 + $0x50] sm:$0xff]
        %v931 = vld [vmem:[#allocation8 + $0x58] sm:$0xff]
        %v932 = vld [vmem:[#allocation8 + $0x60] sm:$0xff]
        %v933 = vld [vmem:[#allocation8 + $0x68] sm:$0xff]
        %v934 = vld [vmem:[#allocation8 + $0x70] sm:$0xff]
        %v935 = vld [vmem:[#allocation8 + $0x78] sm:$0xff]
        %v936 = vld [vmem:[%s4] sm:$0x1]
        %v938 = vlaneseq
        %v939 = vshrl.u32 %v938, 7
        %v940 = vsub.s32 0, %v939
        %v941 = vrot.slane %v936, %v940
        %943 = vmatprep.subr.mxu0 0.0
        %944 = vmatpush1.msra.mxu0 %v920
        %945 = vmatprep.subr.mxu0 0.0
        %946 = vmatpush1.msra.mxu0 %v921
        %947 = vmatprep.subr.mxu0 0.0
        %948 = vmatpush1.msra.mxu0 %v922
        %949 = vmatprep.subr.mxu0 0.0
        %950 = vmatpush1.msra.mxu0 %v923
        %951 = vmatprep.subr.mxu0 0.0
        %952 = vmatpush1.msra.mxu0 %v924
        %953 = vmatprep.subr.mxu0 0.0
        %954 = vmatpush1.msra.mxu0 %v925
        %955 = vmatprep.subr.mxu0 0.0
        %956 = vmatpush1.msra.mxu0 %v926
        %957 = vmatprep.subr.mxu0 0.0
        %958 = vmatpush1.msra.mxu0 %v927
        %959 = vmatprep.subr.mxu0 0.0
        %960 = vmatpush1.msra.mxu0 %v928
        %961 = vmatprep.subr.mxu0 0.0
        %962 = vmatpush1.msra.mxu0 %v929
        %963 = vmatprep.subr.mxu0 0.0
        %964 = vmatpush1.msra.mxu0 %v930
        %965 = vmatprep.subr.mxu0 0.0
        %966 = vmatpush1.msra.mxu0 %v931
        %967 = vmatprep.subr.mxu0 0.0
        %968 = vmatpush1.msra.mxu0 %v932
        %969 = vmatprep.subr.mxu0 0.0
        %970 = vmatpush1.msra.mxu0 %v933
        %971 = vmatprep.subr.mxu0 0.0
        %972 = vmatpush1.msra.mxu0 %v934
        %973 = vmatprep.subr.mxu0 0.0
        %974 = vmatpush1.msra.mxu0 %v935
        %975 = vmatprep.subr.mxu0 0.0
        %976 = vmatpush1.msra.mxu0 0.0
        %977 = vmatprep.subr.mxu0 0.0
        %978 = vmatpush1.msra.mxu0 0.0
        %979 = vmatprep.subr.mxu0 0.0
        %980 = vmatpush1.msra.mxu0 0.0
        %981 = vmatprep.subr.mxu0 0.0
        %982 = vmatpush1.msra.mxu0 0.0
        %983 = vmatprep.subr.mxu0 0.0
        %984 = vmatpush1.msra.mxu0 0.0
        %985 = vmatprep.subr.mxu0 0.0
        %986 = vmatpush1.msra.mxu0 0.0
        %987 = vmatprep.subr.mxu0 0.0
        %988 = vmatpush1.msra.mxu0 0.0
        %989 = vmatprep.subr.mxu0 0.0
        %990 = vmatpush1.msra.mxu0 0.0
        %991 = vmatprep.subr.mxu0 0.0
        %992 = vmatpush1.msra.mxu0 0.0
        %993 = vmatprep.subr.mxu0 0.0
        %994 = vmatpush1.msra.mxu0 0.0
        %995 = vmatprep.subr.mxu0 0.0
        %996 = vmatpush1.msra.mxu0 0.0
        %997 = vmatprep.subr.mxu0 0.0
        %998 = vmatpush1.msra.mxu0 0.0
        %999 = vmatprep.subr.mxu0 0.0
        %1000 = vmatpush1.msra.mxu0 0.0
        %1001 = vmatprep.subr.mxu0 0.0
        %1002 = vmatpush1.msra.mxu0 0.0
        %1003 = vmatprep.subr.mxu0 0.0
        %1004 = vmatpush1.msra.mxu0 0.0
        %1005 = vmatprep.subr.mxu0 0.0
        %1006 = vmatpush1.msra.mxu0 0.0
        %1007 = vmatprep.mubr.f32.mxu0 0.0
        %1008 = vmatmul.mubr.f32.gmra.mrb[0].mxu0 %v919
        %v1009 = vpop.f32.mrb[0].mxu0
        %v1010 = vadd.f32 %v941, %v1009
        %v1011 = vpop.f32.mrb[0].mxu0
        %1012 = vdwg.mxu0
        %v1013 = vmax.f32 %v1010, 0.0
        %v1014 = vld [vmem:[#allocation9] sm:$0xff]
        %v1015 = vld [vmem:[#allocation9 + $0x8] sm:$0xff]
        %v1016 = vld [vmem:[#allocation9 + $0x10] sm:$0xff]
        %v1017 = vld [vmem:[#allocation9 + $0x18] sm:$0xff]
        %v1018 = vld [vmem:[#allocation9 + $0x20] sm:$0xff]
        %v1019 = vld [vmem:[#allocation9 + $0x28] sm:$0xff]
        %v1020 = vld [vmem:[#allocation9 + $0x30] sm:$0xff]
        %v1021 = vld [vmem:[#allocation9 + $0x38] sm:$0xff]
        %v1022 = vld [vmem:[#allocation9 + $0x40] sm:$0xff]
        %v1023 = vld [vmem:[#allocation9 + $0x48] sm:$0xff]
        %v1024 = vld [vmem:[#allocation9 + $0x50] sm:$0xff]
        %v1025 = vld [vmem:[#allocation9 + $0x58] sm:$0xff]
        %v1026 = vld [vmem:[#allocation9 + $0x60] sm:$0xff]
        %v1027 = vld [vmem:[#allocation9 + $0x68] sm:$0xff]
        %v1028 = vld [vmem:[#allocation9 + $0x70] sm:$0xff]
        %v1029 = vld [vmem:[#allocation9 + $0x78] sm:$0xff]
        %v1030 = vld [vmem:[%s6] sm:$0x1]
        %v1032 = vlaneseq
        %v1033 = vshrl.u32 %v1032, 7
        %v1034 = vsub.s32 0, %v1033
        %v1035 = vrot.slane %v1030, %v1034
        %1037 = vmatprep.subr.mxu0 0.0
        %1038 = vmatpush1.msra.mxu0 %v1014
        %1039 = vmatprep.subr.mxu0 0.0
        %1040 = vmatpush1.msra.mxu0 %v1015
        %1041 = vmatprep.subr.mxu0 0.0
        %1042 = vmatpush1.msra.mxu0 %v1016
        %1043 = vmatprep.subr.mxu0 0.0
        %1044 = vmatpush1.msra.mxu0 %v1017
        %1045 = vmatprep.subr.mxu0 0.0
        %1046 = vmatpush1.msra.mxu0 %v1018
        %1047 = vmatprep.subr.mxu0 0.0
        %1048 = vmatpush1.msra.mxu0 %v1019
        %1049 = vmatprep.subr.mxu0 0.0
        %1050 = vmatpush1.msra.mxu0 %v1020
        %1051 = vmatprep.subr.mxu0 0.0
        %1052 = vmatpush1.msra.mxu0 %v1021
        %1053 = vmatprep.subr.mxu0 0.0
        %1054 = vmatpush1.msra.mxu0 %v1022
        %1055 = vmatprep.subr.mxu0 0.0
        %1056 = vmatpush1.msra.mxu0 %v1023
        %1057 = vmatprep.subr.mxu0 0.0
        %1058 = vmatpush1.msra.mxu0 %v1024
        %1059 = vmatprep.subr.mxu0 0.0
        %1060 = vmatpush1.msra.mxu0 %v1025
        %1061 = vmatprep.subr.mxu0 0.0
        %1062 = vmatpush1.msra.mxu0 %v1026
        %1063 = vmatprep.subr.mxu0 0.0
        %1064 = vmatpush1.msra.mxu0 %v1027
        %1065 = vmatprep.subr.mxu0 0.0
        %1066 = vmatpush1.msra.mxu0 %v1028
        %1067 = vmatprep.subr.mxu0 0.0
        %1068 = vmatpush1.msra.mxu0 %v1029
        %1069 = vmatprep.subr.mxu0 0.0
        %1070 = vmatpush1.msra.mxu0 0.0
        %1071 = vmatprep.subr.mxu0 0.0
        %1072 = vmatpush1.msra.mxu0 0.0
        %1073 = vmatprep.subr.mxu0 0.0
        %1074 = vmatpush1.msra.mxu0 0.0
        %1075 = vmatprep.subr.mxu0 0.0
        %1076 = vmatpush1.msra.mxu0 0.0
        %1077 = vmatprep.subr.mxu0 0.0
        %1078 = vmatpush1.msra.mxu0 0.0
        %1079 = vmatprep.subr.mxu0 0.0
        %1080 = vmatpush1.msra.mxu0 0.0
        %1081 = vmatprep.subr.mxu0 0.0
        %1082 = vmatpush1.msra.mxu0 0.0
        %1083 = vmatprep.subr.mxu0 0.0
        %1084 = vmatpush1.msra.mxu0 0.0
        %1085 = vmatprep.subr.mxu0 0.0
        %1086 = vmatpush1.msra.mxu0 0.0
        %1087 = vmatprep.subr.mxu0 0.0
        %1088 = vmatpush1.msra.mxu0 0.0
        %1089 = vmatprep.subr.mxu0 0.0
        %1090 = vmatpush1.msra.mxu0 0.0
        %1091 = vmatprep.subr.mxu0 0.0
        %1092 = vmatpush1.msra.mxu0 0.0
        %1093 = vmatprep.subr.mxu0 0.0
        %1094 = vmatpush1.msra.mxu0 0.0
        %1095 = vmatprep.subr.mxu0 0.0
        %1096 = vmatpush1.msra.mxu0 0.0
        %1097 = vmatprep.subr.mxu0 0.0
        %1098 = vmatpush1.msra.mxu0 0.0
        %1099 = vmatprep.subr.mxu0 0.0
        %1100 = vmatpush1.msra.mxu0 0.0
        %1101 = vmatprep.mubr.f32.mxu0 0.0
        %1102 = vmatmul.mubr.f32.gmra.mrb[0].mxu0 %v1013
        %v1103 = vpop.f32.mrb[0].mxu0
        %v1104 = vadd.f32 %v1035, %v1103
        %v1105 = vpop.f32.mrb[0].mxu0
        %1106 = vdwg.mxu0
        %v1107 = vmax.f32 %v1104, 0.0
        %v1108 = vld [vmem:[#allocation11] sm:$0xff]
        %v1109 = vld [vmem:[#allocation11 + $0x8] sm:$0xff]
        %v1110 = vld [vmem:[#allocation11 + $0x10] sm:$0xff]
        %v1111 = vld [vmem:[#allocation11 + $0x18] sm:$0xff]
        %v1112 = vld [vmem:[#allocation11 + $0x20] sm:$0xff]
        %v1113 = vld [vmem:[#allocation11 + $0x28] sm:$0xff]
        %v1114 = vld [vmem:[#allocation11 + $0x30] sm:$0xff]
        %v1115 = vld [vmem:[#allocation11 + $0x38] sm:$0xff]
        %v1116 = vld [vmem:[#allocation11 + $0x40] sm:$0xff]
        %v1117 = vld [vmem:[#allocation11 + $0x48] sm:$0xff]
        %v1118 = vld [vmem:[#allocation11 + $0x50] sm:$0xff]
        %v1119 = vld [vmem:[#allocation11 + $0x58] sm:$0xff]
        %v1120 = vld [vmem:[#allocation11 + $0x60] sm:$0xff]
        %v1121 = vld [vmem:[#allocation11 + $0x68] sm:$0xff]
        %v1122 = vld [vmem:[#allocation11 + $0x70] sm:$0xff]
        %v1123 = vld [vmem:[#allocation11 + $0x78] sm:$0xff]
        %v1124 = vld [vmem:[%s8] sm:$0x1]
        %v1126 = vlaneseq
        %v1127 = vshrl.u32 %v1126, 7
        %v1128 = vsub.s32 0, %v1127
        %v1129 = vrot.slane %v1124, %v1128
        %1131 = vmatprep.subr.mxu0 0.0
        %1132 = vmatpush1.msra.mxu0 %v1108
        %1133 = vmatprep.subr.mxu0 0.0
        %1134 = vmatpush1.msra.mxu0 %v1109
        %1135 = vmatprep.subr.mxu0 0.0
        %1136 = vmatpush1.msra.mxu0 %v1110
        %1137 = vmatprep.subr.mxu0 0.0
        %1138 = vmatpush1.msra.mxu0 %v1111
        %1139 = vmatprep.subr.mxu0 0.0
        %1140 = vmatpush1.msra.mxu0 %v1112
        %1141 = vmatprep.subr.mxu0 0.0
        %1142 = vmatpush1.msra.mxu0 %v1113
        %1143 = vmatprep.subr.mxu0 0.0
        %1144 = vmatpush1.msra.mxu0 %v1114
        %1145 = vmatprep.subr.mxu0 0.0
        %1146 = vmatpush1.msra.mxu0 %v1115
        %1147 = vmatprep.subr.mxu0 0.0
        %1148 = vmatpush1.msra.mxu0 %v1116
        %1149 = vmatprep.subr.mxu0 0.0
        %1150 = vmatpush1.msra.mxu0 %v1117
        %1151 = vmatprep.subr.mxu0 0.0
        %1152 = vmatpush1.msra.mxu0 %v1118
        %1153 = vmatprep.subr.mxu0 0.0
        %1154 = vmatpush1.msra.mxu0 %v1119
        %1155 = vmatprep.subr.mxu0 0.0
        %1156 = vmatpush1.msra.mxu0 %v1120
        %1157 = vmatprep.subr.mxu0 0.0
        %1158 = vmatpush1.msra.mxu0 %v1121
        %1159 = vmatprep.subr.mxu0 0.0
        %1160 = vmatpush1.msra.mxu0 %v1122
        %1161 = vmatprep.subr.mxu0 0.0
        %1162 = vmatpush1.msra.mxu0 %v1123
        %1163 = vmatprep.subr.mxu0 0.0
        %1164 = vmatpush1.msra.mxu0 0.0
        %1165 = vmatprep.subr.mxu0 0.0
        %1166 = vmatpush1.msra.mxu0 0.0
        %1167 = vmatprep.subr.mxu0 0.0
        %1168 = vmatpush1.msra.mxu0 0.0
        %1169 = vmatprep.subr.mxu0 0.0
        %1170 = vmatpush1.msra.mxu0 0.0
        %1171 = vmatprep.subr.mxu0 0.0
        %1172 = vmatpush1.msra.mxu0 0.0
        %1173 = vmatprep.subr.mxu0 0.0
        %1174 = vmatpush1.msra.mxu0 0.0
        %1175 = vmatprep.subr.mxu0 0.0
        %1176 = vmatpush1.msra.mxu0 0.0
        %1177 = vmatprep.subr.mxu0 0.0
        %1178 = vmatpush1.msra.mxu0 0.0
        %1179 = vmatprep.subr.mxu0 0.0
        %1180 = vmatpush1.msra.mxu0 0.0
        %1181 = vmatprep.subr.mxu0 0.0
        %1182 = vmatpush1.msra.mxu0 0.0
        %1183 = vmatprep.subr.mxu0 0.0
        %1184 = vmatpush1.msra.mxu0 0.0
        %1185 = vmatprep.subr.mxu0 0.0
        %1186 = vmatpush1.msra.mxu0 0.0
        %1187 = vmatprep.subr.mxu0 0.0
        %1188 = vmatpush1.msra.mxu0 0.0
        %1189 = vmatprep.subr.mxu0 0.0
        %1190 = vmatpush1.msra.mxu0 0.0
        %1191 = vmatprep.subr.mxu0 0.0
        %1192 = vmatpush1.msra.mxu0 0.0
        %1193 = vmatprep.subr.mxu0 0.0
        %1194 = vmatpush1.msra.mxu0 0.0
        %1195 = vmatprep.mubr.f32.mxu0 0.0
        %1196 = vmatmul.mubr.f32.gmra.mrb[0].mxu0 %v1107
        %v1197 = vpop.f32.mrb[0].mxu0
        %v1198 = vadd.f32 %v1129, %v1197
        %v1199 = vpop.f32.mrb[0].mxu0
        %1200 = vdwg.mxu0
        %v1201 = vmax.f32 %v1198, 0.0
        %v1202 = vld [vmem:[#allocation12] sm:$0xff]
        %v1203 = vld [vmem:[#allocation12 + $0x8] sm:$0xff]
        %v1204 = vld [vmem:[#allocation12 + $0x10] sm:$0xff]
        %v1205 = vld [vmem:[#allocation12 + $0x18] sm:$0xff]
        %v1206 = vld [vmem:[#allocation12 + $0x20] sm:$0xff]
        %v1207 = vld [vmem:[#allocation12 + $0x28] sm:$0xff]
        %v1208 = vld [vmem:[#allocation12 + $0x30] sm:$0xff]
        %v1209 = vld [vmem:[#allocation12 + $0x38] sm:$0xff]
        %v1210 = vld [vmem:[#allocation12 + $0x40] sm:$0xff]
        %v1211 = vld [vmem:[#allocation12 + $0x48] sm:$0xff]
        %v1212 = vld [vmem:[#allocation12 + $0x50] sm:$0xff]
        %v1213 = vld [vmem:[#allocation12 + $0x58] sm:$0xff]
        %v1214 = vld [vmem:[#allocation12 + $0x60] sm:$0xff]
        %v1215 = vld [vmem:[#allocation12 + $0x68] sm:$0xff]
        %v1216 = vld [vmem:[#allocation12 + $0x70] sm:$0xff]
        %v1217 = vld [vmem:[#allocation12 + $0x78] sm:$0xff]
        %v1218 = vld [vmem:[%s10] sm:$0x1]
        %v1220 = vlaneseq
        %v1221 = vshrl.u32 %v1220, 7
        %v1222 = vsub.s32 0, %v1221
        %v1223 = vrot.slane %v1218, %v1222
        %1225 = vmatprep.subr.mxu0 0.0
        %1226 = vmatpush1.msra.mxu0 %v1202
        %1227 = vmatprep.subr.mxu0 0.0
        %1228 = vmatpush1.msra.mxu0 %v1203
        %1229 = vmatprep.subr.mxu0 0.0
        %1230 = vmatpush1.msra.mxu0 %v1204
        %1231 = vmatprep.subr.mxu0 0.0
        %1232 = vmatpush1.msra.mxu0 %v1205
        %1233 = vmatprep.subr.mxu0 0.0
        %1234 = vmatpush1.msra.mxu0 %v1206
        %1235 = vmatprep.subr.mxu0 0.0
        %1236 = vmatpush1.msra.mxu0 %v1207
        %1237 = vmatprep.subr.mxu0 0.0
        %1238 = vmatpush1.msra.mxu0 %v1208
        %1239 = vmatprep.subr.mxu0 0.0
        %1240 = vmatpush1.msra.mxu0 %v1209
        %1241 = vmatprep.subr.mxu0 0.0
        %1242 = vmatpush1.msra.mxu0 %v1210
        %1243 = vmatprep.subr.mxu0 0.0
        %1244 = vmatpush1.msra.mxu0 %v1211
        %1245 = vmatprep.subr.mxu0 0.0
        %1246 = vmatpush1.msra.mxu0 %v1212
        %1247 = vmatprep.subr.mxu0 0.0
        %1248 = vmatpush1.msra.mxu0 %v1213
        %1249 = vmatprep.subr.mxu0 0.0
        %1250 = vmatpush1.msra.mxu0 %v1214
        %1251 = vmatprep.subr.mxu0 0.0
        %1252 = vmatpush1.msra.mxu0 %v1215
        %1253 = vmatprep.subr.mxu0 0.0
        %1254 = vmatpush1.msra.mxu0 %v1216
        %1255 = vmatprep.subr.mxu0 0.0
        %1256 = vmatpush1.msra.mxu0 %v1217
        %1257 = vmatprep.subr.mxu0 0.0
        %1258 = vmatpush1.msra.mxu0 0.0
        %1259 = vmatprep.subr.mxu0 0.0
        %1260 = vmatpush1.msra.mxu0 0.0
        %1261 = vmatprep.subr.mxu0 0.0
        %1262 = vmatpush1.msra.mxu0 0.0
        %1263 = vmatprep.subr.mxu0 0.0
        %1264 = vmatpush1.msra.mxu0 0.0
        %1265 = vmatprep.subr.mxu0 0.0
        %1266 = vmatpush1.msra.mxu0 0.0
        %1267 = vmatprep.subr.mxu0 0.0
        %1268 = vmatpush1.msra.mxu0 0.0
        %1269 = vmatprep.subr.mxu0 0.0
        %1270 = vmatpush1.msra.mxu0 0.0
        %1271 = vmatprep.subr.mxu0 0.0
        %1272 = vmatpush1.msra.mxu0 0.0
        %1273 = vmatprep.subr.mxu0 0.0
        %1274 = vmatpush1.msra.mxu0 0.0
        %1275 = vmatprep.subr.mxu0 0.0
        %1276 = vmatpush1.msra.mxu0 0.0
        %1277 = vmatprep.subr.mxu0 0.0
        %1278 = vmatpush1.msra.mxu0 0.0
        %1279 = vmatprep.subr.mxu0 0.0
        %1280 = vmatpush1.msra.mxu0 0.0
        %1281 = vmatprep.subr.mxu0 0.0
        %1282 = vmatpush1.msra.mxu0 0.0
        %1283 = vmatprep.subr.mxu0 0.0
        %1284 = vmatpush1.msra.mxu0 0.0
        %1285 = vmatprep.subr.mxu0 0.0
        %1286 = vmatpush1.msra.mxu0 0.0
        %1287 = vmatprep.subr.mxu0 0.0
        %1288 = vmatpush1.msra.mxu0 0.0
        %1289 = vmatprep.mubr.f32.mxu0 0.0
        %1290 = vmatmul.mubr.f32.gmra.mrb[0].mxu0 %v1201
        %v1291 = vpop.f32.mrb[0].mxu0
        %v1292 = vadd.f32 %v1223, %v1291
        %v1293 = vpop.f32.mrb[0].mxu0
        %1294 = vdwg.mxu0
        %v1295 = vmax.f32 %v1292, 0.0
        %v1296 = vld [vmem:[#allocation14] sm:$0xff]
        %v1297 = vld [vmem:[#allocation14 + $0x8] sm:$0xff]
        %v1298 = vld [vmem:[#allocation14 + $0x10] sm:$0xff]
        %v1299 = vld [vmem:[#allocation14 + $0x18] sm:$0xff]
        %v1300 = vld [vmem:[#allocation14 + $0x20] sm:$0xff]
        %v1301 = vld [vmem:[#allocation14 + $0x28] sm:$0xff]
        %v1302 = vld [vmem:[#allocation14 + $0x30] sm:$0xff]
        %v1303 = vld [vmem:[#allocation14 + $0x38] sm:$0xff]
        %v1304 = vld [vmem:[#allocation14 + $0x40] sm:$0xff]
        %v1305 = vld [vmem:[#allocation14 + $0x48] sm:$0xff]
        %v1306 = vld [vmem:[#allocation14 + $0x50] sm:$0xff]
        %v1307 = vld [vmem:[#allocation14 + $0x58] sm:$0xff]
        %v1308 = vld [vmem:[#allocation14 + $0x60] sm:$0xff]
        %v1309 = vld [vmem:[#allocation14 + $0x68] sm:$0xff]
        %v1310 = vld [vmem:[#allocation14 + $0x70] sm:$0xff]
        %v1311 = vld [vmem:[#allocation14 + $0x78] sm:$0xff]
        %v1312 = vld [vmem:[%s12] sm:$0x1]
        %v1314 = vlaneseq
        %v1315 = vshrl.u32 %v1314, 7
        %v1316 = vsub.s32 0, %v1315
        %v1317 = vrot.slane %v1312, %v1316
        %1319 = vmatprep.subr.mxu0 0.0
        %1320 = vmatpush1.msra.mxu0 %v1296
        %1321 = vmatprep.subr.mxu0 0.0
        %1322 = vmatpush1.msra.mxu0 %v1297
        %1323 = vmatprep.subr.mxu0 0.0
        %1324 = vmatpush1.msra.mxu0 %v1298
        %1325 = vmatprep.subr.mxu0 0.0
        %1326 = vmatpush1.msra.mxu0 %v1299
        %1327 = vmatprep.subr.mxu0 0.0
        %1328 = vmatpush1.msra.mxu0 %v1300
        %1329 = vmatprep.subr.mxu0 0.0
        %1330 = vmatpush1.msra.mxu0 %v1301
        %1331 = vmatprep.subr.mxu0 0.0
        %1332 = vmatpush1.msra.mxu0 %v1302
        %1333 = vmatprep.subr.mxu0 0.0
        %1334 = vmatpush1.msra.mxu0 %v1303
        %1335 = vmatprep.subr.mxu0 0.0
        %1336 = vmatpush1.msra.mxu0 %v1304
        %1337 = vmatprep.subr.mxu0 0.0
        %1338 = vmatpush1.msra.mxu0 %v1305
        %1339 = vmatprep.subr.mxu0 0.0
        %1340 = vmatpush1.msra.mxu0 %v1306
        %1341 = vmatprep.subr.mxu0 0.0
        %1342 = vmatpush1.msra.mxu0 %v1307
        %1343 = vmatprep.subr.mxu0 0.0
        %1344 = vmatpush1.msra.mxu0 %v1308
        %1345 = vmatprep.subr.mxu0 0.0
        %1346 = vmatpush1.msra.mxu0 %v1309
        %1347 = vmatprep.subr.mxu0 0.0
        %1348 = vmatpush1.msra.mxu0 %v1310
        %1349 = vmatprep.subr.mxu0 0.0
        %1350 = vmatpush1.msra.mxu0 %v1311
        %1351 = vmatprep.subr.mxu0 0.0
        %1352 = vmatpush1.msra.mxu0 0.0
        %1353 = vmatprep.subr.mxu0 0.0
        %1354 = vmatpush1.msra.mxu0 0.0
        %1355 = vmatprep.subr.mxu0 0.0
        %1356 = vmatpush1.msra.mxu0 0.0
        %1357 = vmatprep.subr.mxu0 0.0
        %1358 = vmatpush1.msra.mxu0 0.0
        %1359 = vmatprep.subr.mxu0 0.0
        %1360 = vmatpush1.msra.mxu0 0.0
        %1361 = vmatprep.subr.mxu0 0.0
        %1362 = vmatpush1.msra.mxu0 0.0
        %1363 = vmatprep.subr.mxu0 0.0
        %1364 = vmatpush1.msra.mxu0 0.0
        %1365 = vmatprep.subr.mxu0 0.0
        %1366 = vmatpush1.msra.mxu0 0.0
        %1367 = vmatprep.subr.mxu0 0.0
        %1368 = vmatpush1.msra.mxu0 0.0
        %1369 = vmatprep.subr.mxu0 0.0
        %1370 = vmatpush1.msra.mxu0 0.0
        %1371 = vmatprep.subr.mxu0 0.0
        %1372 = vmatpush1.msra.mxu0 0.0
        %1373 = vmatprep.subr.mxu0 0.0
        %1374 = vmatpush1.msra.mxu0 0.0
        %1375 = vmatprep.subr.mxu0 0.0
        %1376 = vmatpush1.msra.mxu0 0.0
        %1377 = vmatprep.subr.mxu0 0.0
        %1378 = vmatpush1.msra.mxu0 0.0
        %1379 = vmatprep.subr.mxu0 0.0
        %1380 = vmatpush1.msra.mxu0 0.0
        %1381 = vmatprep.subr.mxu0 0.0
        %1382 = vmatpush1.msra.mxu0 0.0
        %1383 = vmatprep.mubr.f32.mxu0 0.0
        %1384 = vmatmul.mubr.f32.gmra.mrb[0].mxu0 %v1295
        %v1385 = vpop.f32.mrb[0].mxu0
        %v1386 = vadd.f32 %v1317, %v1385
        %v1387 = vpop.f32.mrb[0].mxu0
        %1388 = vdwg.mxu0
        %v1389 = vmax.f32 %v1386, 0.0
        %v1390 = vld [vmem:[%s13] sm:$0x1]
        %v1392 = vlaneseq
        %v1393 = vshrl.u32 %v1392, 7
        %v1394 = vsub.s32 0, %v1393
        %v1395 = vrot.slane %v1390, %v1394
        %v1397 = vmul.f32 %v1389, %v1395
        %1398 = vadd.xlane.f32.xlu0 %v1397
        %v1399 = vpop.xlane.xlu0 %1398
        %v1400 = vld [vmem:[#allocation2] sm:$0x1]
        %v1402 = vlaneseq
        %v1403 = vshrl.u32 %v1402, 7
        %v1404 = vsub.s32 0, %v1403
        %v1405 = vrot.slane %v1400, %v1404
        %v1407 = vadd.f32 %v1399, %v1405
        %v1408 = vlaneseq
        %v1409 = vand.u32 %v1408, 127
        %vm1410 = vcmp.eq.s32.totalorder %v1409, 50
        %1412 = vset.pattern.permute.xlu0 0
        %1413 = vperm.xlu0 %1412, %v1407
        %v1414 = vpop.permute.xlu0 %1413
        %v1416 = vsel %vm1410, %v1414, %v1386
        %1417 = vst [vmem:[%s599] sm:$0xff] %v1416
        %s1418 = sand.u32 %s365, 1
        %s1419 = scalar_lea.sflag [#allocation5], %s1418
        %s1420 = sand.u32 %s365, 1
        %s1421 = smul.addr %s1420, 8
        %s1422 = scalar_lea.vmem [#allocation15], %s1421
        // Predicated region
        $region109: #{tpu_custom_call.1} parent=79 // pred_check
          %p1423 = pneg %p375
        $region110: #{tpu_custom_call.1} parent=79 // pred_check_branch
          %1425 = sbr.rel (%p1423) target = $region112
        $region111: #{tpu_custom_call.1} parent=79 // pred_region
          %s1427 = ssub.s32 128, 128
          %1428 = vsyncadd %s1419, %s1427
          %s1429 = smul.addr %s37, 128
          %s1430 = scalar_lea.hbm %s15, %s1429
          %s1432 = sshll.u32 %s1422, 4
          %s1433 = int_to_ptr.vmem [resolvable:$true] %s1432
          %1435 = dma.vmem_to_hbm [thread:$0]  %s1433, 128, %s1430, %s1419
        $region112: #{tpu_custom_call.1} parent=79 // pred_fallthru
          _
      $region80: #{tpu_custom_call.1} parent=5 // pred_fallthru
        _
      %p1436 = scmp.le.s32.totalorder 2, %s32
      // Predicated region
      $region113: #{tpu_custom_call.1} parent=5 // pred_check
        %p1437 = pneg %p1436
      $region114: #{tpu_custom_call.1} parent=5 // pred_check_branch
        %1439 = sbr.rel (%p1437) target = $region116
      $region115: #{tpu_custom_call.1} parent=5 // pred_region
        %s1440 = ssub.s32 %s32, 2
        // Predicated region
        $region117: #{tpu_custom_call.1} parent=115 // pred_check
          %p1441 = pneg %p381
        $region118: #{tpu_custom_call.1} parent=115 // pred_check_branch
          %1443 = sbr.rel (%p1441) target = $region120
        $region119: #{tpu_custom_call.1} parent=115 // pred_region
          %s1444 = sand.u32 %s366, 1
          %s1445 = scalar_lea.sflag [#allocation5], %s1444
          %s1446 = sand.u32 %s366, 1
          %s1447 = smul.addr %s1446, 8
          %s1448 = scalar_lea.vmem [#allocation15], %s1447
          %1449 = dma.done %s1445, 128
        $region120: #{tpu_custom_call.1} parent=115 // pred_fallthru
          _
      $region116: #{tpu_custom_call.1} parent=5 // pred_fallthru
        _
    $region6: #{tpu_custom_call.1} parent=1 // loop_footer
      %s36 = sadd.s32 1, %s32
    $region7: #{tpu_custom_call.1} parent=1 // loop_footer_branch
      %31 = sbr.rel target = $region3
    $region8: #{tpu_custom_call.1} parent=1 // loop_exit
      _
    %1450 = vsyncpa [#allocation4], 1
    %s1451 = scalar_lea.sflag [#allocation4], 1
    %1452 = vsyncpa %s1451, 1
    %1453 = vsyncpa [#allocation7], 1
    %1454 = vsyncpa [#allocation10], 1
    %1455 = vsyncpa [#allocation13], 1
    %1456 = vsyncpa [#allocation5], 1
    %s1457 = scalar_lea.sflag [#allocation5], 1
    %1458 = vsyncpa %s1457, 1

// kernel: tpu_custom_call.1
$region0: #{tpu_custom_call.1}
  #allocation0 [shape = 'u32[]', space=smem, size = 0x4, offset = 0x4, fixed_abs, tag = 'smem constant byte address 0x4 - core index']
  #allocation1 [shape = 'u32[144,128]{1,0:T(1,128)}', space=vmem, size = 0x12000, scoped, tag = 'internal scratch']
  #allocation2 [shape = 'f32[1,1]{1,0:T(1,128)S(1)}', space=vmem, size = 0x200, scoped, tag = 'scoped memory for tpu_custom_call.1']
  %s0 = inlined_call_operand.hbm [shape: f32[16,768], index: 0, kind: input, shape index: {}]
  %s1 = inlined_call_operand.hbm [shape: f32[768,128], index: 1, kind: input, shape index: {}]
  %s2 = inlined_call_operand.vmem [shape: f32[1,128], index: 2, kind: input, shape index: {}]
  %s3 = inlined_call_operand.hbm [shape: f32[128,128], index: 3, kind: input, shape index: {}]
  %s4 = inlined_call_operand.vmem [shape: f32[1,128], index: 4, kind: input, shape index: {}]
  %s5 = inlined_call_operand.hbm [shape: f32[128,128], index: 5, kind: input, shape index: {}]
  %s6 = inlined_call_operand.vmem [shape: f32[1,128], index: 6, kind: input, shape index: {}]
  %s7 = inlined_call_operand.hbm [shape: f32[128,128], index: 7, kind: input, shape index: {}]
  %s8 = inlined_call_operand.vmem [shape: f32[1,128], index: 8, kind: input, shape index: {}]
  %s9 = inlined_call_operand.hbm [shape: f32[128,128], index: 9, kind: input, shape index: {}]
  %s10 = inlined_call_operand.vmem [shape: f32[1,128], index: 10, kind: input, shape index: {}]
  %s11 = inlined_call_operand.hbm [shape: f32[128,128], index: 11, kind: input, shape index: {}]
  %s12 = inlined_call_operand.vmem [shape: f32[1,128], index: 12, kind: input, shape index: {}]
  %s13 = inlined_call_operand.vmem [shape: f32[1,128], index: 13, kind: input, shape index: {}]
  %s14 = inlined_call_operand.<no memory space> [shape: f32[1,1], index: 14, kind: input, shape index: {}]
  %s15 = inlined_call_operand.hbm [shape: f32[16,128], index: 15, kind: output, shape index: {}]
  %s16 = sld [smem:[#allocation0]]
  $region121: #{tpu_custom_call.1} parent=0
    _
  %s18 = ssub.s32 1, %s16
  %s19 = scalar_select 0, %s18, %s16
  %v20 = vstv %s14
  %21 = vst [vmem:[#allocation2] sm:$0x1] %v20
  $region1: #{tpu_custom_call.1} parent=0
    #allocation3 [shape = 'u8[49152]{0}', space=vmem, size = 0xc000, scoped, tag = 'input window, operand 0']
    #allocation4 [shape = 's32[2]{0}', space=sflag, size = 0x8, scoped, tag = 'scoped memory for tpu_custom_call.1']
    #allocation5 [shape = 's32[2]{0}', space=sflag, size = 0x8, scoped, tag = 'scoped memory for tpu_custom_call.1']
    #allocation6 [shape = 'u8[393216]{0}', space=vmem, size = 0x60000, scoped, tag = 'input window, operand 1, single buffered']
    #allocation7 [shape = 's32[1]{0}', space=sflag, size = 0x4, scoped, tag = 'scoped memory for tpu_custom_call.1']
    #allocation8 [shape = 'u8[65536]{0}', space=vmem, size = 0x10000, scoped, tag = 'input window, operand 3, single buffered']
    #allocation9 [shape = 'u8[65536]{0}', space=vmem, size = 0x10000, scoped, tag = 'input window, operand 5, single buffered']
    #allocation10 [shape = 's32[1]{0}', space=sflag, size = 0x4, scoped, tag = 'scoped memory for tpu_custom_call.1']
    #allocation11 [shape = 'u8[65536]{0}', space=vmem, size = 0x10000, scoped, tag = 'input window, operand 7, single buffered']
    #allocation12 [shape = 'u8[65536]{0}', space=vmem, size = 0x10000, scoped, tag = 'input window, operand 9, single buffered']
    #allocation13 [shape = 's32[1]{0}', space=sflag, size = 0x4, scoped, tag = 'scoped memory for tpu_custom_call.1']
    #allocation14 [shape = 'u8[65536]{0}', space=vmem, size = 0x10000, scoped, tag = 'input window, operand 11, single buffered']
    #allocation15 [shape = 'u8[8192]{0}', space=vmem, size = 0x2000, scoped, tag = 'output window, operand 0']
    %22 = vsyncpa [#allocation4], 0
    %s23 = scalar_lea.sflag [#allocation4], 1
    %24 = vsyncpa %s23, 0
    %25 = vsyncpa [#allocation7], 0
    %26 = vsyncpa [#allocation10], 0
    %27 = vsyncpa [#allocation13], 0
    %28 = vsyncpa [#allocation5], 0
    %s29 = scalar_lea.sflag [#allocation5], 1
    %30 = vsyncpa %s29, 0
    loop: start=0, step=1, limit=4
    $region2: #{tpu_custom_call.1} parent=1 // loop_pre_header
      _
    $region3: #{tpu_custom_call.1} parent=1 // loop_header
      %s32 = sphi 0, %s36
      %p33 = scmp.ge.s32.totalorder %s32, 4
      %s42 = sphi 0, %s44
      %s45 = sphi 0, %s42
      %s46 = sphi 0, %s45
      %s62 = sphi 0, %s46
      %s66 = sphi 0, %s66
      %s68 = sphi 0, %s66
      %s69 = sphi 0, %s68
      %s83 = sphi 0, %s69
      %s87 = sphi 0, %s87
      %s89 = sphi 0, %s87
      %s90 = sphi 0, %s89
      %s104 = sphi 0, %s90
      %s108 = sphi 0, %s108
      %s110 = sphi 0, %s108
      %s111 = sphi 0, %s110
      %s125 = sphi 0, %s111
      %s129 = sphi 0, %s129
      %s131 = sphi 0, %s129
      %s132 = sphi 0, %s131
      %s146 = sphi 0, %s132
      %s150 = sphi 0, %s150
      %s152 = sphi 0, %s150
      %s153 = sphi 0, %s152
      %s167 = sphi 0, %s153
      %s171 = sphi 0, %s171
      %s173 = sphi 0, %s171
      %s174 = sphi 0, %s173
      %s188 = sphi 0, %s174
      %s192 = sphi 0, %s192
      %s194 = sphi 0, %s192
      %s195 = sphi 0, %s194
      %s209 = sphi 0, %s195
      %s213 = sphi 0, %s213
      %s215 = sphi 0, %s213
      %s216 = sphi 0, %s215
      %s230 = sphi 0, %s216
      %s234 = sphi 0, %s234
      %s236 = sphi 0, %s234
      %s237 = sphi 0, %s236
      %s251 = sphi 0, %s237
      %s255 = sphi 0, %s255
      %s257 = sphi 0, %s255
      %s258 = sphi 0, %s257
      %s272 = sphi 0, %s258
      %s276 = sphi 0, %s276
      %s278 = sphi 0, %s276
      %s279 = sphi 0, %s278
      %s293 = sphi 0, %s279
      %s297 = sphi 0, %s297
      %s299 = sphi 0, %s297
      %s300 = sphi 0, %s299
      %s314 = sphi 0, %s300
      %s318 = sphi 0, %s318
      %s320 = sphi 0, %s318
      %s321 = sphi 0, %s320
      %s335 = sphi 0, %s321
      %s339 = sphi 0, %s339
      %s341 = sphi 0, %s339
      %s342 = sphi 0, %s341
      %s356 = sphi 0, %s342
      %s362 = sphi 0, %s364
      %s365 = sphi 0, %s362
      %s366 = sphi 0, %s365
      %s382 = sphi 0, %s366
    $region4: #{tpu_custom_call.1} parent=1 // loop_header_branch
      %35 = sbr.rel (%p33) target = $region8
    $region5: #{tpu_custom_call.1} parent=1 // loop_body
      %s37 = ssub.s32 %s32, 1
      %s38 = ssub.s32 %s32, 2
      %s39 = sadd.s32 %s32, 1
      %s40 = ssub.s32 %s32, %s39
      %p41 = scmp.eq.s32.totalorder %s40, 0
      %s43 = sadd.s32 %s42, 1
      %s44 = scalar_select %p41, %s42, %s43
      %p47 = pneg %p41
      %p48 = scmp.eq.s32.totalorder %s32, 1
      %p49 = por %p47, %p48
      %p50 = scmp.ne.s32.totalorder %s42, %s45
      %p51 = scmp.eq.s32.totalorder %s32, 0
      %p52 = por %p50, %p51
      %p53 = scmp.ne.s32.totalorder %s42, %s45
      %p54 = scmp.eq.s32.totalorder %s37, 1
      %p55 = por %p53, %p54
      %p56 = scmp.ne.s32.totalorder %s45, %s46
      %p57 = scmp.eq.s32.totalorder %s37, 0
      %p58 = por %p56, %p57
      %p59 = scmp.ne.s32.totalorder %s45, %s46
      %p60 = scmp.eq.s32.totalorder %s38, 1
      %p61 = por %p59, %p60
      %p63 = scmp.ne.s32.totalorder %s46, %s62
      %p64 = scmp.eq.s32.totalorder %s38, 0
      %p65 = por %p63, %p64
      %s67 = sadd.s32 %s66, 1
      %p70 = scmp.eq.s32.totalorder %s32, 1
      %p71 = scmp.ne.s32.totalorder %s66, %s68
      %p72 = scmp.eq.s32.totalorder %s32, 0
      %p73 = por %p71, %p72
      %p74 = scmp.ne.s32.totalorder %s66, %s68
      %p75 = scmp.eq.s32.totalorder %s37, 1
      %p76 = por %p74, %p75
      %p77 = scmp.ne.s32.totalorder %s68, %s69
      %p78 = scmp.eq.s32.totalorder %s37, 0
      %p79 = por %p77, %p78
      %p80 = scmp.ne.s32.totalorder %s68, %s69
      %p81 = scmp.eq.s32.totalorder %s38, 1
      %p82 = por %p80, %p81
      %p84 = scmp.ne.s32.totalorder %s69, %s83
      %p85 = scmp.eq.s32.totalorder %s38, 0
      %p86 = por %p84, %p85
      %s88 = sadd.s32 %s87, 1
      %p91 = scmp.eq.s32.totalorder %s32, 1
      %p92 = scmp.ne.s32.totalorder %s87, %s89
      %p93 = scmp.eq.s32.totalorder %s32, 0
      %p94 = por %p92, %p93
      %p95 = scmp.ne.s32.totalorder %s87, %s89
      %p96 = scmp.eq.s32.totalorder %s37, 1
      %p97 = por %p95, %p96
      %p98 = scmp.ne.s32.totalorder %s89, %s90
      %p99 = scmp.eq.s32.totalorder %s37, 0
      %p100 = por %p98, %p99
      %p101 = scmp.ne.s32.totalorder %s89, %s90
      %p102 = scmp.eq.s32.totalorder %s38, 1
      %p103 = por %p101, %p102
      %p105 = scmp.ne.s32.totalorder %s90, %s104
      %p106 = scmp.eq.s32.totalorder %s38, 0
      %p107 = por %p105, %p106
      %s109 = sadd.s32 %s108, 1
      %p112 = scmp.eq.s32.totalorder %s32, 1
      %p113 = scmp.ne.s32.totalorder %s108, %s110
      %p114 = scmp.eq.s32.totalorder %s32, 0
      %p115 = por %p113, %p114
      %p116 = scmp.ne.s32.totalorder %s108, %s110
      %p117 = scmp.eq.s32.totalorder %s37, 1
      %p118 = por %p116, %p117
      %p119 = scmp.ne.s32.totalorder %s110, %s111
      %p120 = scmp.eq.s32.totalorder %s37, 0
      %p121 = por %p119, %p120
      %p122 = scmp.ne.s32.totalorder %s110, %s111
      %p123 = scmp.eq.s32.totalorder %s38, 1
      %p124 = por %p122, %p123
      %p126 = scmp.ne.s32.totalorder %s111, %s125
      %p127 = scmp.eq.s32.totalorder %s38, 0
      %p128 = por %p126, %p127
      %s130 = sadd.s32 %s129, 1
      %p133 = scmp.eq.s32.totalorder %s32, 1
      %p134 = scmp.ne.s32.totalorder %s129, %s131
      %p135 = scmp.eq.s32.totalorder %s32, 0
      %p136 = por %p134, %p135
      %p137 = scmp.ne.s32.totalorder %s129, %s131
      %p138 = scmp.eq.s32.totalorder %s37, 1
      %p139 = por %p137, %p138
      %p140 = scmp.ne.s32.totalorder %s131, %s132
      %p141 = scmp.eq.s32.totalorder %s37, 0
      %p142 = por %p140, %p141
      %p143 = scmp.ne.s32.totalorder %s131, %s132
      %p144 = scmp.eq.s32.totalorder %s38, 1
      %p145 = por %p143, %p144
      %p147 = scmp.ne.s32.totalorder %s132, %s146
      %p148 = scmp.eq.s32.totalorder %s38, 0
      %p149 = por %p147, %p148
      %s151 = sadd.s32 %s150, 1
      %p154 = scmp.eq.s32.totalorder %s32, 1
      %p155 = scmp.ne.s32.totalorder %s150, %s152
      %p156 = scmp.eq.s32.totalorder %s32, 0
      %p157 = por %p155, %p156
      %p158 = scmp.ne.s32.totalorder %s150, %s152
      %p159 = scmp.eq.s32.totalorder %s37, 1
      %p160 = por %p158, %p159
      %p161 = scmp.ne.s32.totalorder %s152, %s153
      %p162 = scmp.eq.s32.totalorder %s37, 0
      %p163 = por %p161, %p162
      %p164 = scmp.ne.s32.totalorder %s152, %s153
      %p165 = scmp.eq.s32.totalorder %s38, 1
      %p166 = por %p164, %p165
      %p168 = scmp.ne.s32.totalorder %s153, %s167
      %p169 = scmp.eq.s32.totalorder %s38, 0
      %p170 = por %p168, %p169
      %s172 = sadd.s32 %s171, 1
      %p175 = scmp.eq.s32.totalorder %s32, 1
      %p176 = scmp.ne.s32.totalorder %s171, %s173
      %p177 = scmp.eq.s32.totalorder %s32, 0
      %p178 = por %p176, %p177
      %p179 = scmp.ne.s32.totalorder %s171, %s173
      %p180 = scmp.eq.s32.totalorder %s37, 1
      %p181 = por %p179, %p180
      %p182 = scmp.ne.s32.totalorder %s173, %s174
      %p183 = scmp.eq.s32.totalorder %s37, 0
      %p184 = por %p182, %p183
      %p185 = scmp.ne.s32.totalorder %s173, %s174
      %p186 = scmp.eq.s32.totalorder %s38, 1
      %p187 = por %p185, %p186
      %p189 = scmp.ne.s32.totalorder %s174, %s188
      %p190 = scmp.eq.s32.totalorder %s38, 0
      %p191 = por %p189, %p190
      %s193 = sadd.s32 %s192, 1
      %p196 = scmp.eq.s32.totalorder %s32, 1
      %p197 = scmp.ne.s32.totalorder %s192, %s194
      %p198 = scmp.eq.s32.totalorder %s32, 0
      %p199 = por %p197, %p198
      %p200 = scmp.ne.s32.totalorder %s192, %s194
      %p201 = scmp.eq.s32.totalorder %s37, 1
      %p202 = por %p200, %p201
      %p203 = scmp.ne.s32.totalorder %s194, %s195
      %p204 = scmp.eq.s32.totalorder %s37, 0
      %p205 = por %p203, %p204
      %p206 = scmp.ne.s32.totalorder %s194, %s195
      %p207 = scmp.eq.s32.totalorder %s38, 1
      %p208 = por %p206, %p207
      %p210 = scmp.ne.s32.totalorder %s195, %s209
      %p211 = scmp.eq.s32.totalorder %s38, 0
      %p212 = por %p210, %p211
      %s214 = sadd.s32 %s213, 1
      %p217 = scmp.eq.s32.totalorder %s32, 1
      %p218 = scmp.ne.s32.totalorder %s213, %s215
      %p219 = scmp.eq.s32.totalorder %s32, 0
      %p220 = por %p218, %p219
      %p221 = scmp.ne.s32.totalorder %s213, %s215
      %p222 = scmp.eq.s32.totalorder %s37, 1
      %p223 = por %p221, %p222
      %p224 = scmp.ne.s32.totalorder %s215, %s216
      %p225 = scmp.eq.s32.totalorder %s37, 0
      %p226 = por %p224, %p225
      %p227 = scmp.ne.s32.totalorder %s215, %s216
      %p228 = scmp.eq.s32.totalorder %s38, 1
      %p229 = por %p227, %p228
      %p231 = scmp.ne.s32.totalorder %s216, %s230
      %p232 = scmp.eq.s32.totalorder %s38, 0
      %p233 = por %p231, %p232
      %s235 = sadd.s32 %s234, 1
      %p238 = scmp.eq.s32.totalorder %s32, 1
      %p239 = scmp.ne.s32.totalorder %s234, %s236
      %p240 = scmp.eq.s32.totalorder %s32, 0
      %p241 = por %p239, %p240
      %p242 = scmp.ne.s32.totalorder %s234, %s236
      %p243 = scmp.eq.s32.totalorder %s37, 1
      %p244 = por %p242, %p243
      %p245 = scmp.ne.s32.totalorder %s236, %s237
      %p246 = scmp.eq.s32.totalorder %s37, 0
      %p247 = por %p245, %p246
      %p248 = scmp.ne.s32.totalorder %s236, %s237
      %p249 = scmp.eq.s32.totalorder %s38, 1
      %p250 = por %p248, %p249
      %p252 = scmp.ne.s32.totalorder %s237, %s251
      %p253 = scmp.eq.s32.totalorder %s38, 0
      %p254 = por %p252, %p253
      %s256 = sadd.s32 %s255, 1
      %p259 = scmp.eq.s32.totalorder %s32, 1
      %p260 = scmp.ne.s32.totalorder %s255, %s257
      %p261 = scmp.eq.s32.totalorder %s32, 0
      %p262 = por %p260, %p261
      %p263 = scmp.ne.s32.totalorder %s255, %s257
      %p264 = scmp.eq.s32.totalorder %s37, 1
      %p265 = por %p263, %p264
      %p266 = scmp.ne.s32.totalorder %s257, %s258
      %p267 = scmp.eq.s32.totalorder %s37, 0
      %p268 = por %p266, %p267
      %p269 = scmp.ne.s32.totalorder %s257, %s258
      %p270 = scmp.eq.s32.totalorder %s38, 1
      %p271 = por %p269, %p270
      %p273 = scmp.ne.s32.totalorder %s258, %s272
      %p274 = scmp.eq.s32.totalorder %s38, 0
      %p275 = por %p273, %p274
      %s277 = sadd.s32 %s276, 1
      %p280 = scmp.eq.s32.totalorder %s32, 1
      %p281 = scmp.ne.s32.totalorder %s276, %s278
      %p282 = scmp.eq.s32.totalorder %s32, 0
      %p283 = por %p281, %p282
      %p284 = scmp.ne.s32.totalorder %s276, %s278
      %p285 = scmp.eq.s32.totalorder %s37, 1
      %p286 = por %p284, %p285
      %p287 = scmp.ne.s32.totalorder %s278, %s279
      %p288 = scmp.eq.s32.totalorder %s37, 0
      %p289 = por %p287, %p288
      %p290 = scmp.ne.s32.totalorder %s278, %s279
      %p291 = scmp.eq.s32.totalorder %s38, 1
      %p292 = por %p290, %p291
      %p294 = scmp.ne.s32.totalorder %s279, %s293
      %p295 = scmp.eq.s32.totalorder %s38, 0
      %p296 = por %p294, %p295
      %s298 = sadd.s32 %s297, 1
      %p301 = scmp.eq.s32.totalorder %s32, 1
      %p302 = scmp.ne.s32.totalorder %s297, %s299
      %p303 = scmp.eq.s32.totalorder %s32, 0
      %p304 = por %p302, %p303
      %p305 = scmp.ne.s32.totalorder %s297, %s299
      %p306 = scmp.eq.s32.totalorder %s37, 1
      %p307 = por %p305, %p306
      %p308 = scmp.ne.s32.totalorder %s299, %s300
      %p309 = scmp.eq.s32.totalorder %s37, 0
      %p310 = por %p308, %p309
      %p311 = scmp.ne.s32.totalorder %s299, %s300
      %p312 = scmp.eq.s32.totalorder %s38, 1
      %p313 = por %p311, %p312
      %p315 = scmp.ne.s32.totalorder %s300, %s314
      %p316 = scmp.eq.s32.totalorder %s38, 0
      %p317 = por %p315, %p316
      %s319 = sadd.s32 %s318, 1
      %p322 = scmp.eq.s32.totalorder %s32, 1
      %p323 = scmp.ne.s32.totalorder %s318, %s320
      %p324 = scmp.eq.s32.totalorder %s32, 0
      %p325 = por %p323, %p324
      %p326 = scmp.ne.s32.totalorder %s318, %s320
      %p327 = scmp.eq.s32.totalorder %s37, 1
      %p328 = por %p326, %p327
      %p329 = scmp.ne.s32.totalorder %s320, %s321
      %p330 = scmp.eq.s32.totalorder %s37, 0
      %p331 = por %p329, %p330
      %p332 = scmp.ne.s32.totalorder %s320, %s321
      %p333 = scmp.eq.s32.totalorder %s38, 1
      %p334 = por %p332, %p333
      %p336 = scmp.ne.s32.totalorder %s321, %s335
      %p337 = scmp.eq.s32.totalorder %s38, 0
      %p338 = por %p336, %p337
      %s340 = sadd.s32 %s339, 1
      %p343 = scmp.eq.s32.totalorder %s32, 1
      %p344 = scmp.ne.s32.totalorder %s339, %s341
      %p345 = scmp.eq.s32.totalorder %s32, 0
      %p346 = por %p344, %p345
      %p347 = scmp.ne.s32.totalorder %s339, %s341
      %p348 = scmp.eq.s32.totalorder %s37, 1
      %p349 = por %p347, %p348
      %p350 = scmp.ne.s32.totalorder %s341, %s342
      %p351 = scmp.eq.s32.totalorder %s37, 0
      %p352 = por %p350, %p351
      %p353 = scmp.ne.s32.totalorder %s341, %s342
      %p354 = scmp.eq.s32.totalorder %s38, 1
      %p355 = por %p353, %p354
      %p357 = scmp.ne.s32.totalorder %s342, %s356
      %p358 = scmp.eq.s32.totalorder %s38, 0
      %p359 = por %p357, %p358
      %s360 = ssub.s32 %s32, %s39
      %p361 = scmp.eq.s32.totalorder %s360, 0
      %s363 = sadd.s32 %s362, 1
      %s364 = scalar_select %p361, %s362, %s363
      %p367 = pneg %p361
      %p368 = scmp.eq.s32.totalorder %s32, 1
      %p369 = por %p367, %p368
      %p370 = scmp.ne.s32.totalorder %s362, %s365
      %p371 = scmp.eq.s32.totalorder %s32, 0
      %p372 = por %p370, %p371
      %p373 = scmp.ne.s32.totalorder %s362, %s365
      %p374 = scmp.eq.s32.totalorder %s37, 1
      %p375 = por %p373, %p374
      %p376 = scmp.ne.s32.totalorder %s365, %s366
      %p377 = scmp.eq.s32.totalorder %s37, 0
      %p378 = por %p376, %p377
      %p379 = scmp.ne.s32.totalorder %s365, %s366
      %p380 = scmp.eq.s32.totalorder %s38, 1
      %p381 = por %p379, %p380
      %p383 = scmp.ne.s32.totalorder %s366, %s382
      %p384 = scmp.eq.s32.totalorder %s38, 0
      %p385 = por %p383, %p384
      %p386 = scmp.le.s32.totalorder 1, %s32
      %p387 = scmp.lt.s32.totalorder %s32, 3
      %p388 = pnand %p386, %p387
      %p389 = pneg %p388
      // Predicated region
      $region9: #{tpu_custom_call.1} parent=5 // pred_check
        _
      $region10: #{tpu_custom_call.1} parent=5 // pred_check_branch
        %391 = sbr.rel (%p388) target = $region12
      $region11: #{tpu_custom_call.1} parent=5 // pred_region
        %s392 = ssub.s32 %s32, 1
        // Predicated region
        $region13: #{tpu_custom_call.1} parent=11 // pred_check
          %p393 = pneg %p79
        $region14: #{tpu_custom_call.1} parent=11 // pred_check_branch
          %395 = sbr.rel (%p393) target = $region16
        $region15: #{tpu_custom_call.1} parent=11 // pred_region
          %s397 = ssub.s32 12288, 12288
          %398 = vsyncadd [#allocation7], %s397
          %s399 = sshll.u32 [#allocation6], 4
          %s400 = int_to_ptr.vmem [resolvable:$true] %s399
          %405 = dma.hbm_to_vmem [thread:$0]  %s1, 12288, %s400, [#allocation7], 128, 128, 8
        $region16: #{tpu_custom_call.1} parent=11 // pred_fallthru
          _
        // Predicated region
        $region17: #{tpu_custom_call.1} parent=11 // pred_check
          %p406 = pneg %p100
        $region18: #{tpu_custom_call.1} parent=11 // pred_check_branch
          %408 = sbr.rel (%p406) target = $region20
        $region19: #{tpu_custom_call.1} parent=11 // pred_region
          _
        $region20: #{tpu_custom_call.1} parent=11 // pred_fallthru
          _
        // Predicated region
        $region21: #{tpu_custom_call.1} parent=11 // pred_check
          %p409 = pneg %p121
        $region22: #{tpu_custom_call.1} parent=11 // pred_check_branch
          %411 = sbr.rel (%p409) target = $region24
        $region23: #{tpu_custom_call.1} parent=11 // pred_region
          %s413 = ssub.s32 2048, 2048
          %414 = vsyncadd [#allocation7], %s413
          %s415 = sshll.u32 [#allocation8], 4
          %s416 = int_to_ptr.vmem [resolvable:$true] %s415
          %421 = dma.hbm_to_vmem [thread:$0]  %s3, 2048, %s416, [#allocation7], 128, 128, 8
        $region24: #{tpu_custom_call.1} parent=11 // pred_fallthru
          _
        // Predicated region
        $region25: #{tpu_custom_call.1} parent=11 // pred_check
          %p422 = pneg %p142
        $region26: #{tpu_custom_call.1} parent=11 // pred_check_branch
          %424 = sbr.rel (%p422) target = $region28
        $region27: #{tpu_custom_call.1} parent=11 // pred_region
          _
        $region28: #{tpu_custom_call.1} parent=11 // pred_fallthru
          _
        // Predicated region
        $region29: #{tpu_custom_call.1} parent=11 // pred_check
          %p425 = pneg %p163
        $region30: #{tpu_custom_call.1} parent=11 // pred_check_branch
          %427 = sbr.rel (%p425) target = $region32
        $region31: #{tpu_custom_call.1} parent=11 // pred_region
          %s429 = ssub.s32 2048, 2048
          %430 = vsyncadd [#allocation10], %s429
          %s431 = sshll.u32 [#allocation9], 4
          %s432 = int_to_ptr.vmem [resolvable:$true] %s431
          %437 = dma.hbm_to_vmem [thread:$0]  %s5, 2048, %s432, [#allocation10], 128, 128, 8
        $region32: #{tpu_custom_call.1} parent=11 // pred_fallthru
          _
        // Predicated region
        $region33: #{tpu_custom_call.1} parent=11 // pred_check
          %p438 = pneg %p184
        $region34: #{tpu_custom_call.1} parent=11 // pred_check_branch
          %440 = sbr.rel (%p438) target = $region36
        $region35: #{tpu_custom_call.1} parent=11 // pred_region
          _
        $region36: #{tpu_custom_call.1} parent=11 // pred_fallthru
          _
        // Predicated region
        $region37: #{tpu_custom_call.1} parent=11 // pred_check
          %p441 = pneg %p205
        $region38: #{tpu_custom_call.1} parent=11 // pred_check_branch
          %443 = sbr.rel (%p441) target = $region40
        $region39: #{tpu_custom_call.1} parent=11 // pred_region
          %s445 = ssub.s32 2048, 2048
          %446 = vsyncadd [#allocation10], %s445
          %s447 = sshll.u32 [#allocation11], 4
          %s448 = int_to_ptr.vmem [resolvable:$true] %s447
          %453 = dma.hbm_to_vmem [thread:$0]  %s7, 2048, %s448, [#allocation10], 128, 128, 8
        $region40: #{tpu_custom_call.1} parent=11 // pred_fallthru
          _
        // Predicated region
        $region41: #{tpu_custom_call.1} parent=11 // pred_check
          %p454 = pneg %p226
        $region42: #{tpu_custom_call.1} parent=11 // pred_check_branch
          %456 = sbr.rel (%p454) target = $region44
        $region43: #{tpu_custom_call.1} parent=11 // pred_region
          _
        $region44: #{tpu_custom_call.1} parent=11 // pred_fallthru
          _
        // Predicated region
        $region45: #{tpu_custom_call.1} parent=11 // pred_check
          %p457 = pneg %p247
        $region46: #{tpu_custom_call.1} parent=11 // pred_check_branch
          %459 = sbr.rel (%p457) target = $region48
        $region47: #{tpu_custom_call.1} parent=11 // pred_region
          %s461 = ssub.s32 2048, 2048
          %462 = vsyncadd [#allocation13], %s461
          %s463 = sshll.u32 [#allocation12], 4
          %s464 = int_to_ptr.vmem [resolvable:$true] %s463
          %469 = dma.hbm_to_vmem [thread:$0]  %s9, 2048, %s464, [#allocation13], 128, 128, 8
        $region48: #{tpu_custom_call.1} parent=11 // pred_fallthru
          _
        // Predicated region
        $region49: #{tpu_custom_call.1} parent=11 // pred_check
          %p470 = pneg %p268
        $region50: #{tpu_custom_call.1} parent=11 // pred_check_branch
          %472 = sbr.rel (%p470) target = $region52
        $region51: #{tpu_custom_call.1} parent=11 // pred_region
          _
        $region52: #{tpu_custom_call.1} parent=11 // pred_fallthru
          _
        // Predicated region
        $region53: #{tpu_custom_call.1} parent=11 // pred_check
          %p473 = pneg %p289
        $region54: #{tpu_custom_call.1} parent=11 // pred_check_branch
          %475 = sbr.rel (%p473) target = $region56
        $region55: #{tpu_custom_call.1} parent=11 // pred_region
          %s477 = ssub.s32 2048, 2048
          %478 = vsyncadd [#allocation13], %s477
          %s479 = sshll.u32 [#allocation14], 4
          %s480 = int_to_ptr.vmem [resolvable:$true] %s479
          %485 = dma.hbm_to_vmem [thread:$0]  %s11, 2048, %s480, [#allocation13], 128, 128, 8
        $region56: #{tpu_custom_call.1} parent=11 // pred_fallthru
          _
        // Predicated region
        $region57: #{tpu_custom_call.1} parent=11 // pred_check
          %p486 = pneg %p310
        $region58: #{tpu_custom_call.1} parent=11 // pred_check_branch
          %488 = sbr.rel (%p486) target = $region60
        $region59: #{tpu_custom_call.1} parent=11 // pred_region
          _
        $region60: #{tpu_custom_call.1} parent=11 // pred_fallthru
          _
        // Predicated region
        $region61: #{tpu_custom_call.1} parent=11 // pred_check
          %p489 = pneg %p331
        $region62: #{tpu_custom_call.1} parent=11 // pred_check_branch
          %491 = sbr.rel (%p489) target = $region64
        $region63: #{tpu_custom_call.1} parent=11 // pred_region
          _
        $region64: #{tpu_custom_call.1} parent=11 // pred_fallthru
          _
        // Predicated region
        $region65: #{tpu_custom_call.1} parent=11 // pred_check
          %p492 = pneg %p352
        $region66: #{tpu_custom_call.1} parent=11 // pred_check_branch
          %494 = sbr.rel (%p492) target = $region68
        $region67: #{tpu_custom_call.1} parent=11 // pred_region
          _
        $region68: #{tpu_custom_call.1} parent=11 // pred_fallthru
          _
      $region12: #{tpu_custom_call.1} parent=5 // pred_fallthru
        _
      %p495 = scmp.lt.s32.totalorder %s32, 2
      // Predicated region
      $region69: #{tpu_custom_call.1} parent=5 // pred_check
        %p496 = pneg %p495
      $region70: #{tpu_custom_call.1} parent=5 // pred_check_branch
        %498 = sbr.rel (%p496) target = $region72
      $region71: #{tpu_custom_call.1} parent=5 // pred_region
        // Predicated region
        $region73: #{tpu_custom_call.1} parent=71 // pred_check
          %p499 = pneg %p52
        $region74: #{tpu_custom_call.1} parent=71 // pred_check_branch
          %501 = sbr.rel (%p499) target = $region76
        $region75: #{tpu_custom_call.1} parent=71 // pred_region
          %s502 = sand.u32 %s42, 1
          %s503 = scalar_lea.sflag [#allocation4], %s502
          %s504 = sand.u32 %s42, 1
          %s505 = smul.addr %s504, 48
          %s506 = scalar_lea.vmem [#allocation3], %s505
          %s508 = ssub.s32 768, 768
          %509 = vsyncadd %s503, %s508
          %s510 = smul.addr %s32, 6
          %s511 = smul.addr %s510, 128
          %s512 = scalar_lea.hbm %s0, %s511
          %s514 = sshll.u32 %s506, 4
          %s515 = int_to_ptr.vmem [resolvable:$true] %s514
          %517 = dma.hbm_to_vmem [thread:$0]  %s512, 768, %s515, %s503
        $region76: #{tpu_custom_call.1} parent=71 // pred_fallthru
          _
      $region72: #{tpu_custom_call.1} parent=5 // pred_fallthru
        _
      %p518 = scmp.le.s32.totalorder 1, %s32
      %p519 = scmp.lt.s32.totalorder %s32, 3
      %p520 = pnand %p518, %p519
      %p521 = pneg %p520
      // Predicated region
      $region77: #{tpu_custom_call.1} parent=5 // pred_check
        _
      $region78: #{tpu_custom_call.1} parent=5 // pred_check_branch
        %523 = sbr.rel (%p520) target = $region80
      $region79: #{tpu_custom_call.1} parent=5 // pred_region
        %s524 = ssub.s32 %s32, 1
        %s525 = sand.u32 %s45, 1
        %s526 = scalar_lea.sflag [#allocation4], %s525
        %s527 = sand.u32 %s45, 1
        %s528 = smul.addr %s527, 48
        %s529 = scalar_lea.vmem [#allocation3], %s528
        // Predicated region
        $region81: #{tpu_custom_call.1} parent=79 // pred_check
          %p530 = pneg %p58
        $region82: #{tpu_custom_call.1} parent=79 // pred_check_branch
          %532 = sbr.rel (%p530) target = $region84
        $region83: #{tpu_custom_call.1} parent=79 // pred_region
          %533 = dma.done %s526, 768
        $region84: #{tpu_custom_call.1} parent=79 // pred_fallthru
          _
        // Predicated region
        $region85: #{tpu_custom_call.1} parent=79 // pred_check
          %p534 = pneg %p79
        $region86: #{tpu_custom_call.1} parent=79 // pred_check_branch
          %536 = sbr.rel (%p534) target = $region88
        $region87: #{tpu_custom_call.1} parent=79 // pred_region
          %537 = dma.done [#allocation7], 12288
        $region88: #{tpu_custom_call.1} parent=79 // pred_fallthru
          _
        // Predicated region
        $region89: #{tpu_custom_call.1} parent=79 // pred_check
          %p538 = pneg %p121
        $region90: #{tpu_custom_call.1} parent=79 // pred_check_branch
          %540 = sbr.rel (%p538) target = $region92
        $region91: #{tpu_custom_call.1} parent=79 // pred_region
          %541 = dma.done [#allocation7], 2048
        $region92: #{tpu_custom_call.1} parent=79 // pred_fallthru
          _
        // Predicated region
        $region93: #{tpu_custom_call.1} parent=79 // pred_check
          %p542 = pneg %p163
        $region94: #{tpu_custom_call.1} parent=79 // pred_check_branch
          %544 = sbr.rel (%p542) target = $region96
        $region95: #{tpu_custom_call.1} parent=79 // pred_region
          %545 = dma.done [#allocation10], 2048
        $region96: #{tpu_custom_call.1} parent=79 // pred_fallthru
          _
        // Predicated region
        $region97: #{tpu_custom_call.1} parent=79 // pred_check
          %p546 = pneg %p205
        $region98: #{tpu_custom_call.1} parent=79 // pred_check_branch
          %548 = sbr.rel (%p546) target = $region100
        $region99: #{tpu_custom_call.1} parent=79 // pred_region
          %549 = dma.done [#allocation10], 2048
        $region100: #{tpu_custom_call.1} parent=79 // pred_fallthru
          _
        // Predicated region
        $region101: #{tpu_custom_call.1} parent=79 // pred_check
          %p550 = pneg %p247
        $region102: #{tpu_custom_call.1} parent=79 // pred_check_branch
          %552 = sbr.rel (%p550) target = $region104
        $region103: #{tpu_custom_call.1} parent=79 // pred_region
          %553 = dma.done [#allocation13], 2048
        $region104: #{tpu_custom_call.1} parent=79 // pred_fallthru
          _
        // Predicated region
        $region105: #{tpu_custom_call.1} parent=79 // pred_check
          %p554 = pneg %p289
        $region106: #{tpu_custom_call.1} parent=79 // pred_check_branch
          %556 = sbr.rel (%p554) target = $region108
        $region107: #{tpu_custom_call.1} parent=79 // pred_region
          %557 = dma.done [#allocation13], 2048
        $region108: #{tpu_custom_call.1} parent=79 // pred_fallthru
          _
        %s558 = sand.u32 %s45, 1
        %s559 = scalar_lea.sflag [#allocation4], %s558
        %s560 = sand.u32 %s45, 1
        %s561 = smul.addr %s560, 48
        %s562 = scalar_lea.vmem [#allocation3], %s561
        %p563 = pneg %p58
        %p564 = pneg %p55
        %p565 = pneg %p79
        %p566 = pneg %p76
        %p567 = pneg %p100
        %p568 = pneg %p97
        %p569 = pneg %p121
        %p570 = pneg %p118
        %p571 = pneg %p142
        %p572 = pneg %p139
        %p573 = pneg %p163
        %p574 = pneg %p160
        %p575 = pneg %p184
        %p576 = pneg %p181
        %p577 = pneg %p205
        %p578 = pneg %p202
        %p579 = pneg %p226
        %p580 = pneg %p223
        %p581 = pneg %p247
        %p582 = pneg %p244
        %p583 = pneg %p268
        %p584 = pneg %p265
        %p585 = pneg %p289
        %p586 = pneg %p286
        %p587 = pneg %p310
        %p588 = pneg %p307
        %p589 = pneg %p331
        %p590 = pneg %p328
        %p591 = pneg %p352
        %p592 = pneg %p349
        %p593 = pneg %p378
        %p594 = pneg %p375
        %s595 = sand.u32 %s365, 1
        %s596 = scalar_lea.sflag [#allocation5], %s595
        %s597 = sand.u32 %s365, 1
        %s598 = smul.addr %s597, 8
        %s599 = scalar_lea.vmem [#allocation15], %s598
        %v600 = vld [vmem:[%s529] sm:$0xff]
        %v601 = vld [vmem:[%s529 + $0x8] sm:$0xff]
        %v602 = vld [vmem:[%s529 + $0x10] sm:$0xff]
        %v603 = vld [vmem:[%s529 + $0x18] sm:$0xff]
        %v604 = vld [vmem:[%s529 + $0x20] sm:$0xff]
        %v605 = vld [vmem:[%s529 + $0x28] sm:$0xff]
        %v606 = vld [vmem:[#allocation6] sm:$0xff]
        %v607 = vld [vmem:[#allocation6 + $0x8] sm:$0xff]
        %v608 = vld [vmem:[#allocation6 + $0x10] sm:$0xff]
        %v609 = vld [vmem:[#allocation6 + $0x18] sm:$0xff]
        %v610 = vld [vmem:[#allocation6 + $0x20] sm:$0xff]
        %v611 = vld [vmem:[#allocation6 + $0x28] sm:$0xff]
        %v612 = vld [vmem:[#allocation6 + $0x30] sm:$0xff]
        %v613 = vld [vmem:[#allocation6 + $0x38] sm:$0xff]
        %v614 = vld [vmem:[#allocation6 + $0x40] sm:$0xff]
        %v615 = vld [vmem:[#allocation6 + $0x48] sm:$0xff]
        %v616 = vld [vmem:[#allocation6 + $0x50] sm:$0xff]
        %v617 = vld [vmem:[#allocation6 + $0x58] sm:$0xff]
        %v618 = vld [vmem:[#allocation6 + $0x60] sm:$0xff]
        %v619 = vld [vmem:[#allocation6 + $0x68] sm:$0xff]
        %v620 = vld [vmem:[#allocation6 + $0x70] sm:$0xff]
        %v621 = vld [vmem:[#allocation6 + $0x78] sm:$0xff]
        %v622 = vld [vmem:[#allocation6 + $0x80] sm:$0xff]
        %v623 = vld [vmem:[#allocation6 + $0x88] sm:$0xff]
        %v624 = vld [vmem:[#allocation6 + $0x90] sm:$0xff]
        %v625 = vld [vmem:[#allocation6 + $0x98] sm:$0xff]
        %v626 = vld [vmem:[#allocation6 + $0xa0] sm:$0xff]
        %v627 = vld [vmem:[#allocation6 + $0xa8] sm:$0xff]
        %v628 = vld [vmem:[#allocation6 + $0xb0] sm:$0xff]
        %v629 = vld [vmem:[#allocation6 + $0xb8] sm:$0xff]
        %v630 = vld [vmem:[#allocation6 + $0xc0] sm:$0xff]
        %v631 = vld [vmem:[#allocation6 + $0xc8] sm:$0xff]
        %v632 = vld [vmem:[#allocation6 + $0xd0] sm:$0xff]
        %v633 = vld [vmem:[#allocation6 + $0xd8] sm:$0xff]
        %v634 = vld [vmem:[#allocation6 + $0xe0] sm:$0xff]
        %v635 = vld [vmem:[#allocation6 + $0xe8] sm:$0xff]
        %v636 = vld [vmem:[#allocation6 + $0xf0] sm:$0xff]
        %v637 = vld [vmem:[#allocation6 + $0xf8] sm:$0xff]
        %v638 = vld [vmem:[#allocation6 + $0x100] sm:$0xff]
        %v639 = vld [vmem:[#allocation6 + $0x108] sm:$0xff]
        %v640 = vld [vmem:[#allocation6 + $0x110] sm:$0xff]
        %v641 = vld [vmem:[#allocation6 + $0x118] sm:$0xff]
        %v642 = vld [vmem:[#allocation6 + $0x120] sm:$0xff]
        %v643 = vld [vmem:[#allocation6 + $0x128] sm:$0xff]
        %v644 = vld [vmem:[#allocation6 + $0x130] sm:$0xff]
        %v645 = vld [vmem:[#allocation6 + $0x138] sm:$0xff]
        %v646 = vld [vmem:[#allocation6 + $0x140] sm:$0xff]
        %v647 = vld [vmem:[#allocation6 + $0x148] sm:$0xff]
        %v648 = vld [vmem:[#allocation6 + $0x150] sm:$0xff]
        %v649 = vld [vmem:[#allocation6 + $0x158] sm:$0xff]
        %v650 = vld [vmem:[#allocation6 + $0x160] sm:$0xff]
        %v651 = vld [vmem:[#allocation6 + $0x168] sm:$0xff]
        %v652 = vld [vmem:[#allocation6 + $0x170] sm:$0xff]
        %v653 = vld [vmem:[#allocation6 + $0x178] sm:$0xff]
        %v654 = vld [vmem:[#allocation6 + $0x180] sm:$0xff]
        %v655 = vld [vmem:[#allocation6 + $0x188] sm:$0xff]
        %v656 = vld [vmem:[#allocation6 + $0x190] sm:$0xff]
        %v657 = vld [vmem:[#allocation6 + $0x198] sm:$0xff]
        %v658 = vld [vmem:[#allocation6 + $0x1a0] sm:$0xff]
        %v659 = vld [vmem:[#allocation6 + $0x1a8] sm:$0xff]
        %v660 = vld [vmem:[#allocation6 + $0x1b0] sm:$0xff]
        %v661 = vld [vmem:[#allocation6 + $0x1b8] sm:$0xff]
        %v662 = vld [vmem:[#allocation6 + $0x1c0] sm:$0xff]
        %v663 = vld [vmem:[#allocation6 + $0x1c8] sm:$0xff]
        %v664 = vld [vmem:[#allocation6 + $0x1d0] sm:$0xff]
        %v665 = vld [vmem:[#allocation6 + $0x1d8] sm:$0xff]
        %v666 = vld [vmem:[#allocation6 + $0x1e0] sm:$0xff]
        %v667 = vld [vmem:[#allocation6 + $0x1e8] sm:$0xff]
        %v668 = vld [vmem:[#allocation6 + $0x1f0] sm:$0xff]
        %v669 = vld [vmem:[#allocation6 + $0x1f8] sm:$0xff]
        %v670 = vld [vmem:[#allocation6 + $0x200] sm:$0xff]
        %v671 = vld [vmem:[#allocation6 + $0x208] sm:$0xff]
        %v672 = vld [vmem:[#allocation6 + $0x210] sm:$0xff]
        %v673 = vld [vmem:[#allocation6 + $0x218] sm:$0xff]
        %v674 = vld [vmem:[#allocation6 + $0x220] sm:$0xff]
        %v675 = vld [vmem:[#allocation6 + $0x228] sm:$0xff]
        %v676 = vld [vmem:[#allocation6 + $0x230] sm:$0xff]
        %v677 = vld [vmem:[#allocation6 + $0x238] sm:$0xff]
        %v678 = vld [vmem:[#allocation6 + $0x240] sm:$0xff]
        %v679 = vld [vmem:[#allocation6 + $0x248] sm:$0xff]
        %v680 = vld [vmem:[#allocation6 + $0x250] sm:$0xff]
        %v681 = vld [vmem:[#allocation6 + $0x258] sm:$0xff]
        %v682 = vld [vmem:[#allocation6 + $0x260] sm:$0xff]
        %v683 = vld [vmem:[#allocation6 + $0x268] sm:$0xff]
        %v684 = vld [vmem:[#allocation6 + $0x270] sm:$0xff]
        %v685 = vld [vmem:[#allocation6 + $0x278] sm:$0xff]
        %v686 = vld [vmem:[#allocation6 + $0x280] sm:$0xff]
        %v687 = vld [vmem:[#allocation6 + $0x288] sm:$0xff]
        %v688 = vld [vmem:[#allocation6 + $0x290] sm:$0xff]
        %v689 = vld [vmem:[#allocation6 + $0x298] sm:$0xff]
        %v690 = vld [vmem:[#allocation6 + $0x2a0] sm:$0xff]
        %v691 = vld [vmem:[#allocation6 + $0x2a8] sm:$0xff]
        %v692 = vld [vmem:[#allocation6 + $0x2b0] sm:$0xff]
        %v693 = vld [vmem:[#allocation6 + $0x2b8] sm:$0xff]
        %v694 = vld [vmem:[#allocation6 + $0x2c0] sm:$0xff]
        %v695 = vld [vmem:[#allocation6 + $0x2c8] sm:$0xff]
        %v696 = vld [vmem:[#allocation6 + $0x2d0] sm:$0xff]
        %v697 = vld [vmem:[#allocation6 + $0x2d8] sm:$0xff]
        %v698 = vld [vmem:[#allocation6 + $0x2e0] sm:$0xff]
        %v699 = vld [vmem:[#allocation6 + $0x2e8] sm:$0xff]
        %v700 = vld [vmem:[#allocation6 + $0x2f0] sm:$0xff]
        %v701 = vld [vmem:[#allocation6 + $0x2f8] sm:$0xff]
        %v702 = vld [vmem:[%s2] sm:$0x1]
        %v704 = vlaneseq
        %v705 = vshrl.u32 %v704, 7
        %v706 = vsub.s32 0, %v705
        %v707 = vrot.slane %v702, %v706
        %709 = vmatprep.subr.mxu0 0.0
        %710 = vmatpush1.msra.mxu0 %v606
        %711 = vmatprep.subr.mxu0 0.0
        %712 = vmatpush1.msra.mxu0 %v607
        %713 = vmatprep.subr.mxu0 0.0
        %714 = vmatpush1.msra.mxu0 %v608
        %715 = vmatprep.subr.mxu0 0.0
        %716 = vmatpush1.msra.mxu0 %v609
        %717 = vmatprep.subr.mxu0 0.0
        %718 = vmatpush1.msra.mxu0 %v610
        %719 = vmatprep.subr.mxu0 0.0
        %720 = vmatpush1.msra.mxu0 %v611
        %721 = vmatprep.subr.mxu0 0.0
        %722 = vmatpush1.msra.mxu0 %v612
        %723 = vmatprep.subr.mxu0 0.0
        %724 = vmatpush1.msra.mxu0 %v613
        %725 = vmatprep.subr.mxu0 0.0
        %726 = vmatpush1.msra.mxu0 %v614
        %727 = vmatprep.subr.mxu0 0.0
        %728 = vmatpush1.msra.mxu0 %v615
        %729 = vmatprep.subr.mxu0 0.0
        %730 = vmatpush1.msra.mxu0 %v616
        %731 = vmatprep.subr.mxu0 0.0
        %732 = vmatpush1.msra.mxu0 %v617
        %733 = vmatprep.subr.mxu0 0.0
        %734 = vmatpush1.msra.mxu0 %v618
        %735 = vmatprep.subr.mxu0 0.0
        %736 = vmatpush1.msra.mxu0 %v619
        %737 = vmatprep.subr.mxu0 0.0
        %738 = vmatpush1.msra.mxu0 %v620
        %739 = vmatprep.subr.mxu0 0.0
        %740 = vmatpush1.msra.mxu0 %v621
        %741 = vmatprep.subr.mxu0 0.0
        %742 = vmatpush1.msra.mxu0 %v622
        %743 = vmatprep.subr.mxu0 0.0
        %744 = vmatpush1.msra.mxu0 %v623
        %745 = vmatprep.subr.mxu0 0.0
        %746 = vmatpush1.msra.mxu0 %v624
        %747 = vmatprep.subr.mxu0 0.0
        %748 = vmatpush1.msra.mxu0 %v625
        %749 = vmatprep.subr.mxu0 0.0
        %750 = vmatpush1.msra.mxu0 %v626
        %751 = vmatprep.subr.mxu0 0.0
        %752 = vmatpush1.msra.mxu0 %v627
        %753 = vmatprep.subr.mxu0 0.0
        %754 = vmatpush1.msra.mxu0 %v628
        %755 = vmatprep.subr.mxu0 0.0
        %756 = vmatpush1.msra.mxu0 %v629
        %757 = vmatprep.subr.mxu0 0.0
        %758 = vmatpush1.msra.mxu0 %v630
        %759 = vmatprep.subr.mxu0 0.0
        %760 = vmatpush1.msra.mxu0 %v631
        %761 = vmatprep.subr.mxu0 0.0
        %762 = vmatpush1.msra.mxu0 %v632
        %763 = vmatprep.subr.mxu0 0.0
        %764 = vmatpush1.msra.mxu0 %v633
        %765 = vmatprep.subr.mxu0 0.0
        %766 = vmatpush1.msra.mxu0 %v634
        %767 = vmatprep.subr.mxu0 0.0
        %768 = vmatpush1.msra.mxu0 %v635
        %769 = vmatprep.subr.mxu0 0.0
        %770 = vmatpush1.msra.mxu0 %v636
        %771 = vmatprep.subr.mxu0 0.0
        %772 = vmatpush1.msra.mxu0 %v637
        %773 = vmatprep.mubr.f32.mxu0 %v601
        %774 = vmatmul.mubr.f32.gmra.mrb[0].mxu0 %v600
        %v775 = vpop.f32.mrb[0].mxu0
        %v776 = vadd.f32 %v707, %v775
        %v777 = vpop.f32.mrb[0].mxu0
        %778 = vdwg.mxu0
        %779 = vmatprep.subr.mxu0 0.0
        %780 = vmatpush1.msra.mxu0 %v638
        %781 = vmatprep.subr.mxu0 0.0
        %782 = vmatpush1.msra.mxu0 %v639
        %783 = vmatprep.subr.mxu0 0.0
        %784 = vmatpush1.msra.mxu0 %v640
        %785 = vmatprep.subr.mxu0 0.0
        %786 = vmatpush1.msra.mxu0 %v641
        %787 = vmatprep.subr.mxu0 0.0
        %788 = vmatpush1.msra.mxu0 %v642
        %789 = vmatprep.subr.mxu0 0.0
        %790 = vmatpush1.msra.mxu0 %v643
        %791 = vmatprep.subr.mxu0 0.0
        %792 = vmatpush1.msra.mxu0 %v644
        %793 = vmatprep.subr.mxu0 0.0
        %794 = vmatpush1.msra.mxu0 %v645
        %795 = vmatprep.subr.mxu0 0.0
        %796 = vmatpush1.msra.mxu0 %v646
        %797 = vmatprep.subr.mxu0 0.0
        %798 = vmatpush1.msra.mxu0 %v647
        %799 = vmatprep.subr.mxu0 0.0
        %800 = vmatpush1.msra.mxu0 %v648
        %801 = vmatprep.subr.mxu0 0.0
        %802 = vmatpush1.msra.mxu0 %v649
        %803 = vmatprep.subr.mxu0 0.0
        %804 = vmatpush1.msra.mxu0 %v650
        %805 = vmatprep.subr.mxu0 0.0
        %806 = vmatpush1.msra.mxu0 %v651
        %807 = vmatprep.subr.mxu0 0.0
        %808 = vmatpush1.msra.mxu0 %v652
        %809 = vmatprep.subr.mxu0 0.0
        %810 = vmatpush1.msra.mxu0 %v653
        %811 = vmatprep.subr.mxu0 0.0
        %812 = vmatpush1.msra.mxu0 %v654
        %813 = vmatprep.subr.mxu0 0.0
        %814 = vmatpush1.msra.mxu0 %v655
        %815 = vmatprep.subr.mxu0 0.0
        %816 = vmatpush1.msra.mxu0 %v656
        %817 = vmatprep.subr.mxu0 0.0
        %818 = vmatpush1.msra.mxu0 %v657
        %819 = vmatprep.subr.mxu0 0.0
        %820 = vmatpush1.msra.mxu0 %v658
        %821 = vmatprep.subr.mxu0 0.0
        %822 = vmatpush1.msra.mxu0 %v659
        %823 = vmatprep.subr.mxu0 0.0
        %824 = vmatpush1.msra.mxu0 %v660
        %825 = vmatprep.subr.mxu0 0.0
        %826 = vmatpush1.msra.mxu0 %v661
        %827 = vmatprep.subr.mxu0 0.0
        %828 = vmatpush1.msra.mxu0 %v662
        %829 = vmatprep.subr.mxu0 0.0
        %830 = vmatpush1.msra.mxu0 %v663
        %831 = vmatprep.subr.mxu0 0.0
        %832 = vmatpush1.msra.mxu0 %v664
        %833 = vmatprep.subr.mxu0 0.0
        %834 = vmatpush1.msra.mxu0 %v665
        %835 = vmatprep.subr.mxu0 0.0
        %836 = vmatpush1.msra.mxu0 %v666
        %837 = vmatprep.subr.mxu0 0.0
        %838 = vmatpush1.msra.mxu0 %v667
        %839 = vmatprep.subr.mxu0 0.0
        %840 = vmatpush1.msra.mxu0 %v668
        %841 = vmatprep.subr.mxu0 0.0
        %842 = vmatpush1.msra.mxu0 %v669
        %843 = vmatprep.mubr.f32.mxu0 %v603
        %844 = vmatmul.mubr.f32.gmra.mrb[0].mxu0 %v602
        %v845 = vpop.f32.mrb[0].mxu0
        %v846 = vadd.f32 %v776, %v845
        %v847 = vpop.f32.mrb[0].mxu0
        %848 = vdwg.mxu0
        %849 = vmatprep.subr.mxu0 0.0
        %850 = vmatpush1.msra.mxu0 %v670
        %851 = vmatprep.subr.mxu0 0.0
        %852 = vmatpush1.msra.mxu0 %v671
        %853 = vmatprep.subr.mxu0 0.0
        %854 = vmatpush1.msra.mxu0 %v672
        %855 = vmatprep.subr.mxu0 0.0
        %856 = vmatpush1.msra.mxu0 %v673
        %857 = vmatprep.subr.mxu0 0.0
        %858 = vmatpush1.msra.mxu0 %v674
        %859 = vmatprep.subr.mxu0 0.0
        %860 = vmatpush1.msra.mxu0 %v675
        %861 = vmatprep.subr.mxu0 0.0
        %862 = vmatpush1.msra.mxu0 %v676
        %863 = vmatprep.subr.mxu0 0.0
        %864 = vmatpush1.msra.mxu0 %v677
        %865 = vmatprep.subr.mxu0 0.0
        %866 = vmatpush1.msra.mxu0 %v678
        %867 = vmatprep.subr.mxu0 0.0
        %868 = vmatpush1.msra.mxu0 %v679
        %869 = vmatprep.subr.mxu0 0.0
        %870 = vmatpush1.msra.mxu0 %v680
        %871 = vmatprep.subr.mxu0 0.0
        %872 = vmatpush1.msra.mxu0 %v681
        %873 = vmatprep.subr.mxu0 0.0
        %874 = vmatpush1.msra.mxu0 %v682
        %875 = vmatprep.subr.mxu0 0.0
        %876 = vmatpush1.msra.mxu0 %v683
        %877 = vmatprep.subr.mxu0 0.0
        %878 = vmatpush1.msra.mxu0 %v684
        %879 = vmatprep.subr.mxu0 0.0
        %880 = vmatpush1.msra.mxu0 %v685
        %881 = vmatprep.subr.mxu0 0.0
        %882 = vmatpush1.msra.mxu0 %v686
        %883 = vmatprep.subr.mxu0 0.0
        %884 = vmatpush1.msra.mxu0 %v687
        %885 = vmatprep.subr.mxu0 0.0
        %886 = vmatpush1.msra.mxu0 %v688
        %887 = vmatprep.subr.mxu0 0.0
        %888 = vmatpush1.msra.mxu0 %v689
        %889 = vmatprep.subr.mxu0 0.0
        %890 = vmatpush1.msra.mxu0 %v690
        %891 = vmatprep.subr.mxu0 0.0
        %892 = vmatpush1.msra.mxu0 %v691
        %893 = vmatprep.subr.mxu0 0.0
        %894 = vmatpush1.msra.mxu0 %v692
        %895 = vmatprep.subr.mxu0 0.0
        %896 = vmatpush1.msra.mxu0 %v693
        %897 = vmatprep.subr.mxu0 0.0
        %898 = vmatpush1.msra.mxu0 %v694
        %899 = vmatprep.subr.mxu0 0.0
        %900 = vmatpush1.msra.mxu0 %v695
        %901 = vmatprep.subr.mxu0 0.0
        %902 = vmatpush1.msra.mxu0 %v696
        %903 = vmatprep.subr.mxu0 0.0
        %904 = vmatpush1.msra.mxu0 %v697
        %905 = vmatprep.subr.mxu0 0.0
        %906 = vmatpush1.msra.mxu0 %v698
        %907 = vmatprep.subr.mxu0 0.0
        %908 = vmatpush1.msra.mxu0 %v699
        %909 = vmatprep.subr.mxu0 0.0
        %910 = vmatpush1.msra.mxu0 %v700
        %911 = vmatprep.subr.mxu0 0.0
        %912 = vmatpush1.msra.mxu0 %v701
        %913 = vmatprep.mubr.f32.mxu0 %v605
        %914 = vmatmul.mubr.f32.gmra.mrb[0].mxu0 %v604
        %v915 = vpop.f32.mrb[0].mxu0
        %v916 = vadd.f32 %v846, %v915
        %v917 = vpop.f32.mrb[0].mxu0
        %918 = vdwg.mxu0
        %v919 = vmax.f32 %v916, 0.0
        %v920 = vld [vmem:[#allocation8] sm:$0xff]
        %v921 = vld [vmem:[#allocation8 + $0x8] sm:$0xff]
        %v922 = vld [vmem:[#allocation8 + $0x10] sm:$0xff]
        %v923 = vld [vmem:[#allocation8 + $0x18] sm:$0xff]
        %v924 = vld [vmem:[#allocation8 + $0x20] sm:$0xff]
        %v925 = vld [vmem:[#allocation8 + $0x28] sm:$0xff]
        %v926 = vld [vmem:[#allocation8 + $0x30] sm:$0xff]
        %v927 = vld [vmem:[#allocation8 + $0x38] sm:$0xff]
        %v928 = vld [vmem:[#allocation8 + $0x40] sm:$0xff]
        %v929 = vld [vmem:[#allocation8 + $0x48] sm:$0xff]
        %v930 = vld [vmem:[#allocation8 + $0x50] sm:$0xff]
        %v931 = vld [vmem:[#allocation8 + $0x58] sm:$0xff]
        %v932 = vld [vmem:[#allocation8 + $0x60] sm:$0xff]
        %v933 = vld [vmem:[#allocation8 + $0x68] sm:$0xff]
        %v934 = vld [vmem:[#allocation8 + $0x70] sm:$0xff]
        %v935 = vld [vmem:[#allocation8 + $0x78] sm:$0xff]
        %v936 = vld [vmem:[%s4] sm:$0x1]
        %v938 = vlaneseq
        %v939 = vshrl.u32 %v938, 7
        %v940 = vsub.s32 0, %v939
        %v941 = vrot.slane %v936, %v940
        %943 = vmatprep.subr.mxu0 0.0
        %944 = vmatpush1.msra.mxu0 %v920
        %945 = vmatprep.subr.mxu0 0.0
        %946 = vmatpush1.msra.mxu0 %v921
        %947 = vmatprep.subr.mxu0 0.0
        %948 = vmatpush1.msra.mxu0 %v922
        %949 = vmatprep.subr.mxu0 0.0
        %950 = vmatpush1.msra.mxu0 %v923
        %951 = vmatprep.subr.mxu0 0.0
        %952 = vmatpush1.msra.mxu0 %v924
        %953 = vmatprep.subr.mxu0 0.0
        %954 = vmatpush1.msra.mxu0 %v925
        %955 = vmatprep.subr.mxu0 0.0
        %956 = vmatpush1.msra.mxu0 %v926
        %957 = vmatprep.subr.mxu0 0.0
        %958 = vmatpush1.msra.mxu0 %v927
        %959 = vmatprep.subr.mxu0 0.0
        %960 = vmatpush1.msra.mxu0 %v928
        %961 = vmatprep.subr.mxu0 0.0
        %962 = vmatpush1.msra.mxu0 %v929
        %963 = vmatprep.subr.mxu0 0.0
        %964 = vmatpush1.msra.mxu0 %v930
        %965 = vmatprep.subr.mxu0 0.0
        %966 = vmatpush1.msra.mxu0 %v931
        %967 = vmatprep.subr.mxu0 0.0
        %968 = vmatpush1.msra.mxu0 %v932
        %969 = vmatprep.subr.mxu0 0.0
        %970 = vmatpush1.msra.mxu0 %v933
        %971 = vmatprep.subr.mxu0 0.0
        %972 = vmatpush1.msra.mxu0 %v934
        %973 = vmatprep.subr.mxu0 0.0
        %974 = vmatpush1.msra.mxu0 %v935
        %975 = vmatprep.subr.mxu0 0.0
        %976 = vmatpush1.msra.mxu0 0.0
        %977 = vmatprep.subr.mxu0 0.0
        %978 = vmatpush1.msra.mxu0 0.0
        %979 = vmatprep.subr.mxu0 0.0
        %980 = vmatpush1.msra.mxu0 0.0
        %981 = vmatprep.subr.mxu0 0.0
        %982 = vmatpush1.msra.mxu0 0.0
        %983 = vmatprep.subr.mxu0 0.0
        %984 = vmatpush1.msra.mxu0 0.0
        %985 = vmatprep.subr.mxu0 0.0
        %986 = vmatpush1.msra.mxu0 0.0
        %987 = vmatprep.subr.mxu0 0.0
        %988 = vmatpush1.msra.mxu0 0.0
        %989 = vmatprep.subr.mxu0 0.0
        %990 = vmatpush1.msra.mxu0 0.0
        %991 = vmatprep.subr.mxu0 0.0
        %992 = vmatpush1.msra.mxu0 0.0
        %993 = vmatprep.subr.mxu0 0.0
        %994 = vmatpush1.msra.mxu0 0.0
        %995 = vmatprep.subr.mxu0 0.0
        %996 = vmatpush1.msra.mxu0 0.0
        %997 = vmatprep.subr.mxu0 0.0
        %998 = vmatpush1.msra.mxu0 0.0
        %999 = vmatprep.subr.mxu0 0.0
        %1000 = vmatpush1.msra.mxu0 0.0
        %1001 = vmatprep.subr.mxu0 0.0
        %1002 = vmatpush1.msra.mxu0 0.0
        %1003 = vmatprep.subr.mxu0 0.0
        %1004 = vmatpush1.msra.mxu0 0.0
        %1005 = vmatprep.subr.mxu0 0.0
        %1006 = vmatpush1.msra.mxu0 0.0
        %1007 = vmatprep.mubr.f32.mxu0 0.0
        %1008 = vmatmul.mubr.f32.gmra.mrb[0].mxu0 %v919
        %v1009 = vpop.f32.mrb[0].mxu0
        %v1010 = vadd.f32 %v941, %v1009
        %v1011 = vpop.f32.mrb[0].mxu0
        %1012 = vdwg.mxu0
        %v1013 = vmax.f32 %v1010, 0.0
        %v1014 = vld [vmem:[#allocation9] sm:$0xff]
        %v1015 = vld [vmem:[#allocation9 + $0x8] sm:$0xff]
        %v1016 = vld [vmem:[#allocation9 + $0x10] sm:$0xff]
        %v1017 = vld [vmem:[#allocation9 + $0x18] sm:$0xff]
        %v1018 = vld [vmem:[#allocation9 + $0x20] sm:$0xff]
        %v1019 = vld [vmem:[#allocation9 + $0x28] sm:$0xff]
        %v1020 = vld [vmem:[#allocation9 + $0x30] sm:$0xff]
        %v1021 = vld [vmem:[#allocation9 + $0x38] sm:$0xff]
        %v1022 = vld [vmem:[#allocation9 + $0x40] sm:$0xff]
        %v1023 = vld [vmem:[#allocation9 + $0x48] sm:$0xff]
        %v1024 = vld [vmem:[#allocation9 + $0x50] sm:$0xff]
        %v1025 = vld [vmem:[#allocation9 + $0x58] sm:$0xff]
        %v1026 = vld [vmem:[#allocation9 + $0x60] sm:$0xff]
        %v1027 = vld [vmem:[#allocation9 + $0x68] sm:$0xff]
        %v1028 = vld [vmem:[#allocation9 + $0x70] sm:$0xff]
        %v1029 = vld [vmem:[#allocation9 + $0x78] sm:$0xff]
        %v1030 = vld [vmem:[%s6] sm:$0x1]
        %v1032 = vlaneseq
        %v1033 = vshrl.u32 %v1032, 7
        %v1034 = vsub.s32 0, %v1033
        %v1035 = vrot.slane %v1030, %v1034
        %1037 = vmatprep.subr.mxu0 0.0
        %1038 = vmatpush1.msra.mxu0 %v1014
        %1039 = vmatprep.subr.mxu0 0.0
        %1040 = vmatpush1.msra.mxu0 %v1015
        %1041 = vmatprep.subr.mxu0 0.0
        %1042 = vmatpush1.msra.mxu0 %v1016
        %1043 = vmatprep.subr.mxu0 0.0
        %1044 = vmatpush1.msra.mxu0 %v1017
        %1045 = vmatprep.subr.mxu0 0.0
        %1046 = vmatpush1.msra.mxu0 %v1018
        %1047 = vmatprep.subr.mxu0 0.0
        %1048 = vmatpush1.msra.mxu0 %v1019
        %1049 = vmatprep.subr.mxu0 0.0
        %1050 = vmatpush1.msra.mxu0 %v1020
        %1051 = vmatprep.subr.mxu0 0.0
        %1052 = vmatpush1.msra.mxu0 %v1021
        %1053 = vmatprep.subr.mxu0 0.0
        %1054 = vmatpush1.msra.mxu0 %v1022
        %1055 = vmatprep.subr.mxu0 0.0
        %1056 = vmatpush1.msra.mxu0 %v1023
        %1057 = vmatprep.subr.mxu0 0.0
        %1058 = vmatpush1.msra.mxu0 %v1024
        %1059 = vmatprep.subr.mxu0 0.0
        %1060 = vmatpush1.msra.mxu0 %v1025
        %1061 = vmatprep.subr.mxu0 0.0
        %1062 = vmatpush1.msra.mxu0 %v1026
        %1063 = vmatprep.subr.mxu0 0.0
        %1064 = vmatpush1.msra.mxu0 %v1027
        %1065 = vmatprep.subr.mxu0 0.0
        %1066 = vmatpush1.msra.mxu0 %v1028
        %1067 = vmatprep.subr.mxu0 0.0
        %1068 = vmatpush1.msra.mxu0 %v1029
        %1069 = vmatprep.subr.mxu0 0.0
        %1070 = vmatpush1.msra.mxu0 0.0
        %1071 = vmatprep.subr.mxu0 0.0
        %1072 = vmatpush1.msra.mxu0 0.0
        %1073 = vmatprep.subr.mxu0 0.0
        %1074 = vmatpush1.msra.mxu0 0.0
        %1075 = vmatprep.subr.mxu0 0.0
        %1076 = vmatpush1.msra.mxu0 0.0
        %1077 = vmatprep.subr.mxu0 0.0
        %1078 = vmatpush1.msra.mxu0 0.0
        %1079 = vmatprep.subr.mxu0 0.0
        %1080 = vmatpush1.msra.mxu0 0.0
        %1081 = vmatprep.subr.mxu0 0.0
        %1082 = vmatpush1.msra.mxu0 0.0
        %1083 = vmatprep.subr.mxu0 0.0
        %1084 = vmatpush1.msra.mxu0 0.0
        %1085 = vmatprep.subr.mxu0 0.0
        %1086 = vmatpush1.msra.mxu0 0.0
        %1087 = vmatprep.subr.mxu0 0.0
        %1088 = vmatpush1.msra.mxu0 0.0
        %1089 = vmatprep.subr.mxu0 0.0
        %1090 = vmatpush1.msra.mxu0 0.0
        %1091 = vmatprep.subr.mxu0 0.0
        %1092 = vmatpush1.msra.mxu0 0.0
        %1093 = vmatprep.subr.mxu0 0.0
        %1094 = vmatpush1.msra.mxu0 0.0
        %1095 = vmatprep.subr.mxu0 0.0
        %1096 = vmatpush1.msra.mxu0 0.0
        %1097 = vmatprep.subr.mxu0 0.0
        %1098 = vmatpush1.msra.mxu0 0.0
        %1099 = vmatprep.subr.mxu0 0.0
        %1100 = vmatpush1.msra.mxu0 0.0
        %1101 = vmatprep.mubr.f32.mxu0 0.0
        %1102 = vmatmul.mubr.f32.gmra.mrb[0].mxu0 %v1013
        %v1103 = vpop.f32.mrb[0].mxu0
        %v1104 = vadd.f32 %v1035, %v1103
        %v1105 = vpop.f32.mrb[0].mxu0
        %1106 = vdwg.mxu0
        %v1107 = vmax.f32 %v1104, 0.0
        %v1108 = vld [vmem:[#allocation11] sm:$0xff]
        %v1109 = vld [vmem:[#allocation11 + $0x8] sm:$0xff]
        %v1110 = vld [vmem:[#allocation11 + $0x10] sm:$0xff]
        %v1111 = vld [vmem:[#allocation11 + $0x18] sm:$0xff]
        %v1112 = vld [vmem:[#allocation11 + $0x20] sm:$0xff]
        %v1113 = vld [vmem:[#allocation11 + $0x28] sm:$0xff]
        %v1114 = vld [vmem:[#allocation11 + $0x30] sm:$0xff]
        %v1115 = vld [vmem:[#allocation11 + $0x38] sm:$0xff]
        %v1116 = vld [vmem:[#allocation11 + $0x40] sm:$0xff]
        %v1117 = vld [vmem:[#allocation11 + $0x48] sm:$0xff]
        %v1118 = vld [vmem:[#allocation11 + $0x50] sm:$0xff]
        %v1119 = vld [vmem:[#allocation11 + $0x58] sm:$0xff]
        %v1120 = vld [vmem:[#allocation11 + $0x60] sm:$0xff]
        %v1121 = vld [vmem:[#allocation11 + $0x68] sm:$0xff]
        %v1122 = vld [vmem:[#allocation11 + $0x70] sm:$0xff]
        %v1123 = vld [vmem:[#allocation11 + $0x78] sm:$0xff]
        %v1124 = vld [vmem:[%s8] sm:$0x1]
        %v1126 = vlaneseq
        %v1127 = vshrl.u32 %v1126, 7
        %v1128 = vsub.s32 0, %v1127
        %v1129 = vrot.slane %v1124, %v1128
        %1131 = vmatprep.subr.mxu0 0.0
        %1132 = vmatpush1.msra.mxu0 %v1108
        %1133 = vmatprep.subr.mxu0 0.0
        %1134 = vmatpush1.msra.mxu0 %v1109
        %1135 = vmatprep.subr.mxu0 0.0
        %1136 = vmatpush1.msra.mxu0 %v1110
        %1137 = vmatprep.subr.mxu0 0.0
        %1138 = vmatpush1.msra.mxu0 %v1111
        %1139 = vmatprep.subr.mxu0 0.0
        %1140 = vmatpush1.msra.mxu0 %v1112
        %1141 = vmatprep.subr.mxu0 0.0
        %1142 = vmatpush1.msra.mxu0 %v1113
        %1143 = vmatprep.subr.mxu0 0.0
        %1144 = vmatpush1.msra.mxu0 %v1114
        %1145 = vmatprep.subr.mxu0 0.0
        %1146 = vmatpush1.msra.mxu0 %v1115
        %1147 = vmatprep.subr.mxu0 0.0
        %1148 = vmatpush1.msra.mxu0 %v1116
        %1149 = vmatprep.subr.mxu0 0.0
        %1150 = vmatpush1.msra.mxu0 %v1117
        %1151 = vmatprep.subr.mxu0 0.0
        %1152 = vmatpush1.msra.mxu0 %v1118
        %1153 = vmatprep.subr.mxu0 0.0
        %1154 = vmatpush1.msra.mxu0 %v1119
        %1155 = vmatprep.subr.mxu0 0.0
        %1156 = vmatpush1.msra.mxu0 %v1120
        %1157 = vmatprep.subr.mxu0 0.0
        %1158 = vmatpush1.msra.mxu0 %v1121
        %1159 = vmatprep.subr.mxu0 0.0
        %1160 = vmatpush1.msra.mxu0 %v1122
        %1161 = vmatprep.subr.mxu0 0.0
        %1162 = vmatpush1.msra.mxu0 %v1123
        %1163 = vmatprep.subr.mxu0 0.0
        %1164 = vmatpush1.msra.mxu0 0.0
        %1165 = vmatprep.subr.mxu0 0.0
        %1166 = vmatpush1.msra.mxu0 0.0
        %1167 = vmatprep.subr.mxu0 0.0
        %1168 = vmatpush1.msra.mxu0 0.0
        %1169 = vmatprep.subr.mxu0 0.0
        %1170 = vmatpush1.msra.mxu0 0.0
        %1171 = vmatprep.subr.mxu0 0.0
        %1172 = vmatpush1.msra.mxu0 0.0
        %1173 = vmatprep.subr.mxu0 0.0
        %1174 = vmatpush1.msra.mxu0 0.0
        %1175 = vmatprep.subr.mxu0 0.0
        %1176 = vmatpush1.msra.mxu0 0.0
        %1177 = vmatprep.subr.mxu0 0.0
        %1178 = vmatpush1.msra.mxu0 0.0
        %1179 = vmatprep.subr.mxu0 0.0
        %1180 = vmatpush1.msra.mxu0 0.0
        %1181 = vmatprep.subr.mxu0 0.0
        %1182 = vmatpush1.msra.mxu0 0.0
        %1183 = vmatprep.subr.mxu0 0.0
        %1184 = vmatpush1.msra.mxu0 0.0
        %1185 = vmatprep.subr.mxu0 0.0
        %1186 = vmatpush1.msra.mxu0 0.0
        %1187 = vmatprep.subr.mxu0 0.0
        %1188 = vmatpush1.msra.mxu0 0.0
        %1189 = vmatprep.subr.mxu0 0.0
        %1190 = vmatpush1.msra.mxu0 0.0
        %1191 = vmatprep.subr.mxu0 0.0
        %1192 = vmatpush1.msra.mxu0 0.0
        %1193 = vmatprep.subr.mxu0 0.0
        %1194 = vmatpush1.msra.mxu0 0.0
        %1195 = vmatprep.mubr.f32.mxu0 0.0
        %1196 = vmatmul.mubr.f32.gmra.mrb[0].mxu0 %v1107
        %v1197 = vpop.f32.mrb[0].mxu0
        %v1198 = vadd.f32 %v1129, %v1197
        %v1199 = vpop.f32.mrb[0].mxu0
        %1200 = vdwg.mxu0
        %v1201 = vmax.f32 %v1198, 0.0
        %v1202 = vld [vmem:[#allocation12] sm:$0xff]
        %v1203 = vld [vmem:[#allocation12 + $0x8] sm:$0xff]
        %v1204 = vld [vmem:[#allocation12 + $0x10] sm:$0xff]
        %v1205 = vld [vmem:[#allocation12 + $0x18] sm:$0xff]
        %v1206 = vld [vmem:[#allocation12 + $0x20] sm:$0xff]
        %v1207 = vld [vmem:[#allocation12 + $0x28] sm:$0xff]
        %v1208 = vld [vmem:[#allocation12 + $0x30] sm:$0xff]
        %v1209 = vld [vmem:[#allocation12 + $0x38] sm:$0xff]
        %v1210 = vld [vmem:[#allocation12 + $0x40] sm:$0xff]
        %v1211 = vld [vmem:[#allocation12 + $0x48] sm:$0xff]
        %v1212 = vld [vmem:[#allocation12 + $0x50] sm:$0xff]
        %v1213 = vld [vmem:[#allocation12 + $0x58] sm:$0xff]
        %v1214 = vld [vmem:[#allocation12 + $0x60] sm:$0xff]
        %v1215 = vld [vmem:[#allocation12 + $0x68] sm:$0xff]
        %v1216 = vld [vmem:[#allocation12 + $0x70] sm:$0xff]
        %v1217 = vld [vmem:[#allocation12 + $0x78] sm:$0xff]
        %v1218 = vld [vmem:[%s10] sm:$0x1]
        %v1220 = vlaneseq
        %v1221 = vshrl.u32 %v1220, 7
        %v1222 = vsub.s32 0, %v1221
        %v1223 = vrot.slane %v1218, %v1222
        %1225 = vmatprep.subr.mxu0 0.0
        %1226 = vmatpush1.msra.mxu0 %v1202
        %1227 = vmatprep.subr.mxu0 0.0
        %1228 = vmatpush1.msra.mxu0 %v1203
        %1229 = vmatprep.subr.mxu0 0.0
        %1230 = vmatpush1.msra.mxu0 %v1204
        %1231 = vmatprep.subr.mxu0 0.0
        %1232 = vmatpush1.msra.mxu0 %v1205
        %1233 = vmatprep.subr.mxu0 0.0
        %1234 = vmatpush1.msra.mxu0 %v1206
        %1235 = vmatprep.subr.mxu0 0.0
        %1236 = vmatpush1.msra.mxu0 %v1207
        %1237 = vmatprep.subr.mxu0 0.0
        %1238 = vmatpush1.msra.mxu0 %v1208
        %1239 = vmatprep.subr.mxu0 0.0
        %1240 = vmatpush1.msra.mxu0 %v1209
        %1241 = vmatprep.subr.mxu0 0.0
        %1242 = vmatpush1.msra.mxu0 %v1210
        %1243 = vmatprep.subr.mxu0 0.0
        %1244 = vmatpush1.msra.mxu0 %v1211
        %1245 = vmatprep.subr.mxu0 0.0
        %1246 = vmatpush1.msra.mxu0 %v1212
        %1247 = vmatprep.subr.mxu0 0.0
        %1248 = vmatpush1.msra.mxu0 %v1213
        %1249 = vmatprep.subr.mxu0 0.0
        %1250 = vmatpush1.msra.mxu0 %v1214
        %1251 = vmatprep.subr.mxu0 0.0
        %1252 = vmatpush1.msra.mxu0 %v1215
        %1253 = vmatprep.subr.mxu0 0.0
        %1254 = vmatpush1.msra.mxu0 %v1216
        %1255 = vmatprep.subr.mxu0 0.0
        %1256 = vmatpush1.msra.mxu0 %v1217
        %1257 = vmatprep.subr.mxu0 0.0
        %1258 = vmatpush1.msra.mxu0 0.0
        %1259 = vmatprep.subr.mxu0 0.0
        %1260 = vmatpush1.msra.mxu0 0.0
        %1261 = vmatprep.subr.mxu0 0.0
        %1262 = vmatpush1.msra.mxu0 0.0
        %1263 = vmatprep.subr.mxu0 0.0
        %1264 = vmatpush1.msra.mxu0 0.0
        %1265 = vmatprep.subr.mxu0 0.0
        %1266 = vmatpush1.msra.mxu0 0.0
        %1267 = vmatprep.subr.mxu0 0.0
        %1268 = vmatpush1.msra.mxu0 0.0
        %1269 = vmatprep.subr.mxu0 0.0
        %1270 = vmatpush1.msra.mxu0 0.0
        %1271 = vmatprep.subr.mxu0 0.0
        %1272 = vmatpush1.msra.mxu0 0.0
        %1273 = vmatprep.subr.mxu0 0.0
        %1274 = vmatpush1.msra.mxu0 0.0
        %1275 = vmatprep.subr.mxu0 0.0
        %1276 = vmatpush1.msra.mxu0 0.0
        %1277 = vmatprep.subr.mxu0 0.0
        %1278 = vmatpush1.msra.mxu0 0.0
        %1279 = vmatprep.subr.mxu0 0.0
        %1280 = vmatpush1.msra.mxu0 0.0
        %1281 = vmatprep.subr.mxu0 0.0
        %1282 = vmatpush1.msra.mxu0 0.0
        %1283 = vmatprep.subr.mxu0 0.0
        %1284 = vmatpush1.msra.mxu0 0.0
        %1285 = vmatprep.subr.mxu0 0.0
        %1286 = vmatpush1.msra.mxu0 0.0
        %1287 = vmatprep.subr.mxu0 0.0
        %1288 = vmatpush1.msra.mxu0 0.0
        %1289 = vmatprep.mubr.f32.mxu0 0.0
        %1290 = vmatmul.mubr.f32.gmra.mrb[0].mxu0 %v1201
        %v1291 = vpop.f32.mrb[0].mxu0
        %v1292 = vadd.f32 %v1223, %v1291
        %v1293 = vpop.f32.mrb[0].mxu0
        %1294 = vdwg.mxu0
        %v1295 = vmax.f32 %v1292, 0.0
        %v1296 = vld [vmem:[#allocation14] sm:$0xff]
        %v1297 = vld [vmem:[#allocation14 + $0x8] sm:$0xff]
        %v1298 = vld [vmem:[#allocation14 + $0x10] sm:$0xff]
        %v1299 = vld [vmem:[#allocation14 + $0x18] sm:$0xff]
        %v1300 = vld [vmem:[#allocation14 + $0x20] sm:$0xff]
        %v1301 = vld [vmem:[#allocation14 + $0x28] sm:$0xff]
        %v1302 = vld [vmem:[#allocation14 + $0x30] sm:$0xff]
        %v1303 = vld [vmem:[#allocation14 + $0x38] sm:$0xff]
        %v1304 = vld [vmem:[#allocation14 + $0x40] sm:$0xff]
        %v1305 = vld [vmem:[#allocation14 + $0x48] sm:$0xff]
        %v1306 = vld [vmem:[#allocation14 + $0x50] sm:$0xff]
        %v1307 = vld [vmem:[#allocation14 + $0x58] sm:$0xff]
        %v1308 = vld [vmem:[#allocation14 + $0x60] sm:$0xff]
        %v1309 = vld [vmem:[#allocation14 + $0x68] sm:$0xff]
        %v1310 = vld [vmem:[#allocation14 + $0x70] sm:$0xff]
        %v1311 = vld [vmem:[#allocation14 + $0x78] sm:$0xff]
        %v1312 = vld [vmem:[%s12] sm:$0x1]
        %v1314 = vlaneseq
        %v1315 = vshrl.u32 %v1314, 7
        %v1316 = vsub.s32 0, %v1315
        %v1317 = vrot.slane %v1312, %v1316
        %1319 = vmatprep.subr.mxu0 0.0
        %1320 = vmatpush1.msra.mxu0 %v1296
        %1321 = vmatprep.subr.mxu0 0.0
        %1322 = vmatpush1.msra.mxu0 %v1297
        %1323 = vmatprep.subr.mxu0 0.0
        %1324 = vmatpush1.msra.mxu0 %v1298
        %1325 = vmatprep.subr.mxu0 0.0
        %1326 = vmatpush1.msra.mxu0 %v1299
        %1327 = vmatprep.subr.mxu0 0.0
        %1328 = vmatpush1.msra.mxu0 %v1300
        %1329 = vmatprep.subr.mxu0 0.0
        %1330 = vmatpush1.msra.mxu0 %v1301
        %1331 = vmatprep.subr.mxu0 0.0
        %1332 = vmatpush1.msra.mxu0 %v1302
        %1333 = vmatprep.subr.mxu0 0.0
        %1334 = vmatpush1.msra.mxu0 %v1303
        %1335 = vmatprep.subr.mxu0 0.0
        %1336 = vmatpush1.msra.mxu0 %v1304
        %1337 = vmatprep.subr.mxu0 0.0
        %1338 = vmatpush1.msra.mxu0 %v1305
        %1339 = vmatprep.subr.mxu0 0.0
        %1340 = vmatpush1.msra.mxu0 %v1306
        %1341 = vmatprep.subr.mxu0 0.0
        %1342 = vmatpush1.msra.mxu0 %v1307
        %1343 = vmatprep.subr.mxu0 0.0
        %1344 = vmatpush1.msra.mxu0 %v1308
        %1345 = vmatprep.subr.mxu0 0.0
        %1346 = vmatpush1.msra.mxu0 %v1309
        %1347 = vmatprep.subr.mxu0 0.0
        %1348 = vmatpush1.msra.mxu0 %v1310
        %1349 = vmatprep.subr.mxu0 0.0
        %1350 = vmatpush1.msra.mxu0 %v1311
        %1351 = vmatprep.subr.mxu0 0.0
        %1352 = vmatpush1.msra.mxu0 0.0
        %1353 = vmatprep.subr.mxu0 0.0
        %1354 = vmatpush1.msra.mxu0 0.0
        %1355 = vmatprep.subr.mxu0 0.0
        %1356 = vmatpush1.msra.mxu0 0.0
        %1357 = vmatprep.subr.mxu0 0.0
        %1358 = vmatpush1.msra.mxu0 0.0
        %1359 = vmatprep.subr.mxu0 0.0
        %1360 = vmatpush1.msra.mxu0 0.0
        %1361 = vmatprep.subr.mxu0 0.0
        %1362 = vmatpush1.msra.mxu0 0.0
        %1363 = vmatprep.subr.mxu0 0.0
        %1364 = vmatpush1.msra.mxu0 0.0
        %1365 = vmatprep.subr.mxu0 0.0
        %1366 = vmatpush1.msra.mxu0 0.0
        %1367 = vmatprep.subr.mxu0 0.0
        %1368 = vmatpush1.msra.mxu0 0.0
        %1369 = vmatprep.subr.mxu0 0.0
        %1370 = vmatpush1.msra.mxu0 0.0
        %1371 = vmatprep.subr.mxu0 0.0
        %1372 = vmatpush1.msra.mxu0 0.0
        %1373 = vmatprep.subr.mxu0 0.0
        %1374 = vmatpush1.msra.mxu0 0.0
        %1375 = vmatprep.subr.mxu0 0.0
        %1376 = vmatpush1.msra.mxu0 0.0
        %1377 = vmatprep.subr.mxu0 0.0
        %1378 = vmatpush1.msra.mxu0 0.0
        %1379 = vmatprep.subr.mxu0 0.0
        %1380 = vmatpush1.msra.mxu0 0.0
        %1381 = vmatprep.subr.mxu0 0.0
        %1382 = vmatpush1.msra.mxu0 0.0
        %1383 = vmatprep.mubr.f32.mxu0 0.0
        %1384 = vmatmul.mubr.f32.gmra.mrb[0].mxu0 %v1295
        %v1385 = vpop.f32.mrb[0].mxu0
        %v1386 = vadd.f32 %v1317, %v1385
        %v1387 = vpop.f32.mrb[0].mxu0
        %1388 = vdwg.mxu0
        %v1389 = vmax.f32 %v1386, 0.0
        %v1390 = vld [vmem:[%s13] sm:$0x1]
        %v1392 = vlaneseq
        %v1393 = vshrl.u32 %v1392, 7
        %v1394 = vsub.s32 0, %v1393
        %v1395 = vrot.slane %v1390, %v1394
        %v1397 = vmul.f32 %v1389, %v1395
        %1398 = vadd.xlane.f32.xlu0 %v1397
        %v1399 = vpop.xlane.xlu0 %1398
        %v1400 = vld [vmem:[#allocation2] sm:$0x1]
        %v1402 = vlaneseq
        %v1403 = vshrl.u32 %v1402, 7
        %v1404 = vsub.s32 0, %v1403
        %v1405 = vrot.slane %v1400, %v1404
        %v1407 = vadd.f32 %v1399, %v1405
        %v1408 = vlaneseq
        %v1409 = vand.u32 %v1408, 127
        %vm1410 = vcmp.eq.s32.totalorder %v1409, 50
        %1412 = vset.pattern.permute.xlu0 0
        %1413 = vperm.xlu0 %1412, %v1407
        %v1414 = vpop.permute.xlu0 %1413
        %v1416 = vsel %vm1410, %v1414, %v1386
        %1417 = vst [vmem:[%s599] sm:$0xff] %v1416
        %s1418 = sand.u32 %s365, 1
        %s1419 = scalar_lea.sflag [#allocation5], %s1418
        %s1420 = sand.u32 %s365, 1
        %s1421 = smul.addr %s1420, 8
        %s1422 = scalar_lea.vmem [#allocation15], %s1421
        // Predicated region
        $region109: #{tpu_custom_call.1} parent=79 // pred_check
          %p1423 = pneg %p375
        $region110: #{tpu_custom_call.1} parent=79 // pred_check_branch
          %1425 = sbr.rel (%p1423) target = $region112
        $region111: #{tpu_custom_call.1} parent=79 // pred_region
          %s1427 = ssub.s32 128, 128
          %1428 = vsyncadd %s1419, %s1427
          %s1429 = smul.addr %s37, 128
          %s1430 = scalar_lea.hbm %s15, %s1429
          %s1432 = sshll.u32 %s1422, 4
          %s1433 = int_to_ptr.vmem [resolvable:$true] %s1432
          %1435 = dma.vmem_to_hbm [thread:$0]  %s1433, 128, %s1430, %s1419
        $region112: #{tpu_custom_call.1} parent=79 // pred_fallthru
          _
      $region80: #{tpu_custom_call.1} parent=5 // pred_fallthru
        _
      %p1436 = scmp.le.s32.totalorder 2, %s32
      // Predicated region
      $region113: #{tpu_custom_call.1} parent=5 // pred_check
        %p1437 = pneg %p1436
      $region114: #{tpu_custom_call.1} parent=5 // pred_check_branch
        %1439 = sbr.rel (%p1437) target = $region116
      $region115: #{tpu_custom_call.1} parent=5 // pred_region
        %s1440 = ssub.s32 %s32, 2
        // Predicated region
        $region117: #{tpu_custom_call.1} parent=115 // pred_check
          %p1441 = pneg %p381
        $region118: #{tpu_custom_call.1} parent=115 // pred_check_branch
          %1443 = sbr.rel (%p1441) target = $region120
        $region119: #{tpu_custom_call.1} parent=115 // pred_region
          %s1444 = sand.u32 %s366, 1
          %s1445 = scalar_lea.sflag [#allocation5], %s1444
          %s1446 = sand.u32 %s366, 1
          %s1447 = smul.addr %s1446, 8
          %s1448 = scalar_lea.vmem [#allocation15], %s1447
          %1449 = dma.done %s1445, 128
        $region120: #{tpu_custom_call.1} parent=115 // pred_fallthru
          _
      $region116: #{tpu_custom_call.1} parent=5 // pred_fallthru
        _
    $region6: #{tpu_custom_call.1} parent=1 // loop_footer
      %s36 = sadd.s32 1, %s32
    $region7: #{tpu_custom_call.1} parent=1 // loop_footer_branch
      %31 = sbr.rel target = $region3
    $region8: #{tpu_custom_call.1} parent=1 // loop_exit
      _
    %1450 = vsyncpa [#allocation4], 1
    %s1451 = scalar_lea.sflag [#allocation4], 1
    %1452 = vsyncpa %s1451, 1
    %1453 = vsyncpa [#allocation7], 1
    %1454 = vsyncpa [#allocation10], 1
    %1455 = vsyncpa [#allocation13], 1
    %1456 = vsyncpa [#allocation5], 1
    %s1457 = scalar_lea.sflag [#allocation5], 1
    %1458 = vsyncpa %s1457, 1

</llo_original>
